<compile_context>
chip_gen: v7x
topology: tpu7x:2x2x1
jax: 0.10.0
libtpu: 0.0.40
codegen_flags: <defaults>
</compile_context>

<pallas_src>
import numpy as np
import jax
import jax.numpy as jnp
from jax.experimental import pallas as pl
from jax.experimental.pallas import tpu as pltpu


def _round_up(x, m):
    return (x + m - 1) // m * m


def _make_matmul_kernel(neg_slope, apply_sigmoid):
    """A @ W (f32 acc in VMEM scratch) + bias + LeakyReLU (+ sigmoid)."""

    def kernel(a_ref, w_ref, b_ref, o_ref, acc_ref):
        k = pl.program_id(1)

        @pl.when(k == 0)
        def _():
            acc_ref[...] = jnp.zeros_like(acc_ref)

        acc_ref[...] += jnp.dot(a_ref[...], w_ref[...],
                                preferred_element_type=jnp.float32)

        @pl.when(k == pl.num_programs(1) - 1)
        def _():
            y = acc_ref[...] + b_ref[...]
            if neg_slope is not None:
                y = jnp.where(y >= 0.0, y, neg_slope * y)
            if apply_sigmoid:
                y = jax.nn.sigmoid(y)
            o_ref[...] = y.astype(o_ref.dtype)

    return kernel


def conv3d_cl_pallas(x_cl, w, b, stride, padding, neg_slope=None,
                     apply_sigmoid=False, out_dtype=jnp.float32):
    """Channels-last Conv3d + bias + LeakyReLU/sigmoid as one K-packed matmul.

    x_cl: (N, D, H, W, Cin), w: (Cout, Cin, KD, KH, KW), b: (Cout,) or None.
    Returns (N, Do, Ho, Wo, Cout) in `out_dtype` (channels-last).
    """
    N, D, H, W, Cin = x_cl.shape
    Cout, Cin_w, KD, KH, KW = w.shape
    assert Cin_w == Cin
    sd, sh, sw = stride
    pd, ph, pw = padding

    Do = (D + 2 * pd - KD) // sd + 1
    Ho = (H + 2 * ph - KH) // sh + 1
    Wo = (W + 2 * pw - KW) // sw + 1
    L = N * Do * Ho * Wo                 # exact number of output rows
    K = KD * KH * KW * Cin               # packed contraction depth

    # ---- glue: pad + gather the tap windows into the channel (K) axis -------
    # Gives each MXU push a contraction depth of K (75..2400) instead of Cin
    # (1..32) and removes the 75-step per-tap accumulate chain in the kernel.
    x_pad = jnp.pad(x_cl.astype(jnp.bfloat16),
                    ((0, 0), (pd, pd), (ph, ph), (pw, pw), (0, 0)))
    taps = []
    for kd in range(KD):
        for kh in range(KH):
            for kw in range(KW):
                taps.append(
                    x_pad[:, kd:kd + sd * (Do - 1) + 1:sd,
                          kh:kh + sh * (Ho - 1) + 1:sh,
                          kw:kw + sw * (Wo - 1) + 1:sw, :])
    a = jnp.stack(taps, axis=4).reshape(L, K)            # (rows, taps*Cin) bf16

    # Weights in matching (kd, kh, kw, cin) K-order; bias as (1, Cout) f32.
    wk = jnp.transpose(w, (2, 3, 4, 1, 0)).reshape(K, Cout).astype(jnp.bfloat16)
    bv = b if b is not None else jnp.zeros((Cout,), jnp.float32)

    # ---- tiling --------------------------------------------------------------
    Cout_p = _round_up(Cout, 128)                         # lane-dense output
    n_rows = -(-L // 256)                                 # <=256-row tiles
    bm = _round_up(-(-L // n_rows), 16)                   # bf16-sublane friendly
    R_pad = bm * n_rows
    K128 = _round_up(K, 128)
    if K128 <= 4096:
        bk, n_k = K128, 1                                 # whole K resident
    else:
        bk = 2048
        n_k = -(-K128 // bk)
    K_pad = bk * n_k

    a = jnp.pad(a, ((0, R_pad - L), (0, K_pad - K)))
    wk = jnp.pad(wk, ((0, K_pad - K), (0, Cout_p - Cout)))
    bias = jnp.pad(bv.astype(jnp.float32).reshape(1, Cout),
                   ((0, 0), (0, Cout_p - Cout)))

    # Padding-aware VMEM estimate (bf16 sublane tile 16, f32 sublane tile 8,
    # 128 lanes), double-buffered in/out blocks + f32 accumulator scratch.
    # Capped at 48 MiB to leave headroom under v7x's 64 MiB per-core VMEM.
    out_bytes = jnp.dtype(out_dtype).itemsize
    vmem_est = (2 * _round_up(bm, 16) * bk * 2                 # A block
                + 2 * _round_up(bk, 16) * Cout_p * 2           # W block
                + 2 * 8 * Cout_p * 4                           # bias block
                + 2 * _round_up(bm, 8) * Cout_p * out_bytes    # out block
                + _round_up(bm, 8) * Cout_p * 4)               # acc scratch
    vmem_limit = int(min(48 * 2 ** 20, max(16 * 2 ** 20, 2 * vmem_est)))

    out_flat = pl.pallas_call(
        _make_matmul_kernel(neg_slope, apply_sigmoid),
        out_shape=jax.ShapeDtypeStruct((R_pad, Cout_p), out_dtype),
        grid=(n_rows, n_k),
        in_specs=[
            pl.BlockSpec((bm, bk), lambda i, k: (i, k)),          # packed input
            pl.BlockSpec((bk, Cout_p), lambda i, k: (k, 0)),      # weights
            pl.BlockSpec((1, Cout_p), lambda i, k: (0, 0)),       # bias
        ],
        out_specs=pl.BlockSpec((bm, Cout_p), lambda i, k: (i, 0)),
        scratch_shapes=[pltpu.VMEM((bm, Cout_p), jnp.float32)],
        compiler_params=pltpu.CompilerParams(
            dimension_semantics=("parallel", "arbitrary"),
            vmem_limit_bytes=vmem_limit),
    )(a, wk, bias)

    # Drop pad rows / pad channels; stay channels-last for the next layer.
    return out_flat[:L, :Cout].reshape(N, Do, Ho, Wo, Cout)


def init_discriminator_params(key, in_channels, nf):
    """Deterministic synthetic weights, shapes per Discriminator.__init__."""
    # (Cout, Cin, has_bias, spectral_norm)
    specs = [
        (nf * 1, in_channels, False, True),
        (nf * 2, nf * 1, False, True),
        (nf * 4, nf * 2, False, True),
        (nf * 4, nf * 4, False, True),
        (nf * 4, nf * 4, True, False),   # last conv: plain Conv3d, bias=True
    ]
    params = []
    for (cout, cin, has_bias, sn) in specs:
        key, kw, kb = jax.random.split(key, 3)
        w = jax.random.normal(kw, (cout, cin, 3, 5, 5), jnp.float32) * 0.05
        if sn:
            # TODO(synk): torch spectral_norm = one power-iteration per forward;
            # here we normalize by the exact largest singular value once.
            sigma = np.linalg.svd(np.asarray(w).reshape(cout, -1),
                                  compute_uv=False)[0]
            w = w / jnp.float32(sigma)
        b = (jax.random.normal(kb, (cout,), jnp.float32) * 0.05
             if has_bias else None)
        params.append((w, b))
    return params


def _layer_padding(idx):
    return (1, 1, 1) if idx == 0 else (1, 2, 2)


def discriminator_forward(xs, params, use_sigmoid=False):
    """xs: (T, C, H, W)  ->  out: (1, T_out, 4*nf, H_out, W_out)."""
    # torch: xs.transpose(0,1).unsqueeze(0) -> (1, C, T, H, W).  We keep the
    # activation channels-last (N, D, H, W, C) between layers and only convert
    # the layout at the boundaries.
    x = jnp.transpose(xs, (0, 2, 3, 1))[None]          # (1, T, H, W, C)
    n_layers = len(params)
    for idx, (w, b) in enumerate(params):
        last = idx == n_layers - 1
        x = conv3d_cl_pallas(
            x, w, b, stride=(1, 2, 2), padding=_layer_padding(idx),
            neg_slope=None if last else 0.2,           # LeakyReLU(0.2) convs 1-4
            apply_sigmoid=(last and use_sigmoid),
            out_dtype=jnp.float32 if last else jnp.bfloat16)
    # torch.transpose(feat, 1, 2): (1, D, Cout, Ho, Wo).
    return jnp.transpose(x, (0, 1, 4, 2, 3))


def discriminator_ref(xs, params, use_sigmoid=False):
    """Pure-JAX f32 reference (lax.conv) for validation."""
    x = jnp.transpose(xs, (1, 0, 2, 3))[None]
    n_layers = len(params)
    for idx, (w, b) in enumerate(params):
        pad = _layer_padding(idx)
        x = jax.lax.conv_general_dilated(
            x, w, window_strides=(1, 2, 2), padding=[(p, p) for p in pad],
            dimension_numbers=("NCDHW", "OIDHW", "NCDHW"),
            precision=jax.lax.Precision.HIGHEST)
        if b is not None:
            x = x + b.reshape(1, -1, 1, 1, 1)
        if idx < n_layers - 1:
            x = jnp.where(x >= 0.0, x, 0.2 * x)
        elif use_sigmoid:
            x = jax.nn.sigmoid(x)
    return jnp.transpose(x, (0, 2, 1, 3, 4))


if __name__ == "__main__":
    key = jax.random.PRNGKey(0)
    k_in, k_par = jax.random.split(key)

    # Small shapes consistent with the module's forward: xs is (T, C, H, W).
    T, C, H, W = 8, 1, 16, 16
    nf = 8
    xs = jax.random.normal(k_in, (T, C, H, W), jnp.float32)
    params = init_discriminator_params(k_par, C, nf)

    fwd = jax.jit(discriminator_forward, static_argnames=("use_sigmoid",))
    out = jax.block_until_ready(fwd(xs, params, use_sigmoid=False))

    # 5 convs with spatial stride 2: 16 -> 7 -> 4 -> 2 -> 1 -> 1; T preserved.
    assert out.shape == (1, T, nf * 4, 1, 1), out.shape
    assert bool(jnp.all(jnp.isfinite(out)))

    # Validate against a pure-JAX f32 reference (bf16 operands/intermediates
    # with f32 accumulation -> loose tolerance).
    ref = jax.block_until_ready(discriminator_ref(xs, params, use_sigmoid=False))
    err = float(jnp.max(jnp.abs(out - ref)) / (jnp.max(jnp.abs(ref)) + 1e-6))
    assert err < 0.1, f"mismatch vs reference: rel-to-max err {err:.3e}"

    print("KERNEL_OK")
</pallas_src>

<mosaic_0001>
module attributes {stable_mosaic.version = 11 : i64} {
  func.func @kernel(%arg0: i32, %arg1: i32, %arg2: memref<208x128xbf16, #tpu.memory_space<vmem>>, %arg3: memref<128x128xbf16, #tpu.memory_space<vmem>>, %arg4: memref<1x128xf32, #tpu.memory_space<vmem>>, %arg5: memref<208x128xbf16, #tpu.memory_space<vmem>>, %arg6: memref<208x128xf32, #tpu.memory_space<vmem>>) attributes {dimension_semantics = [#tpu.dimension_semantics<parallel>, #tpu.dimension_semantics<arbitrary>], iteration_bounds = array<i64: 2, 1>, scalar_prefetch = 0 : i64, scratch_operands = 1 : i64, tpu.core_type = #tpu.core_type<tc>, window_params = [{transform_indices = @transform_0, window_bounds = array<i64: 208, 128>}, {transform_indices = @transform_1, window_bounds = array<i64: 128, 128>}, {pipeline_mode = #tpu.pipeline_mode<synchronous>, transform_indices = @transform_2, window_bounds = array<i64: 1, 128>}, {transform_indices = @transform_3, window_bounds = array<i64: 208, 128>}]} {
    %c0_i32 = arith.constant 0 : i32
    %0 = arith.cmpi eq, %arg1, %c0_i32 : i32
    %1 = arith.extui %0 : i1 to i32
    %c0_i32_0 = arith.constant 0 : i32
    %2 = arith.cmpi ne, %1, %c0_i32_0 : i32
    scf.if %2 {
      %cst_10 = arith.constant 0.000000e+00 : f32
      %12 = vector.broadcast %cst_10 : f32 to vector<208x128xf32>
      %c0_11 = arith.constant 0 : index
      %c0_12 = arith.constant 0 : index
      %13 = vector.load %arg6[%c0_11, %c0_12] : memref<208x128xf32, #tpu.memory_space<vmem>>, vector<208x128xf32>
      tpu.vector_store %arg6[%c0_11, %c0_12], %12 {strides = array<i32>} : memref<208x128xf32, #tpu.memory_space<vmem>>, vector<208x128xf32>,
    } else {
    }
    %c0 = arith.constant 0 : index
    %c0_1 = arith.constant 0 : index
    %3 = vector.load %arg6[%c0, %c0_1] : memref<208x128xf32, #tpu.memory_space<vmem>>, vector<208x128xf32>
    %c0_2 = arith.constant 0 : index
    %c0_3 = arith.constant 0 : index
    %4 = vector.load %arg2[%c0_2, %c0_3] : memref<208x128xbf16, #tpu.memory_space<vmem>>, vector<208x128xbf16>
    %c0_4 = arith.constant 0 : index
    %c0_5 = arith.constant 0 : index
    %5 = vector.load %arg3[%c0_4, %c0_5] : memref<128x128xbf16, #tpu.memory_space<vmem>>, vector<128x128xbf16>
    %cst = arith.constant dense<0.000000e+00> : vector<208x128xf32>
    %6 = tpu.matmul %4, %5, %cst {dimension_numbers = #tpu.dot_dimension_numbers<[1], [0], [0], [1], [0, 0, 1, 1], [], []>} : vector<208x128xbf16>, vector<128x128xbf16>, vector<208x128xf32> -> vector<208x128xf32>
    %7 = arith.addf %3, %6 : vector<208x128xf32>
    %c0_6 = arith.constant 0 : index
    %c0_7 = arith.constant 0 : index
    %8 = vector.load %arg6[%c0_6, %c0_7] : memref<208x128xf32, #tpu.memory_space<vmem>>, vector<208x128xf32>
    tpu.vector_store %arg6[%c0_6, %c0_7], %7 {strides = array<i32>} : memref<208x128xf32, #tpu.memory_space<vmem>>, vector<208x128xf32>,
    %c0_i32_8 = arith.constant 0 : i32
    %9 = arith.cmpi eq, %arg1, %c0_i32_8 : i32
    %10 = arith.extui %9 : i1 to i32
    %c0_i32_9 = arith.constant 0 : i32
    %11 = arith.cmpi ne, %10, %c0_i32_9 : i32
    scf.if %11 {
      %c0_10 = arith.constant 0 : index
      %c0_11 = arith.constant 0 : index
      %12 = vector.load %arg6[%c0_10, %c0_11] : memref<208x128xf32, #tpu.memory_space<vmem>>, vector<208x128xf32>
      %c0_12 = arith.constant 0 : index
      %c0_13 = arith.constant 0 : index
      %13 = vector.load %arg4[%c0_12, %c0_13] : memref<1x128xf32, #tpu.memory_space<vmem>>, vector<1x128xf32>
      %14 = vector.broadcast %13 : vector<1x128xf32> to vector<208x128xf32>
      %15 = arith.addf %12, %14 : vector<208x128xf32>
      %cst_14 = arith.constant 0.000000e+00 : f32
      %16 = vector.broadcast %cst_14 : f32 to vector<208x128xf32>
      %17 = arith.cmpf oge, %15, %16 : vector<208x128xf32>
      %cst_15 = arith.constant 2.000000e-01 : f32
      %18 = vector.broadcast %cst_15 : f32 to vector<208x128xf32>
      %19 = arith.mulf %18, %15 : vector<208x128xf32>
      %20 = arith.select %17, %15, %19 : vector<208x128xi1>, vector<208x128xf32>
      %21 = arith.truncf %20 : vector<208x128xf32> to vector<208x128xbf16>
      %c0_16 = arith.constant 0 : index
      %c0_17 = arith.constant 0 : index
      %22 = vector.load %arg5[%c0_16, %c0_17] : memref<208x128xbf16, #tpu.memory_space<vmem>>, vector<208x128xbf16>
      tpu.vector_store %arg5[%c0_16, %c0_17], %21 {strides = array<i32>} : memref<208x128xbf16, #tpu.memory_space<vmem>>, vector<208x128xbf16>,
    } else {
    }
    return
  }
  func.func @transform_0(%arg0: i32, %arg1: i32) -> (i32, i32) {
    %c0_i32 = arith.constant 0 : i32
    return %arg0, %arg1 : i32, i32
  }
  func.func @transform_1(%arg0: i32, %arg1: i32) -> (i32, i32) {
    %c0_i32 = arith.constant 0 : i32
    %c0_i32_0 = arith.constant 0 : i32
    return %arg1, %c0_i32 : i32, i32
  }
  func.func @transform_2(%arg0: i32, %arg1: i32) -> (i32, i32) {
    %c0_i32 = arith.constant 0 : i32
    %c0_i32_0 = arith.constant 0 : i32
    %c0_i32_1 = arith.constant 0 : i32
    return %c0_i32, %c0_i32_0 : i32, i32
  }
  func.func @transform_3(%arg0: i32, %arg1: i32) -> (i32, i32) {
    %c0_i32 = arith.constant 0 : i32
    %c0_i32_0 = arith.constant 0 : i32
    return %arg0, %c0_i32 : i32, i32
  }
}

module attributes {stable_mosaic.version = 11 : i64} {
  func.func @kernel(%arg0: i32, %arg1: i32, %arg2: memref<128x640xbf16, #tpu.memory_space<vmem>>, %arg3: memref<640x128xbf16, #tpu.memory_space<vmem>>, %arg4: memref<1x128xf32, #tpu.memory_space<vmem>>, %arg5: memref<128x128xbf16, #tpu.memory_space<vmem>>, %arg6: memref<128x128xf32, #tpu.memory_space<vmem>>) attributes {dimension_semantics = [#tpu.dimension_semantics<parallel>, #tpu.dimension_semantics<arbitrary>], iteration_bounds = array<i64: 1, 1>, scalar_prefetch = 0 : i64, scratch_operands = 1 : i64, tpu.core_type = #tpu.core_type<tc>, window_params = [{transform_indices = @transform_0, window_bounds = array<i64: 128, 640>}, {transform_indices = @transform_1, window_bounds = array<i64: 640, 128>}, {pipeline_mode = #tpu.pipeline_mode<synchronous>, transform_indices = @transform_2, window_bounds = array<i64: 1, 128>}, {transform_indices = @transform_3, window_bounds = array<i64: 128, 128>}]} {
    %c0_i32 = arith.constant 0 : i32
    %0 = arith.cmpi eq, %arg1, %c0_i32 : i32
    %1 = arith.extui %0 : i1 to i32
    %c0_i32_0 = arith.constant 0 : i32
    %2 = arith.cmpi ne, %1, %c0_i32_0 : i32
    scf.if %2 {
      %cst_10 = arith.constant 0.000000e+00 : f32
      %12 = vector.broadcast %cst_10 : f32 to vector<128x128xf32>
      %c0_11 = arith.constant 0 : index
      %c0_12 = arith.constant 0 : index
      %13 = vector.load %arg6[%c0_11, %c0_12] : memref<128x128xf32, #tpu.memory_space<vmem>>, vector<128x128xf32>
      tpu.vector_store %arg6[%c0_11, %c0_12], %12 {strides = array<i32>} : memref<128x128xf32, #tpu.memory_space<vmem>>, vector<128x128xf32>,
    } else {
    }
    %c0 = arith.constant 0 : index
    %c0_1 = arith.constant 0 : index
    %3 = vector.load %arg6[%c0, %c0_1] : memref<128x128xf32, #tpu.memory_space<vmem>>, vector<128x128xf32>
    %c0_2 = arith.constant 0 : index
    %c0_3 = arith.constant 0 : index
    %4 = vector.load %arg2[%c0_2, %c0_3] : memref<128x640xbf16, #tpu.memory_space<vmem>>, vector<128x640xbf16>
    %c0_4 = arith.constant 0 : index
    %c0_5 = arith.constant 0 : index
    %5 = vector.load %arg3[%c0_4, %c0_5] : memref<640x128xbf16, #tpu.memory_space<vmem>>, vector<640x128xbf16>
    %cst = arith.constant dense<0.000000e+00> : vector<128x128xf32>
    %6 = tpu.matmul %4, %5, %cst {dimension_numbers = #tpu.dot_dimension_numbers<[1], [0], [0], [1], [0, 0, 1, 1], [], []>} : vector<128x640xbf16>, vector<640x128xbf16>, vector<128x128xf32> -> vector<128x128xf32>
    %7 = arith.addf %3, %6 : vector<128x128xf32>
    %c0_6 = arith.constant 0 : index
    %c0_7 = arith.constant 0 : index
    %8 = vector.load %arg6[%c0_6, %c0_7] : memref<128x128xf32, #tpu.memory_space<vmem>>, vector<128x128xf32>
    tpu.vector_store %arg6[%c0_6, %c0_7], %7 {strides = array<i32>} : memref<128x128xf32, #tpu.memory_space<vmem>>, vector<128x128xf32>,
    %c0_i32_8 = arith.constant 0 : i32
    %9 = arith.cmpi eq, %arg1, %c0_i32_8 : i32
    %10 = arith.extui %9 : i1 to i32
    %c0_i32_9 = arith.constant 0 : i32
    %11 = arith.cmpi ne, %10, %c0_i32_9 : i32
    scf.if %11 {
      %c0_10 = arith.constant 0 : index
      %c0_11 = arith.constant 0 : index
      %12 = vector.load %arg6[%c0_10, %c0_11] : memref<128x128xf32, #tpu.memory_space<vmem>>, vector<128x128xf32>
      %c0_12 = arith.constant 0 : index
      %c0_13 = arith.constant 0 : index
      %13 = vector.load %arg4[%c0_12, %c0_13] : memref<1x128xf32, #tpu.memory_space<vmem>>, vector<1x128xf32>
      %14 = vector.broadcast %13 : vector<1x128xf32> to vector<128x128xf32>
      %15 = arith.addf %12, %14 : vector<128x128xf32>
      %cst_14 = arith.constant 0.000000e+00 : f32
      %16 = vector.broadcast %cst_14 : f32 to vector<128x128xf32>
      %17 = arith.cmpf oge, %15, %16 : vector<128x128xf32>
      %cst_15 = arith.constant 2.000000e-01 : f32
      %18 = vector.broadcast %cst_15 : f32 to vector<128x128xf32>
      %19 = arith.mulf %18, %15 : vector<128x128xf32>
      %20 = arith.select %17, %15, %19 : vector<128x128xi1>, vector<128x128xf32>
      %21 = arith.truncf %20 : vector<128x128xf32> to vector<128x128xbf16>
      %c0_16 = arith.constant 0 : index
      %c0_17 = arith.constant 0 : index
      %22 = vector.load %arg5[%c0_16, %c0_17] : memref<128x128xbf16, #tpu.memory_space<vmem>>, vector<128x128xbf16>
      tpu.vector_store %arg5[%c0_16, %c0_17], %21 {strides = array<i32>} : memref<128x128xbf16, #tpu.memory_space<vmem>>, vector<128x128xbf16>,
    } else {
    }
    return
  }
  func.func @transform_0(%arg0: i32, %arg1: i32) -> (i32, i32) {
    %c0_i32 = arith.constant 0 : i32
    return %arg0, %arg1 : i32, i32
  }
  func.func @transform_1(%arg0: i32, %arg1: i32) -> (i32, i32) {
    %c0_i32 = arith.constant 0 : i32
    %c0_i32_0 = arith.constant 0 : i32
    return %arg1, %c0_i32 : i32, i32
  }
  func.func @transform_2(%arg0: i32, %arg1: i32) -> (i32, i32) {
    %c0_i32 = arith.constant 0 : i32
    %c0_i32_0 = arith.constant 0 : i32
    %c0_i32_1 = arith.constant 0 : i32
    return %c0_i32, %c0_i32_0 : i32, i32
  }
  func.func @transform_3(%arg0: i32, %arg1: i32) -> (i32, i32) {
    %c0_i32 = arith.constant 0 : i32
    %c0_i32_0 = arith.constant 0 : i32
    return %arg0, %c0_i32 : i32, i32
  }
}

module attributes {stable_mosaic.version = 11 : i64} {
  func.func @kernel(%arg0: i32, %arg1: i32, %arg2: memref<32x1280xbf16, #tpu.memory_space<vmem>>, %arg3: memref<1280x128xbf16, #tpu.memory_space<vmem>>, %arg4: memref<1x128xf32, #tpu.memory_space<vmem>>, %arg5: memref<32x128xbf16, #tpu.memory_space<vmem>>, %arg6: memref<32x128xf32, #tpu.memory_space<vmem>>) attributes {dimension_semantics = [#tpu.dimension_semantics<parallel>, #tpu.dimension_semantics<arbitrary>], iteration_bounds = array<i64: 1, 1>, scalar_prefetch = 0 : i64, scratch_operands = 1 : i64, tpu.core_type = #tpu.core_type<tc>, window_params = [{transform_indices = @transform_0, window_bounds = array<i64: 32, 1280>}, {transform_indices = @transform_1, window_bounds = array<i64: 1280, 128>}, {pipeline_mode = #tpu.pipeline_mode<synchronous>, transform_indices = @transform_2, window_bounds = array<i64: 1, 128>}, {transform_indices = @transform_3, window_bounds = array<i64: 32, 128>}]} {
    %c0_i32 = arith.constant 0 : i32
    %0 = arith.cmpi eq, %arg1, %c0_i32 : i32
    %1 = arith.extui %0 : i1 to i32
    %c0_i32_0 = arith.constant 0 : i32
    %2 = arith.cmpi ne, %1, %c0_i32_0 : i32
    scf.if %2 {
      %cst_10 = arith.constant 0.000000e+00 : f32
      %12 = vector.broadcast %cst_10 : f32 to vector<32x128xf32>
      %c0_11 = arith.constant 0 : index
      %c0_12 = arith.constant 0 : index
      %13 = vector.load %arg6[%c0_11, %c0_12] : memref<32x128xf32, #tpu.memory_space<vmem>>, vector<32x128xf32>
      tpu.vector_store %arg6[%c0_11, %c0_12], %12 {strides = array<i32>} : memref<32x128xf32, #tpu.memory_space<vmem>>, vector<32x128xf32>,
    } else {
    }
    %c0 = arith.constant 0 : index
    %c0_1 = arith.constant 0 : index
    %3 = vector.load %arg6[%c0, %c0_1] : memref<32x128xf32, #tpu.memory_space<vmem>>, vector<32x128xf32>
    %c0_2 = arith.constant 0 : index
    %c0_3 = arith.constant 0 : index
    %4 = vector.load %arg2[%c0_2, %c0_3] : memref<32x1280xbf16, #tpu.memory_space<vmem>>, vector<32x1280xbf16>
    %c0_4 = arith.constant 0 : index
    %c0_5 = arith.constant 0 : index
    %5 = vector.load %arg3[%c0_4, %c0_5] : memref<1280x128xbf16, #tpu.memory_space<vmem>>, vector<1280x128xbf16>
    %cst = arith.constant dense<0.000000e+00> : vector<32x128xf32>
    %6 = tpu.matmul %4, %5, %cst {dimension_numbers = #tpu.dot_dimension_numbers<[1], [0], [0], [1], [0, 0, 1, 1], [], []>} : vector<32x1280xbf16>, vector<1280x128xbf16>, vector<32x128xf32> -> vector<32x128xf32>
    %7 = arith.addf %3, %6 : vector<32x128xf32>
    %c0_6 = arith.constant 0 : index
    %c0_7 = arith.constant 0 : index
    %8 = vector.load %arg6[%c0_6, %c0_7] : memref<32x128xf32, #tpu.memory_space<vmem>>, vector<32x128xf32>
    tpu.vector_store %arg6[%c0_6, %c0_7], %7 {strides = array<i32>} : memref<32x128xf32, #tpu.memory_space<vmem>>, vector<32x128xf32>,
    %c0_i32_8 = arith.constant 0 : i32
    %9 = arith.cmpi eq, %arg1, %c0_i32_8 : i32
    %10 = arith.extui %9 : i1 to i32
    %c0_i32_9 = arith.constant 0 : i32
    %11 = arith.cmpi ne, %10, %c0_i32_9 : i32
    scf.if %11 {
      %c0_10 = arith.constant 0 : index
      %c0_11 = arith.constant 0 : index
      %12 = vector.load %arg6[%c0_10, %c0_11] : memref<32x128xf32, #tpu.memory_space<vmem>>, vector<32x128xf32>
      %c0_12 = arith.constant 0 : index
      %c0_13 = arith.constant 0 : index
      %13 = vector.load %arg4[%c0_12, %c0_13] : memref<1x128xf32, #tpu.memory_space<vmem>>, vector<1x128xf32>
      %14 = vector.broadcast %13 : vector<1x128xf32> to vector<32x128xf32>
      %15 = arith.addf %12, %14 : vector<32x128xf32>
      %cst_14 = arith.constant 0.000000e+00 : f32
      %16 = vector.broadcast %cst_14 : f32 to vector<32x128xf32>
      %17 = arith.cmpf oge, %15, %16 : vector<32x128xf32>
      %cst_15 = arith.constant 2.000000e-01 : f32
      %18 = vector.broadcast %cst_15 : f32 to vector<32x128xf32>
      %19 = arith.mulf %18, %15 : vector<32x128xf32>
      %20 = arith.select %17, %15, %19 : vector<32x128xi1>, vector<32x128xf32>
      %21 = arith.truncf %20 : vector<32x128xf32> to vector<32x128xbf16>
      %c0_16 = arith.constant 0 : index
      %c0_17 = arith.constant 0 : index
      %22 = vector.load %arg5[%c0_16, %c0_17] : memref<32x128xbf16, #tpu.memory_space<vmem>>, vector<32x128xbf16>
      tpu.vector_store %arg5[%c0_16, %c0_17], %21 {strides = array<i32>} : memref<32x128xbf16, #tpu.memory_space<vmem>>, vector<32x128xbf16>,
    } else {
    }
    return
  }
  func.func @transform_0(%arg0: i32, %arg1: i32) -> (i32, i32) {
    %c0_i32 = arith.constant 0 : i32
    return %arg0, %arg1 : i32, i32
  }
  func.func @transform_1(%arg0: i32, %arg1: i32) -> (i32, i32) {
    %c0_i32 = arith.constant 0 : i32
    %c0_i32_0 = arith.constant 0 : i32
    return %arg1, %c0_i32 : i32, i32
  }
  func.func @transform_2(%arg0: i32, %arg1: i32) -> (i32, i32) {
    %c0_i32 = arith.constant 0 : i32
    %c0_i32_0 = arith.constant 0 : i32
    %c0_i32_1 = arith.constant 0 : i32
    return %c0_i32, %c0_i32_0 : i32, i32
  }
  func.func @transform_3(%arg0: i32, %arg1: i32) -> (i32, i32) {
    %c0_i32 = arith.constant 0 : i32
    %c0_i32_0 = arith.constant 0 : i32
    return %arg0, %c0_i32 : i32, i32
  }
}

module attributes {stable_mosaic.version = 11 : i64} {
  func.func @kernel(%arg0: i32, %arg1: i32, %arg2: memref<16x2432xbf16, #tpu.memory_space<vmem>>, %arg3: memref<2432x128xbf16, #tpu.memory_space<vmem>>, %arg4: memref<1x128xf32, #tpu.memory_space<vmem>>, %arg5: memref<16x128xbf16, #tpu.memory_space<vmem>>, %arg6: memref<16x128xf32, #tpu.memory_space<vmem>>) attributes {dimension_semantics = [#tpu.dimension_semantics<parallel>, #tpu.dimension_semantics<arbitrary>], iteration_bounds = array<i64: 1, 1>, scalar_prefetch = 0 : i64, scratch_operands = 1 : i64, tpu.core_type = #tpu.core_type<tc>, window_params = [{transform_indices = @transform_0, window_bounds = array<i64: 16, 2432>}, {transform_indices = @transform_1, window_bounds = array<i64: 2432, 128>}, {pipeline_mode = #tpu.pipeline_mode<synchronous>, transform_indices = @transform_2, window_bounds = array<i64: 1, 128>}, {transform_indices = @transform_3, window_bounds = array<i64: 16, 128>}]} {
    %c0_i32 = arith.constant 0 : i32
    %0 = arith.cmpi eq, %arg1, %c0_i32 : i32
    %1 = arith.extui %0 : i1 to i32
    %c0_i32_0 = arith.constant 0 : i32
    %2 = arith.cmpi ne, %1, %c0_i32_0 : i32
    scf.if %2 {
      %cst_10 = arith.constant 0.000000e+00 : f32
      %12 = vector.broadcast %cst_10 : f32 to vector<16x128xf32>
      %c0_11 = arith.constant 0 : index
      %c0_12 = arith.constant 0 : index
      %13 = vector.load %arg6[%c0_11, %c0_12] : memref<16x128xf32, #tpu.memory_space<vmem>>, vector<16x128xf32>
      tpu.vector_store %arg6[%c0_11, %c0_12], %12 {strides = array<i32>} : memref<16x128xf32, #tpu.memory_space<vmem>>, vector<16x128xf32>,
    } else {
    }
    %c0 = arith.constant 0 : index
    %c0_1 = arith.constant 0 : index
    %3 = vector.load %arg6[%c0, %c0_1] : memref<16x128xf32, #tpu.memory_space<vmem>>, vector<16x128xf32>
    %c0_2 = arith.constant 0 : index
    %c0_3 = arith.constant 0 : index
    %4 = vector.load %arg2[%c0_2, %c0_3] : memref<16x2432xbf16, #tpu.memory_space<vmem>>, vector<16x2432xbf16>
    %c0_4 = arith.constant 0 : index
    %c0_5 = arith.constant 0 : index
    %5 = vector.load %arg3[%c0_4, %c0_5] : memref<2432x128xbf16, #tpu.memory_space<vmem>>, vector<2432x128xbf16>
    %cst = arith.constant dense<0.000000e+00> : vector<16x128xf32>
    %6 = tpu.matmul %4, %5, %cst {dimension_numbers = #tpu.dot_dimension_numbers<[1], [0], [0], [1], [0, 0, 1, 1], [], []>} : vector<16x2432xbf16>, vector<2432x128xbf16>, vector<16x128xf32> -> vector<16x128xf32>
    %7 = arith.addf %3, %6 : vector<16x128xf32>
    %c0_6 = arith.constant 0 : index
    %c0_7 = arith.constant 0 : index
    %8 = vector.load %arg6[%c0_6, %c0_7] : memref<16x128xf32, #tpu.memory_space<vmem>>, vector<16x128xf32>
    tpu.vector_store %arg6[%c0_6, %c0_7], %7 {strides = array<i32>} : memref<16x128xf32, #tpu.memory_space<vmem>>, vector<16x128xf32>,
    %c0_i32_8 = arith.constant 0 : i32
    %9 = arith.cmpi eq, %arg1, %c0_i32_8 : i32
    %10 = arith.extui %9 : i1 to i32
    %c0_i32_9 = arith.constant 0 : i32
    %11 = arith.cmpi ne, %10, %c0_i32_9 : i32
    scf.if %11 {
      %c0_10 = arith.constant 0 : index
      %c0_11 = arith.constant 0 : index
      %12 = vector.load %arg6[%c0_10, %c0_11] : memref<16x128xf32, #tpu.memory_space<vmem>>, vector<16x128xf32>
      %c0_12 = arith.constant 0 : index
      %c0_13 = arith.constant 0 : index
      %13 = vector.load %arg4[%c0_12, %c0_13] : memref<1x128xf32, #tpu.memory_space<vmem>>, vector<1x128xf32>
      %14 = vector.broadcast %13 : vector<1x128xf32> to vector<16x128xf32>
      %15 = arith.addf %12, %14 : vector<16x128xf32>
      %cst_14 = arith.constant 0.000000e+00 : f32
      %16 = vector.broadcast %cst_14 : f32 to vector<16x128xf32>
      %17 = arith.cmpf oge, %15, %16 : vector<16x128xf32>
      %cst_15 = arith.constant 2.000000e-01 : f32
      %18 = vector.broadcast %cst_15 : f32 to vector<16x128xf32>
      %19 = arith.mulf %18, %15 : vector<16x128xf32>
      %20 = arith.select %17, %15, %19 : vector<16x128xi1>, vector<16x128xf32>
      %21 = arith.truncf %20 : vector<16x128xf32> to vector<16x128xbf16>
      %c0_16 = arith.constant 0 : index
      %c0_17 = arith.constant 0 : index
      %22 = vector.load %arg5[%c0_16, %c0_17] : memref<16x128xbf16, #tpu.memory_space<vmem>>, vector<16x128xbf16>
      tpu.vector_store %arg5[%c0_16, %c0_17], %21 {strides = array<i32>} : memref<16x128xbf16, #tpu.memory_space<vmem>>, vector<16x128xbf16>,
    } else {
    }
    return
  }
  func.func @transform_0(%arg0: i32, %arg1: i32) -> (i32, i32) {
    %c0_i32 = arith.constant 0 : i32
    return %arg0, %arg1 : i32, i32
  }
  func.func @transform_1(%arg0: i32, %arg1: i32) -> (i32, i32) {
    %c0_i32 = arith.constant 0 : i32
    %c0_i32_0 = arith.constant 0 : i32
    return %arg1, %c0_i32 : i32, i32
  }
  func.func @transform_2(%arg0: i32, %arg1: i32) -> (i32, i32) {
    %c0_i32 = arith.constant 0 : i32
    %c0_i32_0 = arith.constant 0 : i32
    %c0_i32_1 = arith.constant 0 : i32
    return %c0_i32, %c0_i32_0 : i32, i32
  }
  func.func @transform_3(%arg0: i32, %arg1: i32) -> (i32, i32) {
    %c0_i32 = arith.constant 0 : i32
    %c0_i32_0 = arith.constant 0 : i32
    return %arg0, %c0_i32 : i32, i32
  }
}

module attributes {stable_mosaic.version = 11 : i64} {
  func.func @kernel(%arg0: i32, %arg1: i32, %arg2: memref<16x2432xbf16, #tpu.memory_space<vmem>>, %arg3: memref<2432x128xbf16, #tpu.memory_space<vmem>>, %arg4: memref<1x128xf32, #tpu.memory_space<vmem>>, %arg5: memref<16x128xf32, #tpu.memory_space<vmem>>, %arg6: memref<16x128xf32, #tpu.memory_space<vmem>>) attributes {dimension_semantics = [#tpu.dimension_semantics<parallel>, #tpu.dimension_semantics<arbitrary>], iteration_bounds = array<i64: 1, 1>, scalar_prefetch = 0 : i64, scratch_operands = 1 : i64, tpu.core_type = #tpu.core_type<tc>, window_params = [{transform_indices = @transform_0, window_bounds = array<i64: 16, 2432>}, {transform_indices = @transform_1, window_bounds = array<i64: 2432, 128>}, {pipeline_mode = #tpu.pipeline_mode<synchronous>, transform_indices = @transform_2, window_bounds = array<i64: 1, 128>}, {transform_indices = @transform_3, window_bounds = array<i64: 16, 128>}]} {
    %c0_i32 = arith.constant 0 : i32
    %0 = arith.cmpi eq, %arg1, %c0_i32 : i32
    %1 = arith.extui %0 : i1 to i32
    %c0_i32_0 = arith.constant 0 : i32
    %2 = arith.cmpi ne, %1, %c0_i32_0 : i32
    scf.if %2 {
      %cst_10 = arith.constant 0.000000e+00 : f32
      %12 = vector.broadcast %cst_10 : f32 to vector<16x128xf32>
      %c0_11 = arith.constant 0 : index
      %c0_12 = arith.constant 0 : index
      %13 = vector.load %arg6[%c0_11, %c0_12] : memref<16x128xf32, #tpu.memory_space<vmem>>, vector<16x128xf32>
      tpu.vector_store %arg6[%c0_11, %c0_12], %12 {strides = array<i32>} : memref<16x128xf32, #tpu.memory_space<vmem>>, vector<16x128xf32>,
    } else {
    }
    %c0 = arith.constant 0 : index
    %c0_1 = arith.constant 0 : index
    %3 = vector.load %arg6[%c0, %c0_1] : memref<16x128xf32, #tpu.memory_space<vmem>>, vector<16x128xf32>
    %c0_2 = arith.constant 0 : index
    %c0_3 = arith.constant 0 : index
    %4 = vector.load %arg2[%c0_2, %c0_3] : memref<16x2432xbf16, #tpu.memory_space<vmem>>, vector<16x2432xbf16>
    %c0_4 = arith.constant 0 : index
    %c0_5 = arith.constant 0 : index
    %5 = vector.load %arg3[%c0_4, %c0_5] : memref<2432x128xbf16, #tpu.memory_space<vmem>>, vector<2432x128xbf16>
    %cst = arith.constant dense<0.000000e+00> : vector<16x128xf32>
    %6 = tpu.matmul %4, %5, %cst {dimension_numbers = #tpu.dot_dimension_numbers<[1], [0], [0], [1], [0, 0, 1, 1], [], []>} : vector<16x2432xbf16>, vector<2432x128xbf16>, vector<16x128xf32> -> vector<16x128xf32>
    %7 = arith.addf %3, %6 : vector<16x128xf32>
    %c0_6 = arith.constant 0 : index
    %c0_7 = arith.constant 0 : index
    %8 = vector.load %arg6[%c0_6, %c0_7] : memref<16x128xf32, #tpu.memory_space<vmem>>, vector<16x128xf32>
    tpu.vector_store %arg6[%c0_6, %c0_7], %7 {strides = array<i32>} : memref<16x128xf32, #tpu.memory_space<vmem>>, vector<16x128xf32>,
    %c0_i32_8 = arith.constant 0 : i32
    %9 = arith.cmpi eq, %arg1, %c0_i32_8 : i32
    %10 = arith.extui %9 : i1 to i32
    %c0_i32_9 = arith.constant 0 : i32
    %11 = arith.cmpi ne, %10, %c0_i32_9 : i32
    scf.if %11 {
      %c0_10 = arith.constant 0 : index
      %c0_11 = arith.constant 0 : index
      %12 = vector.load %arg6[%c0_10, %c0_11] : memref<16x128xf32, #tpu.memory_space<vmem>>, vector<16x128xf32>
      %c0_12 = arith.constant 0 : index
      %c0_13 = arith.constant 0 : index
      %13 = vector.load %arg4[%c0_12, %c0_13] : memref<1x128xf32, #tpu.memory_space<vmem>>, vector<1x128xf32>
      %14 = vector.broadcast %13 : vector<1x128xf32> to vector<16x128xf32>
      %15 = arith.addf %12, %14 : vector<16x128xf32>
      %c0_14 = arith.constant 0 : index
      %c0_15 = arith.constant 0 : index
      %16 = vector.load %arg5[%c0_14, %c0_15] : memref<16x128xf32, #tpu.memory_space<vmem>>, vector<16x128xf32>
      tpu.vector_store %arg5[%c0_14, %c0_15], %15 {strides = array<i32>} : memref<16x128xf32, #tpu.memory_space<vmem>>, vector<16x128xf32>,
    } else {
    }
    return
  }
  func.func @transform_0(%arg0: i32, %arg1: i32) -> (i32, i32) {
    %c0_i32 = arith.constant 0 : i32
    return %arg0, %arg1 : i32, i32
  }
  func.func @transform_1(%arg0: i32, %arg1: i32) -> (i32, i32) {
    %c0_i32 = arith.constant 0 : i32
    %c0_i32_0 = arith.constant 0 : i32
    return %arg1, %c0_i32 : i32, i32
  }
  func.func @transform_2(%arg0: i32, %arg1: i32) -> (i32, i32) {
    %c0_i32 = arith.constant 0 : i32
    %c0_i32_0 = arith.constant 0 : i32
    %c0_i32_1 = arith.constant 0 : i32
    return %c0_i32, %c0_i32_0 : i32, i32
  }
  func.func @transform_3(%arg0: i32, %arg1: i32) -> (i32, i32) {
    %c0_i32 = arith.constant 0 : i32
    %c0_i32_0 = arith.constant 0 : i32
    return %arg0, %c0_i32 : i32, i32
  }
}

</mosaic_0001>

<llo_original>
// kernel: discriminator_forward.5
$region0: #{discriminator_forward.5}
  #allocation0 [shape = 'u32[]', space=smem, size = 0x4, offset = 0x4, fixed_abs, tag = 'smem constant byte address 0x4 - core index']
  #allocation1 [shape = 'u32[144,128]{1,0:T(1,128)}', space=vmem, size = 0x12000, scoped, tag = 'internal scratch']
  #allocation2 [shape = 'f32[208,128]{1,0:T(8,128)}', space=vmem, size = 0x1a000, scoped, tag = 'scratch operand']
  %s0 = inlined_call_operand.vmem [shape: bf16[416,128], index: 0, kind: input, shape index: {}]
  %s1 = inlined_call_operand.vmem [shape: bf16[128,128], index: 1, kind: input, shape index: {}]
  %s2 = inlined_call_operand.vmem [shape: f32[1,128], index: 2, kind: input, shape index: {}]
  %s3 = inlined_call_operand.vmem [shape: bf16[416,128], index: 3, kind: output, shape index: {}]
  %s4 = sld [smem:[#allocation0]]
  $region53: #{discriminator_forward.5} parent=0
    _
  %s6 = ssub.s32 1, %s4
  %s7 = scalar_select 0, %s6, %s4
  loop: start=0, step=1, limit=4
  $region2: #{discriminator_forward.5} parent=0 // loop_pre_header
    _
  $region3: #{discriminator_forward.5} parent=0 // loop_header
    %s9 = sphi 0, %s13
    %p10 = scmp.ge.s32.totalorder %s9, 4
    %s16 = sphi 0, %s28
    %s17 = sphi 0, %s24
    %s18 = sphi 0, %s16
    %s19 = sphi 0, %s17
    %s20 = sphi 0, %s18
    %s21 = sphi 0, %s19
    %s33 = sphi 0, %s35
    %s36 = sphi 0, %s33
    %s37 = sphi 0, %s36
    %s53 = sphi 0, %s37
    %s59 = sphi 0, %s61
    %s62 = sphi 0, %s59
    %s63 = sphi 0, %s62
    %s79 = sphi 0, %s63
    %s83 = sphi 0, %s83
    %s85 = sphi 0, %s83
    %s86 = sphi 0, %s85
    %s100 = sphi 0, %s86
    %s106 = sphi 0, %s108
    %s109 = sphi 0, %s106
    %s110 = sphi 0, %s109
    %s126 = sphi 0, %s110
  $region4: #{discriminator_forward.5} parent=0 // loop_header_branch
    %12 = sbr.rel (%p10) target = $region8
  $region5: #{discriminator_forward.5} parent=0 // loop_body
    %s14 = ssub.s32 %s9, 1
    %s15 = ssub.s32 %s9, 2
    %s22 = sadd.s32 1, %s17
    %p23 = scmp.ge.s32.totalorder %s22, 1
    %s24 = scalar_select %p23, 0, %s22
    %s25 = sadd.s32 1, %s16
    %s26 = scalar_select %p23, %s25, %s16
    %p27 = scmp.ge.s32.totalorder %s26, 2
    %s28 = scalar_select %p27, 0, %s26
    %s29 = ssub.s32 %s16, %s28
    %s30 = ssub.s32 %s17, %s24
    %s31 = sor.u32 %s29, %s30
    %p32 = scmp.eq.s32.totalorder %s31, 0
    %s34 = sadd.s32 %s33, 1
    %s35 = scalar_select %p32, %s33, %s34
    %p38 = pneg %p32
    %p39 = scmp.eq.s32.totalorder %s9, 1
    %p40 = por %p38, %p39
    %p41 = scmp.ne.s32.totalorder %s33, %s36
    %p42 = scmp.eq.s32.totalorder %s9, 0
    %p43 = por %p41, %p42
    %p44 = scmp.ne.s32.totalorder %s33, %s36
    %p45 = scmp.eq.s32.totalorder %s14, 1
    %p46 = por %p44, %p45
    %p47 = scmp.ne.s32.totalorder %s36, %s37
    %p48 = scmp.eq.s32.totalorder %s14, 0
    %p49 = por %p47, %p48
    %p50 = scmp.ne.s32.totalorder %s36, %s37
    %p51 = scmp.eq.s32.totalorder %s15, 1
    %p52 = por %p50, %p51
    %p54 = scmp.ne.s32.totalorder %s37, %s53
    %p55 = scmp.eq.s32.totalorder %s15, 0
    %p56 = por %p54, %p55
    %s57 = ssub.s32 %s17, %s24
    %p58 = scmp.eq.s32.totalorder %s57, 0
    %s60 = sadd.s32 %s59, 1
    %s61 = scalar_select %p58, %s59, %s60
    %p64 = pneg %p58
    %p65 = scmp.eq.s32.totalorder %s9, 1
    %p66 = por %p64, %p65
    %p67 = scmp.ne.s32.totalorder %s59, %s62
    %p68 = scmp.eq.s32.totalorder %s9, 0
    %p69 = por %p67, %p68
    %p70 = scmp.ne.s32.totalorder %s59, %s62
    %p71 = scmp.eq.s32.totalorder %s14, 1
    %p72 = por %p70, %p71
    %p73 = scmp.ne.s32.totalorder %s62, %s63
    %p74 = scmp.eq.s32.totalorder %s14, 0
    %p75 = por %p73, %p74
    %p76 = scmp.ne.s32.totalorder %s62, %s63
    %p77 = scmp.eq.s32.totalorder %s15, 1
    %p78 = por %p76, %p77
    %p80 = scmp.ne.s32.totalorder %s63, %s79
    %p81 = scmp.eq.s32.totalorder %s15, 0
    %p82 = por %p80, %p81
    %s84 = sadd.s32 %s83, 1
    %p87 = scmp.eq.s32.totalorder %s9, 1
    %p88 = scmp.ne.s32.totalorder %s83, %s85
    %p89 = scmp.eq.s32.totalorder %s9, 0
    %p90 = por %p88, %p89
    %p91 = scmp.ne.s32.totalorder %s83, %s85
    %p92 = scmp.eq.s32.totalorder %s14, 1
    %p93 = por %p91, %p92
    %p94 = scmp.ne.s32.totalorder %s85, %s86
    %p95 = scmp.eq.s32.totalorder %s14, 0
    %p96 = por %p94, %p95
    %p97 = scmp.ne.s32.totalorder %s85, %s86
    %p98 = scmp.eq.s32.totalorder %s15, 1
    %p99 = por %p97, %p98
    %p101 = scmp.ne.s32.totalorder %s86, %s100
    %p102 = scmp.eq.s32.totalorder %s15, 0
    %p103 = por %p101, %p102
    %s104 = ssub.s32 %s16, %s28
    %p105 = scmp.eq.s32.totalorder %s104, 0
    %s107 = sadd.s32 %s106, 1
    %s108 = scalar_select %p105, %s106, %s107
    %p111 = pneg %p105
    %p112 = scmp.eq.s32.totalorder %s9, 1
    %p113 = por %p111, %p112
    %p114 = scmp.ne.s32.totalorder %s106, %s109
    %p115 = scmp.eq.s32.totalorder %s9, 0
    %p116 = por %p114, %p115
    %p117 = scmp.ne.s32.totalorder %s106, %s109
    %p118 = scmp.eq.s32.totalorder %s14, 1
    %p119 = por %p117, %p118
    %p120 = scmp.ne.s32.totalorder %s109, %s110
    %p121 = scmp.eq.s32.totalorder %s14, 0
    %p122 = por %p120, %p121
    %p123 = scmp.ne.s32.totalorder %s109, %s110
    %p124 = scmp.eq.s32.totalorder %s15, 1
    %p125 = por %p123, %p124
    %p127 = scmp.ne.s32.totalorder %s110, %s126
    %p128 = scmp.eq.s32.totalorder %s15, 0
    %p129 = por %p127, %p128
    %p130 = scmp.le.s32.totalorder 1, %s9
    %p131 = scmp.lt.s32.totalorder %s9, 3
    %p132 = pnand %p130, %p131
    %p133 = pneg %p132
    // Predicated region
    $region9: #{discriminator_forward.5} parent=5 // pred_check
      _
    $region10: #{discriminator_forward.5} parent=5 // pred_check_branch
      %135 = sbr.rel (%p132) target = $region12
    $region11: #{discriminator_forward.5} parent=5 // pred_region
      %s136 = ssub.s32 %s9, 1
      // Predicated region
      $region13: #{discriminator_forward.5} parent=11 // pred_check
        %p137 = pneg %p75
      $region14: #{discriminator_forward.5} parent=11 // pred_check_branch
        %139 = sbr.rel (%p137) target = $region16
      $region15: #{discriminator_forward.5} parent=11 // pred_region
        %s140 = smul.u32 16, %s19
        %p141 = scmp.lt.s32.totalorder %s140, 15
        %s142 = scalar_select %p141, %s140, 15
        %s143 = smul.addr %s142, 4
        %s144 = scalar_lea.vmem %s1, %s143
        %s145 = smul.u32 16, %s19
      $region16: #{discriminator_forward.5} parent=11 // pred_fallthru
        _
      // Predicated region
      $region17: #{discriminator_forward.5} parent=11 // pred_check
        %p146 = pneg %p96
      $region18: #{discriminator_forward.5} parent=11 // pred_check_branch
        %148 = sbr.rel (%p146) target = $region20
      $region19: #{discriminator_forward.5} parent=11 // pred_region
        _
      $region20: #{discriminator_forward.5} parent=11 // pred_fallthru
        _
    $region12: #{discriminator_forward.5} parent=5 // pred_fallthru
      _
    %p149 = scmp.lt.s32.totalorder %s9, 2
    // Predicated region
    $region21: #{discriminator_forward.5} parent=5 // pred_check
      %p150 = pneg %p149
    $region22: #{discriminator_forward.5} parent=5 // pred_check_branch
      %152 = sbr.rel (%p150) target = $region24
    $region23: #{discriminator_forward.5} parent=5 // pred_region
      // Predicated region
      $region25: #{discriminator_forward.5} parent=23 // pred_check
        %p153 = pneg %p43
      $region26: #{discriminator_forward.5} parent=23 // pred_check_branch
        %155 = sbr.rel (%p153) target = $region28
      $region27: #{discriminator_forward.5} parent=23 // pred_region
        %s156 = smul.u32 26, %s16
        %p157 = scmp.lt.s32.totalorder %s156, 51
        %s158 = scalar_select %p157, %s156, 51
        %p159 = scmp.lt.s32.totalorder %s17, 0
        %s160 = scalar_select %p159, %s17, 0
        %s161 = sadd.s32 %s160, %s158
        %s162 = smul.addr %s161, 4
        %s163 = scalar_lea.vmem %s0, %s162
        %s164 = smul.u32 26, %s16
      $region28: #{discriminator_forward.5} parent=23 // pred_fallthru
        _
    $region24: #{discriminator_forward.5} parent=5 // pred_fallthru
      _
    %p165 = scmp.le.s32.totalorder 1, %s9
    %p166 = scmp.lt.s32.totalorder %s9, 3
    %p167 = pnand %p165, %p166
    %p168 = pneg %p167
    // Predicated region
    $region29: #{discriminator_forward.5} parent=5 // pred_check
      _
    $region30: #{discriminator_forward.5} parent=5 // pred_check_branch
      %170 = sbr.rel (%p167) target = $region32
    $region31: #{discriminator_forward.5} parent=5 // pred_region
      %s171 = ssub.s32 %s9, 1
      %s172 = smul.u32 26, %s18
      %p173 = scmp.lt.s32.totalorder %s172, 51
      %s174 = scalar_select %p173, %s172, 51
      %p175 = scmp.lt.s32.totalorder %s19, 0
      %s176 = scalar_select %p175, %s19, 0
      %s177 = sadd.s32 %s176, %s174
      %s178 = smul.addr %s177, 4
      %s179 = scalar_lea.vmem %s0, %s178
      %p180 = pneg %p49
      %p181 = pneg %p46
      %s182 = smul.u32 16, %s19
      %p183 = scmp.lt.s32.totalorder %s182, 15
      %s184 = scalar_select %p183, %s182, 15
      %s185 = smul.addr %s184, 4
      %s186 = scalar_lea.vmem %s1, %s185
      %p187 = pneg %p75
      %p188 = pneg %p72
      %p189 = pneg %p96
      %p190 = pneg %p93
      %p191 = pneg %p122
      %p192 = pneg %p119
      %s193 = smul.u32 26, %s18
      %p194 = scmp.lt.s32.totalorder %s193, 51
      %s195 = scalar_select %p194, %s193, 51
      %s196 = smul.addr %s195, 4
      %s197 = scalar_lea.vmem %s3, %s196
      %s198 = smul.u32 26, %s18
      %p199 = scmp.lt.s32.totalorder %s198, 51
      %s200 = scalar_select %p199, %s198, 51
      %p201 = scmp.lt.s32.totalorder %s19, 0
      %s202 = scalar_select %p201, %s19, 0
      %s203 = sadd.s32 %s202, %s200
      %s204 = smul.addr %s203, 4
      %s205 = scalar_lea.vmem %s0, %s204
      %s206 = smul.u32 26, %s18
      %s207 = smul.u32 16, %s19
      %p208 = scmp.lt.s32.totalorder %s207, 15
      %s209 = scalar_select %p208, %s207, 15
      %s210 = smul.addr %s209, 4
      %s211 = scalar_lea.vmem %s1, %s210
      %s212 = smul.u32 16, %s19
      %s213 = smul.u32 26, %s18
      %p214 = scmp.lt.s32.totalorder %s213, 51
      %s215 = scalar_select %p214, %s213, 51
      %s216 = smul.addr %s215, 4
      %s217 = scalar_lea.vmem %s3, %s216
      %s218 = smul.u32 26, %s18
      %p220 = scmp.eq.s32.totalorder %s19, 0
      // Predicated region
      $region33: #{discriminator_forward.5} parent=31 // pred_check
        %p221 = pneg %p220
      $region34: #{discriminator_forward.5} parent=31 // pred_check_branch
        %223 = sbr.rel (%p221) target = $region36
      $region35: #{discriminator_forward.5} parent=31 // pred_region
        %224 = vst [vmem:[#allocation2] sm:$0xff] 0.0
        %225 = vst [vmem:[#allocation2 + $0x8] sm:$0xff] 0.0
        %226 = vst [vmem:[#allocation2 + $0x10] sm:$0xff] 0.0
        %227 = vst [vmem:[#allocation2 + $0x18] sm:$0xff] 0.0
        %228 = vst [vmem:[#allocation2 + $0x20] sm:$0xff] 0.0
        %229 = vst [vmem:[#allocation2 + $0x28] sm:$0xff] 0.0
        %230 = vst [vmem:[#allocation2 + $0x30] sm:$0xff] 0.0
        %231 = vst [vmem:[#allocation2 + $0x38] sm:$0xff] 0.0
        %232 = vst [vmem:[#allocation2 + $0x40] sm:$0xff] 0.0
        %233 = vst [vmem:[#allocation2 + $0x48] sm:$0xff] 0.0
        %234 = vst [vmem:[#allocation2 + $0x50] sm:$0xff] 0.0
        %235 = vst [vmem:[#allocation2 + $0x58] sm:$0xff] 0.0
        %236 = vst [vmem:[#allocation2 + $0x60] sm:$0xff] 0.0
        %237 = vst [vmem:[#allocation2 + $0x68] sm:$0xff] 0.0
        %238 = vst [vmem:[#allocation2 + $0x70] sm:$0xff] 0.0
        %239 = vst [vmem:[#allocation2 + $0x78] sm:$0xff] 0.0
        %240 = vst [vmem:[#allocation2 + $0x80] sm:$0xff] 0.0
        %241 = vst [vmem:[#allocation2 + $0x88] sm:$0xff] 0.0
        %242 = vst [vmem:[#allocation2 + $0x90] sm:$0xff] 0.0
        %243 = vst [vmem:[#allocation2 + $0x98] sm:$0xff] 0.0
        %244 = vst [vmem:[#allocation2 + $0xa0] sm:$0xff] 0.0
        %245 = vst [vmem:[#allocation2 + $0xa8] sm:$0xff] 0.0
        %246 = vst [vmem:[#allocation2 + $0xb0] sm:$0xff] 0.0
        %247 = vst [vmem:[#allocation2 + $0xb8] sm:$0xff] 0.0
        %248 = vst [vmem:[#allocation2 + $0xc0] sm:$0xff] 0.0
        %249 = vst [vmem:[#allocation2 + $0xc8] sm:$0xff] 0.0
      $region36: #{discriminator_forward.5} parent=31 // pred_fallthru
        _
      %v250 = vld [vmem:[#allocation2] sm:$0xff]
      %v251 = vld [vmem:[#allocation2 + $0x8] sm:$0xff]
      %v252 = vld [vmem:[#allocation2 + $0x10] sm:$0xff]
      %v253 = vld [vmem:[#allocation2 + $0x18] sm:$0xff]
      %v254 = vld [vmem:[#allocation2 + $0x20] sm:$0xff]
      %v255 = vld [vmem:[#allocation2 + $0x28] sm:$0xff]
      %v256 = vld [vmem:[#allocation2 + $0x30] sm:$0xff]
      %v257 = vld [vmem:[#allocation2 + $0x38] sm:$0xff]
      %v258 = vld [vmem:[#allocation2 + $0x40] sm:$0xff]
      %v259 = vld [vmem:[#allocation2 + $0x48] sm:$0xff]
      %v260 = vld [vmem:[#allocation2 + $0x50] sm:$0xff]
      %v261 = vld [vmem:[#allocation2 + $0x58] sm:$0xff]
      %v262 = vld [vmem:[#allocation2 + $0x60] sm:$0xff]
      %v263 = vld [vmem:[#allocation2 + $0x68] sm:$0xff]
      %v264 = vld [vmem:[#allocation2 + $0x70] sm:$0xff]
      %v265 = vld [vmem:[#allocation2 + $0x78] sm:$0xff]
      %v266 = vld [vmem:[#allocation2 + $0x80] sm:$0xff]
      %v267 = vld [vmem:[#allocation2 + $0x88] sm:$0xff]
      %v268 = vld [vmem:[#allocation2 + $0x90] sm:$0xff]
      %v269 = vld [vmem:[#allocation2 + $0x98] sm:$0xff]
      %v270 = vld [vmem:[#allocation2 + $0xa0] sm:$0xff]
      %v271 = vld [vmem:[#allocation2 + $0xa8] sm:$0xff]
      %v272 = vld [vmem:[#allocation2 + $0xb0] sm:$0xff]
      %v273 = vld [vmem:[#allocation2 + $0xb8] sm:$0xff]
      %v274 = vld [vmem:[#allocation2 + $0xc0] sm:$0xff]
      %v275 = vld [vmem:[#allocation2 + $0xc8] sm:$0xff]
      %v276 = vld [vmem:[%s205] sm:$0xf]
      %v277 = vld [vmem:[%s205 + $0x4] sm:$0xf]
      %v278 = vld [vmem:[%s205 + $0x8] sm:$0xf]
      %v279 = vld [vmem:[%s205 + $0xc] sm:$0xf]
      %v280 = vld [vmem:[%s205 + $0x10] sm:$0xf]
      %v281 = vld [vmem:[%s205 + $0x14] sm:$0xf]
      %v282 = vld [vmem:[%s205 + $0x18] sm:$0xf]
      %v283 = vld [vmem:[%s205 + $0x1c] sm:$0xf]
      %v284 = vld [vmem:[%s205 + $0x20] sm:$0xf]
      %v285 = vld [vmem:[%s205 + $0x24] sm:$0xf]
      %v286 = vld [vmem:[%s205 + $0x28] sm:$0xf]
      %v287 = vld [vmem:[%s205 + $0x2c] sm:$0xf]
      %v288 = vld [vmem:[%s205 + $0x30] sm:$0xf]
      %v289 = vld [vmem:[%s205 + $0x34] sm:$0xf]
      %v290 = vld [vmem:[%s205 + $0x38] sm:$0xf]
      %v291 = vld [vmem:[%s205 + $0x3c] sm:$0xf]
      %v292 = vld [vmem:[%s205 + $0x40] sm:$0xf]
      %v293 = vld [vmem:[%s205 + $0x44] sm:$0xf]
      %v294 = vld [vmem:[%s205 + $0x48] sm:$0xf]
      %v295 = vld [vmem:[%s205 + $0x4c] sm:$0xf]
      %v296 = vld [vmem:[%s205 + $0x50] sm:$0xf]
      %v297 = vld [vmem:[%s205 + $0x54] sm:$0xf]
      %v298 = vld [vmem:[%s205 + $0x58] sm:$0xf]
      %v299 = vld [vmem:[%s205 + $0x5c] sm:$0xf]
      %v300 = vld [vmem:[%s205 + $0x60] sm:$0xf]
      %v301 = vld [vmem:[%s205 + $0x64] sm:$0xf]
      %v302 = vld [vmem:[%s211] sm:$0xf]
      %v303 = vld [vmem:[%s211 + $0x4] sm:$0xf]
      %v304 = vld [vmem:[%s211 + $0x8] sm:$0xf]
      %v305 = vld [vmem:[%s211 + $0xc] sm:$0xf]
      %v306 = vld [vmem:[%s211 + $0x10] sm:$0xf]
      %v307 = vld [vmem:[%s211 + $0x14] sm:$0xf]
      %v308 = vld [vmem:[%s211 + $0x18] sm:$0xf]
      %v309 = vld [vmem:[%s211 + $0x1c] sm:$0xf]
      %v310 = vld [vmem:[%s211 + $0x20] sm:$0xf]
      %v311 = vld [vmem:[%s211 + $0x24] sm:$0xf]
      %v312 = vld [vmem:[%s211 + $0x28] sm:$0xf]
      %v313 = vld [vmem:[%s211 + $0x2c] sm:$0xf]
      %v314 = vld [vmem:[%s211 + $0x30] sm:$0xf]
      %v315 = vld [vmem:[%s211 + $0x34] sm:$0xf]
      %v316 = vld [vmem:[%s211 + $0x38] sm:$0xf]
      %v317 = vld [vmem:[%s211 + $0x3c] sm:$0xf]
      %v344 = vunpack.c.l.b16 %v276
      %v345 = vunpack.c.l.b16 %v277
      %v346 = vunpack.c.l.b16 %v278
      %v347 = vunpack.c.l.b16 %v279
      %v348 = vunpack.c.l.b16 %v280
      %v349 = vunpack.c.l.b16 %v281
      %v350 = vunpack.c.l.b16 %v282
      %v351 = vunpack.c.l.b16 %v283
      %v352 = vunpack.c.l.b16 %v284
      %v353 = vunpack.c.l.b16 %v285
      %v354 = vunpack.c.l.b16 %v286
      %v355 = vunpack.c.l.b16 %v287
      %v356 = vunpack.c.l.b16 %v288
      %v357 = vunpack.c.l.b16 %v289
      %v358 = vunpack.c.l.b16 %v290
      %v359 = vunpack.c.l.b16 %v291
      %v360 = vunpack.c.l.b16 %v292
      %v361 = vunpack.c.l.b16 %v293
      %v362 = vunpack.c.l.b16 %v294
      %v363 = vunpack.c.l.b16 %v295
      %v364 = vunpack.c.l.b16 %v296
      %v365 = vunpack.c.l.b16 %v297
      %v366 = vunpack.c.l.b16 %v298
      %v367 = vunpack.c.l.b16 %v299
      %v368 = vunpack.c.l.b16 %v300
      %v369 = vunpack.c.l.b16 %v301
      %v370 = vpack.c.b16 %v345, %v344
      %v371 = vpack.c.b16 %v347, %v346
      %v372 = vpack.c.b16 %v349, %v348
      %v373 = vpack.c.b16 %v351, %v350
      %v374 = vpack.c.b16 %v353, %v352
      %v375 = vpack.c.b16 %v355, %v354
      %v376 = vpack.c.b16 %v357, %v356
      %v377 = vpack.c.b16 %v359, %v358
      %v378 = vpack.c.b16 %v361, %v360
      %v379 = vpack.c.b16 %v363, %v362
      %v380 = vpack.c.b16 %v365, %v364
      %v381 = vpack.c.b16 %v367, %v366
      %v382 = vpack.c.b16 %v369, %v368
      %v412 = vunpack.c.l.b16 %v302
      %v413 = vunpack.c.l.b16 %v303
      %v414 = vunpack.c.l.b16 %v304
      %v415 = vunpack.c.l.b16 %v305
      %v416 = vunpack.c.l.b16 %v306
      %v417 = vunpack.c.l.b16 %v307
      %v418 = vunpack.c.l.b16 %v308
      %v419 = vunpack.c.l.b16 %v309
      %v420 = vunpack.c.l.b16 %v310
      %v421 = vunpack.c.l.b16 %v311
      %v422 = vunpack.c.l.b16 %v312
      %v423 = vunpack.c.l.b16 %v313
      %v424 = vunpack.c.l.b16 %v314
      %v425 = vunpack.c.l.b16 %v315
      %v426 = vunpack.c.l.b16 %v316
      %v427 = vunpack.c.l.b16 %v317
      %v428 = vpack.c.b16 %v413, %v412
      %v429 = vpack.c.b16 %v415, %v414
      %v430 = vpack.c.b16 %v417, %v416
      %v431 = vpack.c.b16 %v419, %v418
      %v432 = vpack.c.b16 %v421, %v420
      %v433 = vpack.c.b16 %v423, %v422
      %v434 = vpack.c.b16 %v425, %v424
      %v435 = vpack.c.b16 %v427, %v426
      %444 = vmatprep.subr.bf16.mxu0 0
      %445 = vmatpush1.bf16.msra.mxu0 %v428
      %446 = vmatprep.subr.bf16.mxu0 0
      %447 = vmatpush1.bf16.msra.mxu0 %v429
      %448 = vmatprep.subr.bf16.mxu0 0
      %449 = vmatpush1.bf16.msra.mxu0 %v430
      %450 = vmatprep.subr.bf16.mxu0 0
      %451 = vmatpush1.bf16.msra.mxu0 %v431
      %452 = vmatprep.subr.bf16.mxu0 0
      %453 = vmatpush1.bf16.msra.mxu0 %v432
      %454 = vmatprep.subr.bf16.mxu0 0
      %455 = vmatpush1.bf16.msra.mxu0 %v433
      %456 = vmatprep.subr.bf16.mxu0 0
      %457 = vmatpush1.bf16.msra.mxu0 %v434
      %458 = vmatprep.subr.bf16.mxu0 0
      %459 = vmatpush1.bf16.msra.mxu0 %v435
      %460 = vmatprep.subr.bf16.mxu0 0
      %461 = vmatpush1.bf16.msra.mxu0 0
      %462 = vmatprep.subr.bf16.mxu0 0
      %463 = vmatpush1.bf16.msra.mxu0 0
      %464 = vmatprep.subr.bf16.mxu0 0
      %465 = vmatpush1.bf16.msra.mxu0 0
      %466 = vmatprep.subr.bf16.mxu0 0
      %467 = vmatpush1.bf16.msra.mxu0 0
      %468 = vmatprep.subr.bf16.mxu0 0
      %469 = vmatpush1.bf16.msra.mxu0 0
      %470 = vmatprep.subr.bf16.mxu0 0
      %471 = vmatpush1.bf16.msra.mxu0 0
      %472 = vmatprep.subr.bf16.mxu0 0
      %473 = vmatpush1.bf16.msra.mxu0 0
      %474 = vmatprep.subr.bf16.mxu0 0
      %475 = vmatpush1.bf16.msra.mxu0 0
      %476 = vmatprep.mubr.bf16.mxu0 0
      %477 = vmatmul.mubr.bf16.gmra.mrb[0].mxu0 %v370
      %v478 = vpop.f32.mrb[0].mxu0
      %v479 = vadd.f32 0.0, %v478
      %v480 = vpop.f32.mrb[0].mxu0
      %v481 = vpop.f32.mrb[0].mxu0
      %v482 = vadd.f32 0.0, %v481
      %v483 = vpop.f32.mrb[0].mxu0
      %484 = vmatprep.mubr.bf16.mxu0 0
      %485 = vmatmul.mubr.bf16.gmra.mrb[0].mxu0 %v371
      %v486 = vpop.f32.mrb[0].mxu0
      %v487 = vadd.f32 0.0, %v486
      %v488 = vpop.f32.mrb[0].mxu0
      %v489 = vpop.f32.mrb[0].mxu0
      %v490 = vadd.f32 0.0, %v489
      %v491 = vpop.f32.mrb[0].mxu0
      %492 = vmatprep.mubr.bf16.mxu0 0
      %493 = vmatmul.mubr.bf16.gmra.mrb[0].mxu0 %v372
      %v494 = vpop.f32.mrb[0].mxu0
      %v495 = vadd.f32 0.0, %v494
      %v496 = vpop.f32.mrb[0].mxu0
      %v497 = vpop.f32.mrb[0].mxu0
      %v498 = vadd.f32 0.0, %v497
      %v499 = vpop.f32.mrb[0].mxu0
      %500 = vmatprep.mubr.bf16.mxu0 0
      %501 = vmatmul.mubr.bf16.gmra.mrb[0].mxu0 %v373
      %v502 = vpop.f32.mrb[0].mxu0
      %v503 = vadd.f32 0.0, %v502
      %v504 = vpop.f32.mrb[0].mxu0
      %v505 = vpop.f32.mrb[0].mxu0
      %v506 = vadd.f32 0.0, %v505
      %v507 = vpop.f32.mrb[0].mxu0
      %508 = vmatprep.mubr.bf16.mxu0 0
      %509 = vmatmul.mubr.bf16.gmra.mrb[0].mxu0 %v374
      %v510 = vpop.f32.mrb[0].mxu0
      %v511 = vadd.f32 0.0, %v510
      %v512 = vpop.f32.mrb[0].mxu0
      %v513 = vpop.f32.mrb[0].mxu0
      %v514 = vadd.f32 0.0, %v513
      %v515 = vpop.f32.mrb[0].mxu0
      %516 = vmatprep.mubr.bf16.mxu0 0
      %517 = vmatmul.mubr.bf16.gmra.mrb[0].mxu0 %v375
      %v518 = vpop.f32.mrb[0].mxu0
      %v519 = vadd.f32 0.0, %v518
      %v520 = vpop.f32.mrb[0].mxu0
      %v521 = vpop.f32.mrb[0].mxu0
      %v522 = vadd.f32 0.0, %v521
      %v523 = vpop.f32.mrb[0].mxu0
      %524 = vmatprep.mubr.bf16.mxu0 0
      %525 = vmatmul.mubr.bf16.gmra.mrb[0].mxu0 %v376
      %v526 = vpop.f32.mrb[0].mxu0
      %v527 = vadd.f32 0.0, %v526
      %v528 = vpop.f32.mrb[0].mxu0
      %v529 = vpop.f32.mrb[0].mxu0
      %v530 = vadd.f32 0.0, %v529
      %v531 = vpop.f32.mrb[0].mxu0
      %532 = vmatprep.mubr.bf16.mxu0 0
      %533 = vmatmul.mubr.bf16.gmra.mrb[0].mxu0 %v377
      %v534 = vpop.f32.mrb[0].mxu0
      %v535 = vadd.f32 0.0, %v534
      %v536 = vpop.f32.mrb[0].mxu0
      %v537 = vpop.f32.mrb[0].mxu0
      %v538 = vadd.f32 0.0, %v537
      %v539 = vpop.f32.mrb[0].mxu0
      %540 = vmatprep.mubr.bf16.mxu0 0
      %541 = vmatmul.mubr.bf16.gmra.mrb[0].mxu0 %v378
      %v542 = vpop.f32.mrb[0].mxu0
      %v543 = vadd.f32 0.0, %v542
      %v544 = vpop.f32.mrb[0].mxu0
      %v545 = vpop.f32.mrb[0].mxu0
      %v546 = vadd.f32 0.0, %v545
      %v547 = vpop.f32.mrb[0].mxu0
      %548 = vmatprep.mubr.bf16.mxu0 0
      %549 = vmatmul.mubr.bf16.gmra.mrb[0].mxu0 %v379
      %v550 = vpop.f32.mrb[0].mxu0
      %v551 = vadd.f32 0.0, %v550
      %v552 = vpop.f32.mrb[0].mxu0
      %v553 = vpop.f32.mrb[0].mxu0
      %v554 = vadd.f32 0.0, %v553
      %v555 = vpop.f32.mrb[0].mxu0
      %556 = vmatprep.mubr.bf16.mxu0 0
      %557 = vmatmul.mubr.bf16.gmra.mrb[0].mxu0 %v380
      %v558 = vpop.f32.mrb[0].mxu0
      %v559 = vadd.f32 0.0, %v558
      %v560 = vpop.f32.mrb[0].mxu0
      %v561 = vpop.f32.mrb[0].mxu0
      %v562 = vadd.f32 0.0, %v561
      %v563 = vpop.f32.mrb[0].mxu0
      %564 = vmatprep.mubr.bf16.mxu0 0
      %565 = vmatmul.mubr.bf16.gmra.mrb[0].mxu0 %v381
      %v566 = vpop.f32.mrb[0].mxu0
      %v567 = vadd.f32 0.0, %v566
      %v568 = vpop.f32.mrb[0].mxu0
      %v569 = vpop.f32.mrb[0].mxu0
      %v570 = vadd.f32 0.0, %v569
      %v571 = vpop.f32.mrb[0].mxu0
      %572 = vmatprep.mubr.bf16.mxu0 0
      %573 = vmatmul.mubr.bf16.gmra.mrb[0].mxu0 %v382
      %v574 = vpop.f32.mrb[0].mxu0
      %v575 = vadd.f32 0.0, %v574
      %v576 = vpop.f32.mrb[0].mxu0
      %v577 = vpop.f32.mrb[0].mxu0
      %v578 = vadd.f32 0.0, %v577
      %v579 = vpop.f32.mrb[0].mxu0
      %580 = vdwg.mxu0
      %v581 = vadd.f32 %v250, %v479
      %v582 = vadd.f32 %v251, %v482
      %v583 = vadd.f32 %v252, %v487
      %v584 = vadd.f32 %v253, %v490
      %v585 = vadd.f32 %v254, %v495
      %v586 = vadd.f32 %v255, %v498
      %v587 = vadd.f32 %v256, %v503
      %v588 = vadd.f32 %v257, %v506
      %v589 = vadd.f32 %v258, %v511
      %v590 = vadd.f32 %v259, %v514
      %v591 = vadd.f32 %v260, %v519
      %v592 = vadd.f32 %v261, %v522
      %v593 = vadd.f32 %v262, %v527
      %v594 = vadd.f32 %v263, %v530
      %v595 = vadd.f32 %v264, %v535
      %v596 = vadd.f32 %v265, %v538
      %v597 = vadd.f32 %v266, %v543
      %v598 = vadd.f32 %v267, %v546
      %v599 = vadd.f32 %v268, %v551
      %v600 = vadd.f32 %v269, %v554
      %v601 = vadd.f32 %v270, %v559
      %v602 = vadd.f32 %v271, %v562
      %v603 = vadd.f32 %v272, %v567
      %v604 = vadd.f32 %v273, %v570
      %v605 = vadd.f32 %v274, %v575
      %v606 = vadd.f32 %v275, %v578
      %607 = vst [vmem:[#allocation2] sm:$0xff] %v581
      %608 = vst [vmem:[#allocation2 + $0x8] sm:$0xff] %v582
      %609 = vst [vmem:[#allocation2 + $0x10] sm:$0xff] %v583
      %610 = vst [vmem:[#allocation2 + $0x18] sm:$0xff] %v584
      %611 = vst [vmem:[#allocation2 + $0x20] sm:$0xff] %v585
      %612 = vst [vmem:[#allocation2 + $0x28] sm:$0xff] %v586
      %613 = vst [vmem:[#allocation2 + $0x30] sm:$0xff] %v587
      %614 = vst [vmem:[#allocation2 + $0x38] sm:$0xff] %v588
      %615 = vst [vmem:[#allocation2 + $0x40] sm:$0xff] %v589
      %616 = vst [vmem:[#allocation2 + $0x48] sm:$0xff] %v590
      %617 = vst [vmem:[#allocation2 + $0x50] sm:$0xff] %v591
      %618 = vst [vmem:[#allocation2 + $0x58] sm:$0xff] %v592
      %619 = vst [vmem:[#allocation2 + $0x60] sm:$0xff] %v593
      %620 = vst [vmem:[#allocation2 + $0x68] sm:$0xff] %v594
      %621 = vst [vmem:[#allocation2 + $0x70] sm:$0xff] %v595
      %622 = vst [vmem:[#allocation2 + $0x78] sm:$0xff] %v596
      %623 = vst [vmem:[#allocation2 + $0x80] sm:$0xff] %v597
      %624 = vst [vmem:[#allocation2 + $0x88] sm:$0xff] %v598
      %625 = vst [vmem:[#allocation2 + $0x90] sm:$0xff] %v599
      %626 = vst [vmem:[#allocation2 + $0x98] sm:$0xff] %v600
      %627 = vst [vmem:[#allocation2 + $0xa0] sm:$0xff] %v601
      %628 = vst [vmem:[#allocation2 + $0xa8] sm:$0xff] %v602
      %629 = vst [vmem:[#allocation2 + $0xb0] sm:$0xff] %v603
      %630 = vst [vmem:[#allocation2 + $0xb8] sm:$0xff] %v604
      %631 = vst [vmem:[#allocation2 + $0xc0] sm:$0xff] %v605
      %632 = vst [vmem:[#allocation2 + $0xc8] sm:$0xff] %v606
      // Predicated region
      $region37: #{discriminator_forward.5} parent=31 // pred_check
        %p633 = pneg %p220
      $region38: #{discriminator_forward.5} parent=31 // pred_check_branch
        %635 = sbr.rel (%p633) target = $region40
      $region39: #{discriminator_forward.5} parent=31 // pred_region
        %v636 = vld [vmem:[#allocation2] sm:$0xff]
        %v637 = vld [vmem:[#allocation2 + $0x8] sm:$0xff]
        %v638 = vld [vmem:[#allocation2 + $0x10] sm:$0xff]
        %v639 = vld [vmem:[#allocation2 + $0x18] sm:$0xff]
        %v640 = vld [vmem:[#allocation2 + $0x20] sm:$0xff]
        %v641 = vld [vmem:[#allocation2 + $0x28] sm:$0xff]
        %v642 = vld [vmem:[#allocation2 + $0x30] sm:$0xff]
        %v643 = vld [vmem:[#allocation2 + $0x38] sm:$0xff]
        %v644 = vld [vmem:[#allocation2 + $0x40] sm:$0xff]
        %v645 = vld [vmem:[#allocation2 + $0x48] sm:$0xff]
        %v646 = vld [vmem:[#allocation2 + $0x50] sm:$0xff]
        %v647 = vld [vmem:[#allocation2 + $0x58] sm:$0xff]
        %v648 = vld [vmem:[#allocation2 + $0x60] sm:$0xff]
        %v649 = vld [vmem:[#allocation2 + $0x68] sm:$0xff]
        %v650 = vld [vmem:[#allocation2 + $0x70] sm:$0xff]
        %v651 = vld [vmem:[#allocation2 + $0x78] sm:$0xff]
        %v652 = vld [vmem:[#allocation2 + $0x80] sm:$0xff]
        %v653 = vld [vmem:[#allocation2 + $0x88] sm:$0xff]
        %v654 = vld [vmem:[#allocation2 + $0x90] sm:$0xff]
        %v655 = vld [vmem:[#allocation2 + $0x98] sm:$0xff]
        %v656 = vld [vmem:[#allocation2 + $0xa0] sm:$0xff]
        %v657 = vld [vmem:[#allocation2 + $0xa8] sm:$0xff]
        %v658 = vld [vmem:[#allocation2 + $0xb0] sm:$0xff]
        %v659 = vld [vmem:[#allocation2 + $0xb8] sm:$0xff]
        %v660 = vld [vmem:[#allocation2 + $0xc0] sm:$0xff]
        %v661 = vld [vmem:[#allocation2 + $0xc8] sm:$0xff]
        %v662 = vld [vmem:[%s2] sm:$0x1]
        %v664 = vlaneseq
        %v665 = vshrl.u32 %v664, 7
        %v666 = vsub.s32 0, %v665
        %v667 = vrot.slane %v662, %v666
        %v669 = vadd.f32 %v636, %v667
        %v670 = vadd.f32 %v637, %v667
        %v671 = vadd.f32 %v638, %v667
        %v672 = vadd.f32 %v639, %v667
        %v673 = vadd.f32 %v640, %v667
        %v674 = vadd.f32 %v641, %v667
        %v675 = vadd.f32 %v642, %v667
        %v676 = vadd.f32 %v643, %v667
        %v677 = vadd.f32 %v644, %v667
        %v678 = vadd.f32 %v645, %v667
        %v679 = vadd.f32 %v646, %v667
        %v680 = vadd.f32 %v647, %v667
        %v681 = vadd.f32 %v648, %v667
        %v682 = vadd.f32 %v649, %v667
        %v683 = vadd.f32 %v650, %v667
        %v684 = vadd.f32 %v651, %v667
        %v685 = vadd.f32 %v652, %v667
        %v686 = vadd.f32 %v653, %v667
        %v687 = vadd.f32 %v654, %v667
        %v688 = vadd.f32 %v655, %v667
        %v689 = vadd.f32 %v656, %v667
        %v690 = vadd.f32 %v657, %v667
        %v691 = vadd.f32 %v658, %v667
        %v692 = vadd.f32 %v659, %v667
        %v693 = vadd.f32 %v660, %v667
        %v694 = vadd.f32 %v661, %v667
        %vm695 = vcmp.ge.f32.partialorder %v669, 0.0
        %vm696 = vcmp.ge.f32.partialorder %v670, 0.0
        %vm697 = vcmp.ge.f32.partialorder %v671, 0.0
        %vm698 = vcmp.ge.f32.partialorder %v672, 0.0
        %vm699 = vcmp.ge.f32.partialorder %v673, 0.0
        %vm700 = vcmp.ge.f32.partialorder %v674, 0.0
        %vm701 = vcmp.ge.f32.partialorder %v675, 0.0
        %vm702 = vcmp.ge.f32.partialorder %v676, 0.0
        %vm703 = vcmp.ge.f32.partialorder %v677, 0.0
        %vm704 = vcmp.ge.f32.partialorder %v678, 0.0
        %vm705 = vcmp.ge.f32.partialorder %v679, 0.0
        %vm706 = vcmp.ge.f32.partialorder %v680, 0.0
        %vm707 = vcmp.ge.f32.partialorder %v681, 0.0
        %vm708 = vcmp.ge.f32.partialorder %v682, 0.0
        %vm709 = vcmp.ge.f32.partialorder %v683, 0.0
        %vm710 = vcmp.ge.f32.partialorder %v684, 0.0
        %vm711 = vcmp.ge.f32.partialorder %v685, 0.0
        %vm712 = vcmp.ge.f32.partialorder %v686, 0.0
        %vm713 = vcmp.ge.f32.partialorder %v687, 0.0
        %vm714 = vcmp.ge.f32.partialorder %v688, 0.0
        %vm715 = vcmp.ge.f32.partialorder %v689, 0.0
        %vm716 = vcmp.ge.f32.partialorder %v690, 0.0
        %vm717 = vcmp.ge.f32.partialorder %v691, 0.0
        %vm718 = vcmp.ge.f32.partialorder %v692, 0.0
        %vm719 = vcmp.ge.f32.partialorder %v693, 0.0
        %vm720 = vcmp.ge.f32.partialorder %v694, 0.0
        %v721 = vmul.f32 %v669, 0.2
        %v722 = vmul.f32 %v670, 0.2
        %v723 = vmul.f32 %v671, 0.2
        %v724 = vmul.f32 %v672, 0.2
        %v725 = vmul.f32 %v673, 0.2
        %v726 = vmul.f32 %v674, 0.2
        %v727 = vmul.f32 %v675, 0.2
        %v728 = vmul.f32 %v676, 0.2
        %v729 = vmul.f32 %v677, 0.2
        %v730 = vmul.f32 %v678, 0.2
        %v731 = vmul.f32 %v679, 0.2
        %v732 = vmul.f32 %v680, 0.2
        %v733 = vmul.f32 %v681, 0.2
        %v734 = vmul.f32 %v682, 0.2
        %v735 = vmul.f32 %v683, 0.2
        %v736 = vmul.f32 %v684, 0.2
        %v737 = vmul.f32 %v685, 0.2
        %v738 = vmul.f32 %v686, 0.2
        %v739 = vmul.f32 %v687, 0.2
        %v740 = vmul.f32 %v688, 0.2
        %v741 = vmul.f32 %v689, 0.2
        %v742 = vmul.f32 %v690, 0.2
        %v743 = vmul.f32 %v691, 0.2
        %v744 = vmul.f32 %v692, 0.2
        %v745 = vmul.f32 %v693, 0.2
        %v746 = vmul.f32 %v694, 0.2
        %v747 = vsel %vm695, %v669, %v721
        %v748 = vsel %vm696, %v670, %v722
        %v749 = vsel %vm697, %v671, %v723
        %v750 = vsel %vm698, %v672, %v724
        %v751 = vsel %vm699, %v673, %v725
        %v752 = vsel %vm700, %v674, %v726
        %v753 = vsel %vm701, %v675, %v727
        %v754 = vsel %vm702, %v676, %v728
        %v755 = vsel %vm703, %v677, %v729
        %v756 = vsel %vm704, %v678, %v730
        %v757 = vsel %vm705, %v679, %v731
        %v758 = vsel %vm706, %v680, %v732
        %v759 = vsel %vm707, %v681, %v733
        %v760 = vsel %vm708, %v682, %v734
        %v761 = vsel %vm709, %v683, %v735
        %v762 = vsel %vm710, %v684, %v736
        %v763 = vsel %vm711, %v685, %v737
        %v764 = vsel %vm712, %v686, %v738
        %v765 = vsel %vm713, %v687, %v739
        %v766 = vsel %vm714, %v688, %v740
        %v767 = vsel %vm715, %v689, %v741
        %v768 = vsel %vm716, %v690, %v742
        %v769 = vsel %vm717, %v691, %v743
        %v770 = vsel %vm718, %v692, %v744
        %v771 = vsel %vm719, %v693, %v745
        %v772 = vsel %vm720, %v694, %v746
        %v773 = vpack.c.bf16 %v748, %v747
        %v774 = vpack.c.bf16 %v750, %v749
        %v775 = vpack.c.bf16 %v752, %v751
        %v776 = vpack.c.bf16 %v754, %v753
        %v777 = vpack.c.bf16 %v756, %v755
        %v778 = vpack.c.bf16 %v758, %v757
        %v779 = vpack.c.bf16 %v760, %v759
        %v780 = vpack.c.bf16 %v762, %v761
        %v781 = vpack.c.bf16 %v764, %v763
        %v782 = vpack.c.bf16 %v766, %v765
        %v783 = vpack.c.bf16 %v768, %v767
        %v784 = vpack.c.bf16 %v770, %v769
        %v785 = vpack.c.bf16 %v772, %v771
        %v799 = vunpack.c.l.b16 %v773
        %v800 = vunpack.c.h.b16 %v773
        %v801 = vunpack.c.l.b16 %v774
        %v802 = vunpack.c.h.b16 %v774
        %v803 = vunpack.c.l.b16 %v775
        %v804 = vunpack.c.h.b16 %v775
        %v805 = vunpack.c.l.b16 %v776
        %v806 = vunpack.c.h.b16 %v776
        %v807 = vunpack.c.l.b16 %v777
        %v808 = vunpack.c.h.b16 %v777
        %v809 = vunpack.c.l.b16 %v778
        %v810 = vunpack.c.h.b16 %v778
        %v811 = vunpack.c.l.b16 %v779
        %v812 = vunpack.c.h.b16 %v779
        %v813 = vunpack.c.l.b16 %v780
        %v814 = vunpack.c.h.b16 %v780
        %v815 = vunpack.c.l.b16 %v781
        %v816 = vunpack.c.h.b16 %v781
        %v817 = vunpack.c.l.b16 %v782
        %v818 = vunpack.c.h.b16 %v782
        %v819 = vunpack.c.l.b16 %v783
        %v820 = vunpack.c.h.b16 %v783
        %v821 = vunpack.c.l.b16 %v784
        %v822 = vunpack.c.h.b16 %v784
        %v823 = vunpack.c.l.b16 %v785
        %v824 = vunpack.c.h.b16 %v785
        %v825 = vpack.c.b16 %v799, %v799
        %v826 = vpack.c.b16 %v800, %v800
        %v827 = vpack.c.b16 %v801, %v801
        %v828 = vpack.c.b16 %v802, %v802
        %v829 = vpack.c.b16 %v803, %v803
        %v830 = vpack.c.b16 %v804, %v804
        %v831 = vpack.c.b16 %v805, %v805
        %v832 = vpack.c.b16 %v806, %v806
        %v833 = vpack.c.b16 %v807, %v807
        %v834 = vpack.c.b16 %v808, %v808
        %v835 = vpack.c.b16 %v809, %v809
        %v836 = vpack.c.b16 %v810, %v810
        %v837 = vpack.c.b16 %v811, %v811
        %v838 = vpack.c.b16 %v812, %v812
        %v839 = vpack.c.b16 %v813, %v813
        %v840 = vpack.c.b16 %v814, %v814
        %v841 = vpack.c.b16 %v815, %v815
        %v842 = vpack.c.b16 %v816, %v816
        %v843 = vpack.c.b16 %v817, %v817
        %v844 = vpack.c.b16 %v818, %v818
        %v845 = vpack.c.b16 %v819, %v819
        %v846 = vpack.c.b16 %v820, %v820
        %v847 = vpack.c.b16 %v821, %v821
        %v848 = vpack.c.b16 %v822, %v822
        %v849 = vpack.c.b16 %v823, %v823
        %v850 = vpack.c.b16 %v824, %v824
        %877 = vst [vmem:[%s217] sm:$0xf] %v825
        %878 = vst [vmem:[%s217 + $0x4] sm:$0xf] %v826
        %879 = vst [vmem:[%s217 + $0x8] sm:$0xf] %v827
        %880 = vst [vmem:[%s217 + $0xc] sm:$0xf] %v828
        %881 = vst [vmem:[%s217 + $0x10] sm:$0xf] %v829
        %882 = vst [vmem:[%s217 + $0x14] sm:$0xf] %v830
        %883 = vst [vmem:[%s217 + $0x18] sm:$0xf] %v831
        %884 = vst [vmem:[%s217 + $0x1c] sm:$0xf] %v832
        %885 = vst [vmem:[%s217 + $0x20] sm:$0xf] %v833
        %886 = vst [vmem:[%s217 + $0x24] sm:$0xf] %v834
        %887 = vst [vmem:[%s217 + $0x28] sm:$0xf] %v835
        %888 = vst [vmem:[%s217 + $0x2c] sm:$0xf] %v836
        %889 = vst [vmem:[%s217 + $0x30] sm:$0xf] %v837
        %890 = vst [vmem:[%s217 + $0x34] sm:$0xf] %v838
        %891 = vst [vmem:[%s217 + $0x38] sm:$0xf] %v839
        %892 = vst [vmem:[%s217 + $0x3c] sm:$0xf] %v840
        %893 = vst [vmem:[%s217 + $0x40] sm:$0xf] %v841
        %894 = vst [vmem:[%s217 + $0x44] sm:$0xf] %v842
        %895 = vst [vmem:[%s217 + $0x48] sm:$0xf] %v843
        %896 = vst [vmem:[%s217 + $0x4c] sm:$0xf] %v844
        %897 = vst [vmem:[%s217 + $0x50] sm:$0xf] %v845
        %898 = vst [vmem:[%s217 + $0x54] sm:$0xf] %v846
        %899 = vst [vmem:[%s217 + $0x58] sm:$0xf] %v847
        %900 = vst [vmem:[%s217 + $0x5c] sm:$0xf] %v848
        %901 = vst [vmem:[%s217 + $0x60] sm:$0xf] %v849
        %902 = vst [vmem:[%s217 + $0x64] sm:$0xf] %v850
      $region40: #{discriminator_forward.5} parent=31 // pred_fallthru
        _
      %s903 = smul.u32 26, %s18
      %p904 = scmp.lt.s32.totalorder %s903, 51
      %s905 = scalar_select %p904, %s903, 51
      %s906 = smul.addr %s905, 4
      %s907 = scalar_lea.vmem %s3, %s906
      // Predicated region
      $region41: #{discriminator_forward.5} parent=31 // pred_check
        %p908 = pneg %p119
      $region42: #{discriminator_forward.5} parent=31 // pred_check_branch
        %910 = sbr.rel (%p908) target = $region44
      $region43: #{discriminator_forward.5} parent=31 // pred_region
        %s911 = smul.u32 26, %s18
      $region44: #{discriminator_forward.5} parent=31 // pred_fallthru
        _
    $region32: #{discriminator_forward.5} parent=5 // pred_fallthru
      _
    %p912 = scmp.le.s32.totalorder 2, %s9
    // Predicated region
    $region45: #{discriminator_forward.5} parent=5 // pred_check
      %p913 = pneg %p912
    $region46: #{discriminator_forward.5} parent=5 // pred_check_branch
      %915 = sbr.rel (%p913) target = $region48
    $region47: #{discriminator_forward.5} parent=5 // pred_region
      %s916 = ssub.s32 %s9, 2
      // Predicated region
      $region49: #{discriminator_forward.5} parent=47 // pred_check
        %p917 = pneg %p125
      $region50: #{discriminator_forward.5} parent=47 // pred_check_branch
        %919 = sbr.rel (%p917) target = $region52
      $region51: #{discriminator_forward.5} parent=47 // pred_region
        %s920 = smul.u32 26, %s20
        %p921 = scmp.lt.s32.totalorder %s920, 51
        %s922 = scalar_select %p921, %s920, 51
        %s923 = smul.addr %s922, 4
        %s924 = scalar_lea.vmem %s3, %s923
      $region52: #{discriminator_forward.5} parent=47 // pred_fallthru
        _
    $region48: #{discriminator_forward.5} parent=5 // pred_fallthru
      _
  $region6: #{discriminator_forward.5} parent=0 // loop_footer
    %s13 = sadd.s32 1, %s9
  $region7: #{discriminator_forward.5} parent=0 // loop_footer_branch
    %8 = sbr.rel target = $region3
  $region8: #{discriminator_forward.5} parent=0 // loop_exit
    _

// kernel: discriminator_forward.6
$region0: #{discriminator_forward.6}
  #allocation0 [shape = 'u32[]', space=smem, size = 0x4, offset = 0x4, fixed_abs, tag = 'smem constant byte address 0x4 - core index']
  #allocation1 [shape = 'u32[144,128]{1,0:T(1,128)}', space=vmem, size = 0x12000, scoped, tag = 'internal scratch']
  #allocation2 [shape = 'f32[128,128]{1,0:T(8,128)}', space=vmem, size = 0x10000, scoped, tag = 'scratch operand']
  %s0 = inlined_call_operand.vmem [shape: bf16[128,640], index: 0, kind: input, shape index: {}]
  %s1 = inlined_call_operand.vmem [shape: bf16[640,128], index: 1, kind: input, shape index: {}]
  %s2 = inlined_call_operand.vmem [shape: f32[1,128], index: 2, kind: input, shape index: {}]
  %s3 = inlined_call_operand.vmem [shape: bf16[128,128], index: 3, kind: output, shape index: {}]
  %s4 = sld [smem:[#allocation0]]
  $region30: #{discriminator_forward.6} parent=0
    _
  %s6 = ssub.s32 1, %s4
  %s7 = scalar_select 0, %s6, %s4
  // Predicated region
  $region2: #{discriminator_forward.6} parent=0 // pred_check
    _
  $region3: #{discriminator_forward.6} parent=0 // pred_check_branch
    %9 = sbr.rel (0) target = $region5
  $region4: #{discriminator_forward.6} parent=0 // pred_region
    _
  $region5: #{discriminator_forward.6} parent=0 // pred_fallthru
    _
  // Predicated region
  $region6: #{discriminator_forward.6} parent=0 // pred_check
    _
  $region7: #{discriminator_forward.6} parent=0 // pred_check_branch
    %11 = sbr.rel (0) target = $region9
  $region8: #{discriminator_forward.6} parent=0 // pred_region
    _
  $region9: #{discriminator_forward.6} parent=0 // pred_fallthru
    _
  // Predicated region
  $region10: #{discriminator_forward.6} parent=0 // pred_check
    _
  $region11: #{discriminator_forward.6} parent=0 // pred_check_branch
    %13 = sbr.rel (0) target = $region13
  $region12: #{discriminator_forward.6} parent=0 // pred_region
    _
  $region13: #{discriminator_forward.6} parent=0 // pred_fallthru
    _
  %p15 = scmp.eq.s32.totalorder 0, 0
  // Predicated region
  $region14: #{discriminator_forward.6} parent=0 // pred_check
    %p16 = pneg %p15
  $region15: #{discriminator_forward.6} parent=0 // pred_check_branch
    %18 = sbr.rel (%p16) target = $region17
  $region16: #{discriminator_forward.6} parent=0 // pred_region
    %19 = vst [vmem:[#allocation2] sm:$0xff] 0.0
    %20 = vst [vmem:[#allocation2 + $0x8] sm:$0xff] 0.0
    %21 = vst [vmem:[#allocation2 + $0x10] sm:$0xff] 0.0
    %22 = vst [vmem:[#allocation2 + $0x18] sm:$0xff] 0.0
    %23 = vst [vmem:[#allocation2 + $0x20] sm:$0xff] 0.0
    %24 = vst [vmem:[#allocation2 + $0x28] sm:$0xff] 0.0
    %25 = vst [vmem:[#allocation2 + $0x30] sm:$0xff] 0.0
    %26 = vst [vmem:[#allocation2 + $0x38] sm:$0xff] 0.0
    %27 = vst [vmem:[#allocation2 + $0x40] sm:$0xff] 0.0
    %28 = vst [vmem:[#allocation2 + $0x48] sm:$0xff] 0.0
    %29 = vst [vmem:[#allocation2 + $0x50] sm:$0xff] 0.0
    %30 = vst [vmem:[#allocation2 + $0x58] sm:$0xff] 0.0
    %31 = vst [vmem:[#allocation2 + $0x60] sm:$0xff] 0.0
    %32 = vst [vmem:[#allocation2 + $0x68] sm:$0xff] 0.0
    %33 = vst [vmem:[#allocation2 + $0x70] sm:$0xff] 0.0
    %34 = vst [vmem:[#allocation2 + $0x78] sm:$0xff] 0.0
  $region17: #{discriminator_forward.6} parent=0 // pred_fallthru
    _
  %v35 = vld [vmem:[#allocation2] sm:$0xff]
  %v36 = vld [vmem:[#allocation2 + $0x8] sm:$0xff]
  %v37 = vld [vmem:[#allocation2 + $0x10] sm:$0xff]
  %v38 = vld [vmem:[#allocation2 + $0x18] sm:$0xff]
  %v39 = vld [vmem:[#allocation2 + $0x20] sm:$0xff]
  %v40 = vld [vmem:[#allocation2 + $0x28] sm:$0xff]
  %v41 = vld [vmem:[#allocation2 + $0x30] sm:$0xff]
  %v42 = vld [vmem:[#allocation2 + $0x38] sm:$0xff]
  %v43 = vld [vmem:[#allocation2 + $0x40] sm:$0xff]
  %v44 = vld [vmem:[#allocation2 + $0x48] sm:$0xff]
  %v45 = vld [vmem:[#allocation2 + $0x50] sm:$0xff]
  %v46 = vld [vmem:[#allocation2 + $0x58] sm:$0xff]
  %v47 = vld [vmem:[#allocation2 + $0x60] sm:$0xff]
  %v48 = vld [vmem:[#allocation2 + $0x68] sm:$0xff]
  %v49 = vld [vmem:[#allocation2 + $0x70] sm:$0xff]
  %v50 = vld [vmem:[#allocation2 + $0x78] sm:$0xff]
  %v51 = vld [vmem:[%s0] sm:$0xff]
  %v52 = vld [vmem:[%s0 + $0x8] sm:$0xff]
  %v53 = vld [vmem:[%s0 + $0x10] sm:$0xf]
  %v54 = vld [vmem:[%s0 + $0x14] sm:$0xff]
  %v55 = vld [vmem:[%s0 + $0x1c] sm:$0xff]
  %v56 = vld [vmem:[%s0 + $0x24] sm:$0xf]
  %v57 = vld [vmem:[%s0 + $0x28] sm:$0xff]
  %v58 = vld [vmem:[%s0 + $0x30] sm:$0xff]
  %v59 = vld [vmem:[%s0 + $0x38] sm:$0xf]
  %v60 = vld [vmem:[%s0 + $0x3c] sm:$0xff]
  %v61 = vld [vmem:[%s0 + $0x44] sm:$0xff]
  %v62 = vld [vmem:[%s0 + $0x4c] sm:$0xf]
  %v63 = vld [vmem:[%s0 + $0x50] sm:$0xff]
  %v64 = vld [vmem:[%s0 + $0x58] sm:$0xff]
  %v65 = vld [vmem:[%s0 + $0x60] sm:$0xf]
  %v66 = vld [vmem:[%s0 + $0x64] sm:$0xff]
  %v67 = vld [vmem:[%s0 + $0x6c] sm:$0xff]
  %v68 = vld [vmem:[%s0 + $0x74] sm:$0xf]
  %v69 = vld [vmem:[%s0 + $0x78] sm:$0xff]
  %v70 = vld [vmem:[%s0 + $0x80] sm:$0xff]
  %v71 = vld [vmem:[%s0 + $0x88] sm:$0xf]
  %v72 = vld [vmem:[%s0 + $0x8c] sm:$0xff]
  %v73 = vld [vmem:[%s0 + $0x94] sm:$0xff]
  %v74 = vld [vmem:[%s0 + $0x9c] sm:$0xf]
  %v75 = vld [vmem:[%s0 + $0xa0] sm:$0xff]
  %v76 = vld [vmem:[%s0 + $0xa8] sm:$0xff]
  %v77 = vld [vmem:[%s0 + $0xb0] sm:$0xf]
  %v78 = vld [vmem:[%s0 + $0xb4] sm:$0xff]
  %v79 = vld [vmem:[%s0 + $0xbc] sm:$0xff]
  %v80 = vld [vmem:[%s0 + $0xc4] sm:$0xf]
  %v81 = vld [vmem:[%s0 + $0xc8] sm:$0xff]
  %v82 = vld [vmem:[%s0 + $0xd0] sm:$0xff]
  %v83 = vld [vmem:[%s0 + $0xd8] sm:$0xf]
  %v84 = vld [vmem:[%s0 + $0xdc] sm:$0xff]
  %v85 = vld [vmem:[%s0 + $0xe4] sm:$0xff]
  %v86 = vld [vmem:[%s0 + $0xec] sm:$0xf]
  %v87 = vld [vmem:[%s0 + $0xf0] sm:$0xff]
  %v88 = vld [vmem:[%s0 + $0xf8] sm:$0xff]
  %v89 = vld [vmem:[%s0 + $0x100] sm:$0xf]
  %v90 = vld [vmem:[%s0 + $0x104] sm:$0xff]
  %v91 = vld [vmem:[%s0 + $0x10c] sm:$0xff]
  %v92 = vld [vmem:[%s0 + $0x114] sm:$0xf]
  %v93 = vld [vmem:[%s0 + $0x118] sm:$0xff]
  %v94 = vld [vmem:[%s0 + $0x120] sm:$0xff]
  %v95 = vld [vmem:[%s0 + $0x128] sm:$0xf]
  %v96 = vld [vmem:[%s0 + $0x12c] sm:$0xff]
  %v97 = vld [vmem:[%s0 + $0x134] sm:$0xff]
  %v98 = vld [vmem:[%s0 + $0x13c] sm:$0xf]
  %v99 = vld [vmem:[%s1] sm:$0xf]
  %v100 = vld [vmem:[%s1 + $0x4] sm:$0xf]
  %v101 = vld [vmem:[%s1 + $0x8] sm:$0xf]
  %v102 = vld [vmem:[%s1 + $0xc] sm:$0xf]
  %v103 = vld [vmem:[%s1 + $0x10] sm:$0xf]
  %v104 = vld [vmem:[%s1 + $0x14] sm:$0xf]
  %v105 = vld [vmem:[%s1 + $0x18] sm:$0xf]
  %v106 = vld [vmem:[%s1 + $0x1c] sm:$0xf]
  %v107 = vld [vmem:[%s1 + $0x20] sm:$0xf]
  %v108 = vld [vmem:[%s1 + $0x24] sm:$0xf]
  %v109 = vld [vmem:[%s1 + $0x28] sm:$0xf]
  %v110 = vld [vmem:[%s1 + $0x2c] sm:$0xf]
  %v111 = vld [vmem:[%s1 + $0x30] sm:$0xf]
  %v112 = vld [vmem:[%s1 + $0x34] sm:$0xf]
  %v113 = vld [vmem:[%s1 + $0x38] sm:$0xf]
  %v114 = vld [vmem:[%s1 + $0x3c] sm:$0xf]
  %v115 = vld [vmem:[%s1 + $0x40] sm:$0xf]
  %v116 = vld [vmem:[%s1 + $0x44] sm:$0xf]
  %v117 = vld [vmem:[%s1 + $0x48] sm:$0xf]
  %v118 = vld [vmem:[%s1 + $0x4c] sm:$0xf]
  %v119 = vld [vmem:[%s1 + $0x50] sm:$0xf]
  %v120 = vld [vmem:[%s1 + $0x54] sm:$0xf]
  %v121 = vld [vmem:[%s1 + $0x58] sm:$0xf]
  %v122 = vld [vmem:[%s1 + $0x5c] sm:$0xf]
  %v123 = vld [vmem:[%s1 + $0x60] sm:$0xf]
  %v124 = vld [vmem:[%s1 + $0x64] sm:$0xf]
  %v125 = vld [vmem:[%s1 + $0x68] sm:$0xf]
  %v126 = vld [vmem:[%s1 + $0x6c] sm:$0xf]
  %v127 = vld [vmem:[%s1 + $0x70] sm:$0xf]
  %v128 = vld [vmem:[%s1 + $0x74] sm:$0xf]
  %v129 = vld [vmem:[%s1 + $0x78] sm:$0xf]
  %v130 = vld [vmem:[%s1 + $0x7c] sm:$0xf]
  %v131 = vld [vmem:[%s1 + $0x80] sm:$0xf]
  %v132 = vld [vmem:[%s1 + $0x84] sm:$0xf]
  %v133 = vld [vmem:[%s1 + $0x88] sm:$0xf]
  %v134 = vld [vmem:[%s1 + $0x8c] sm:$0xf]
  %v135 = vld [vmem:[%s1 + $0x90] sm:$0xf]
  %v136 = vld [vmem:[%s1 + $0x94] sm:$0xf]
  %v137 = vld [vmem:[%s1 + $0x98] sm:$0xf]
  %v138 = vld [vmem:[%s1 + $0x9c] sm:$0xf]
  %v139 = vld [vmem:[%s1 + $0xa0] sm:$0xf]
  %v140 = vld [vmem:[%s1 + $0xa4] sm:$0xf]
  %v141 = vld [vmem:[%s1 + $0xa8] sm:$0xf]
  %v142 = vld [vmem:[%s1 + $0xac] sm:$0xf]
  %v143 = vld [vmem:[%s1 + $0xb0] sm:$0xf]
  %v144 = vld [vmem:[%s1 + $0xb4] sm:$0xf]
  %v145 = vld [vmem:[%s1 + $0xb8] sm:$0xf]
  %v146 = vld [vmem:[%s1 + $0xbc] sm:$0xf]
  %v147 = vld [vmem:[%s1 + $0xc0] sm:$0xf]
  %v148 = vld [vmem:[%s1 + $0xc4] sm:$0xf]
  %v149 = vld [vmem:[%s1 + $0xc8] sm:$0xf]
  %v150 = vld [vmem:[%s1 + $0xcc] sm:$0xf]
  %v151 = vld [vmem:[%s1 + $0xd0] sm:$0xf]
  %v152 = vld [vmem:[%s1 + $0xd4] sm:$0xf]
  %v153 = vld [vmem:[%s1 + $0xd8] sm:$0xf]
  %v154 = vld [vmem:[%s1 + $0xdc] sm:$0xf]
  %v155 = vld [vmem:[%s1 + $0xe0] sm:$0xf]
  %v156 = vld [vmem:[%s1 + $0xe4] sm:$0xf]
  %v157 = vld [vmem:[%s1 + $0xe8] sm:$0xf]
  %v158 = vld [vmem:[%s1 + $0xec] sm:$0xf]
  %v159 = vld [vmem:[%s1 + $0xf0] sm:$0xf]
  %v160 = vld [vmem:[%s1 + $0xf4] sm:$0xf]
  %v161 = vld [vmem:[%s1 + $0xf8] sm:$0xf]
  %v162 = vld [vmem:[%s1 + $0xfc] sm:$0xf]
  %v163 = vld [vmem:[%s1 + $0x100] sm:$0xf]
  %v164 = vld [vmem:[%s1 + $0x104] sm:$0xf]
  %v165 = vld [vmem:[%s1 + $0x108] sm:$0xf]
  %v166 = vld [vmem:[%s1 + $0x10c] sm:$0xf]
  %v167 = vld [vmem:[%s1 + $0x110] sm:$0xf]
  %v168 = vld [vmem:[%s1 + $0x114] sm:$0xf]
  %v169 = vld [vmem:[%s1 + $0x118] sm:$0xf]
  %v170 = vld [vmem:[%s1 + $0x11c] sm:$0xf]
  %v171 = vld [vmem:[%s1 + $0x120] sm:$0xf]
  %v172 = vld [vmem:[%s1 + $0x124] sm:$0xf]
  %v173 = vld [vmem:[%s1 + $0x128] sm:$0xf]
  %v174 = vld [vmem:[%s1 + $0x12c] sm:$0xf]
  %v175 = vld [vmem:[%s1 + $0x130] sm:$0xf]
  %v176 = vld [vmem:[%s1 + $0x134] sm:$0xf]
  %v177 = vld [vmem:[%s1 + $0x138] sm:$0xf]
  %v178 = vld [vmem:[%s1 + $0x13c] sm:$0xf]
  %v227 = vunpack.c.l.b16 %v51
  %v228 = vunpack.c.h.b16 %v51
  %v229 = vunpack.c.l.b16 %v52
  %v230 = vunpack.c.h.b16 %v52
  %v231 = vunpack.c.l.b16 %v53
  %v232 = vunpack.c.l.b16 %v54
  %v233 = vunpack.c.h.b16 %v54
  %v234 = vunpack.c.l.b16 %v55
  %v235 = vunpack.c.h.b16 %v55
  %v236 = vunpack.c.l.b16 %v56
  %v237 = vunpack.c.l.b16 %v57
  %v238 = vunpack.c.h.b16 %v57
  %v239 = vunpack.c.l.b16 %v58
  %v240 = vunpack.c.h.b16 %v58
  %v241 = vunpack.c.l.b16 %v59
  %v242 = vunpack.c.l.b16 %v60
  %v243 = vunpack.c.h.b16 %v60
  %v244 = vunpack.c.l.b16 %v61
  %v245 = vunpack.c.h.b16 %v61
  %v246 = vunpack.c.l.b16 %v62
  %v247 = vunpack.c.l.b16 %v63
  %v248 = vunpack.c.h.b16 %v63
  %v249 = vunpack.c.l.b16 %v64
  %v250 = vunpack.c.h.b16 %v64
  %v251 = vunpack.c.l.b16 %v65
  %v252 = vunpack.c.l.b16 %v66
  %v253 = vunpack.c.h.b16 %v66
  %v254 = vunpack.c.l.b16 %v67
  %v255 = vunpack.c.h.b16 %v67
  %v256 = vunpack.c.l.b16 %v68
  %v257 = vunpack.c.l.b16 %v69
  %v258 = vunpack.c.h.b16 %v69
  %v259 = vunpack.c.l.b16 %v70
  %v260 = vunpack.c.h.b16 %v70
  %v261 = vunpack.c.l.b16 %v71
  %v262 = vunpack.c.l.b16 %v72
  %v263 = vunpack.c.h.b16 %v72
  %v264 = vunpack.c.l.b16 %v73
  %v265 = vunpack.c.h.b16 %v73
  %v266 = vunpack.c.l.b16 %v74
  %v267 = vunpack.c.l.b16 %v75
  %v268 = vunpack.c.h.b16 %v75
  %v269 = vunpack.c.l.b16 %v76
  %v270 = vunpack.c.h.b16 %v76
  %v271 = vunpack.c.l.b16 %v77
  %v272 = vunpack.c.l.b16 %v78
  %v273 = vunpack.c.h.b16 %v78
  %v274 = vunpack.c.l.b16 %v79
  %v275 = vunpack.c.h.b16 %v79
  %v276 = vunpack.c.l.b16 %v80
  %v277 = vunpack.c.l.b16 %v81
  %v278 = vunpack.c.h.b16 %v81
  %v279 = vunpack.c.l.b16 %v82
  %v280 = vunpack.c.h.b16 %v82
  %v281 = vunpack.c.l.b16 %v83
  %v282 = vunpack.c.l.b16 %v84
  %v283 = vunpack.c.h.b16 %v84
  %v284 = vunpack.c.l.b16 %v85
  %v285 = vunpack.c.h.b16 %v85
  %v286 = vunpack.c.l.b16 %v86
  %v287 = vunpack.c.l.b16 %v87
  %v288 = vunpack.c.h.b16 %v87
  %v289 = vunpack.c.l.b16 %v88
  %v290 = vunpack.c.h.b16 %v88
  %v291 = vunpack.c.l.b16 %v89
  %v292 = vunpack.c.l.b16 %v90
  %v293 = vunpack.c.h.b16 %v90
  %v294 = vunpack.c.l.b16 %v91
  %v295 = vunpack.c.h.b16 %v91
  %v296 = vunpack.c.l.b16 %v92
  %v297 = vunpack.c.l.b16 %v93
  %v298 = vunpack.c.h.b16 %v93
  %v299 = vunpack.c.l.b16 %v94
  %v300 = vunpack.c.h.b16 %v94
  %v301 = vunpack.c.l.b16 %v95
  %v302 = vunpack.c.l.b16 %v96
  %v303 = vunpack.c.h.b16 %v96
  %v304 = vunpack.c.l.b16 %v97
  %v305 = vunpack.c.h.b16 %v97
  %v306 = vunpack.c.l.b16 %v98
  %v307 = vpack.c.b16 %v232, %v227
  %v308 = vpack.c.b16 %v233, %v228
  %v309 = vpack.c.b16 %v234, %v229
  %v310 = vpack.c.b16 %v235, %v230
  %v311 = vpack.c.b16 %v236, %v231
  %v312 = vpack.c.b16 %v242, %v237
  %v313 = vpack.c.b16 %v243, %v238
  %v314 = vpack.c.b16 %v244, %v239
  %v315 = vpack.c.b16 %v245, %v240
  %v316 = vpack.c.b16 %v246, %v241
  %v317 = vpack.c.b16 %v252, %v247
  %v318 = vpack.c.b16 %v253, %v248
  %v319 = vpack.c.b16 %v254, %v249
  %v320 = vpack.c.b16 %v255, %v250
  %v321 = vpack.c.b16 %v256, %v251
  %v322 = vpack.c.b16 %v262, %v257
  %v323 = vpack.c.b16 %v263, %v258
  %v324 = vpack.c.b16 %v264, %v259
  %v325 = vpack.c.b16 %v265, %v260
  %v326 = vpack.c.b16 %v266, %v261
  %v327 = vpack.c.b16 %v272, %v267
  %v328 = vpack.c.b16 %v273, %v268
  %v329 = vpack.c.b16 %v274, %v269
  %v330 = vpack.c.b16 %v275, %v270
  %v331 = vpack.c.b16 %v276, %v271
  %v332 = vpack.c.b16 %v282, %v277
  %v333 = vpack.c.b16 %v283, %v278
  %v334 = vpack.c.b16 %v284, %v279
  %v335 = vpack.c.b16 %v285, %v280
  %v336 = vpack.c.b16 %v286, %v281
  %v337 = vpack.c.b16 %v292, %v287
  %v338 = vpack.c.b16 %v293, %v288
  %v339 = vpack.c.b16 %v294, %v289
  %v340 = vpack.c.b16 %v295, %v290
  %v341 = vpack.c.b16 %v296, %v291
  %v342 = vpack.c.b16 %v302, %v297
  %v343 = vpack.c.b16 %v303, %v298
  %v344 = vpack.c.b16 %v304, %v299
  %v345 = vpack.c.b16 %v305, %v300
  %v346 = vpack.c.b16 %v306, %v301
  %v467 = vunpack.c.l.b16 %v99
  %v468 = vunpack.c.l.b16 %v100
  %v469 = vunpack.c.l.b16 %v101
  %v470 = vunpack.c.l.b16 %v102
  %v471 = vunpack.c.l.b16 %v103
  %v472 = vunpack.c.l.b16 %v104
  %v473 = vunpack.c.l.b16 %v105
  %v474 = vunpack.c.l.b16 %v106
  %v475 = vunpack.c.l.b16 %v107
  %v476 = vunpack.c.l.b16 %v108
  %v477 = vunpack.c.l.b16 %v109
  %v478 = vunpack.c.l.b16 %v110
  %v479 = vunpack.c.l.b16 %v111
  %v480 = vunpack.c.l.b16 %v112
  %v481 = vunpack.c.l.b16 %v113
  %v482 = vunpack.c.l.b16 %v114
  %v483 = vunpack.c.l.b16 %v115
  %v484 = vunpack.c.l.b16 %v116
  %v485 = vunpack.c.l.b16 %v117
  %v486 = vunpack.c.l.b16 %v118
  %v487 = vunpack.c.l.b16 %v119
  %v488 = vunpack.c.l.b16 %v120
  %v489 = vunpack.c.l.b16 %v121
  %v490 = vunpack.c.l.b16 %v122
  %v491 = vunpack.c.l.b16 %v123
  %v492 = vunpack.c.l.b16 %v124
  %v493 = vunpack.c.l.b16 %v125
  %v494 = vunpack.c.l.b16 %v126
  %v495 = vunpack.c.l.b16 %v127
  %v496 = vunpack.c.l.b16 %v128
  %v497 = vunpack.c.l.b16 %v129
  %v498 = vunpack.c.l.b16 %v130
  %v499 = vunpack.c.l.b16 %v131
  %v500 = vunpack.c.l.b16 %v132
  %v501 = vunpack.c.l.b16 %v133
  %v502 = vunpack.c.l.b16 %v134
  %v503 = vunpack.c.l.b16 %v135
  %v504 = vunpack.c.l.b16 %v136
  %v505 = vunpack.c.l.b16 %v137
  %v506 = vunpack.c.l.b16 %v138
  %v507 = vunpack.c.l.b16 %v139
  %v508 = vunpack.c.l.b16 %v140
  %v509 = vunpack.c.l.b16 %v141
  %v510 = vunpack.c.l.b16 %v142
  %v511 = vunpack.c.l.b16 %v143
  %v512 = vunpack.c.l.b16 %v144
  %v513 = vunpack.c.l.b16 %v145
  %v514 = vunpack.c.l.b16 %v146
  %v515 = vunpack.c.l.b16 %v147
  %v516 = vunpack.c.l.b16 %v148
  %v517 = vunpack.c.l.b16 %v149
  %v518 = vunpack.c.l.b16 %v150
  %v519 = vunpack.c.l.b16 %v151
  %v520 = vunpack.c.l.b16 %v152
  %v521 = vunpack.c.l.b16 %v153
  %v522 = vunpack.c.l.b16 %v154
  %v523 = vunpack.c.l.b16 %v155
  %v524 = vunpack.c.l.b16 %v156
  %v525 = vunpack.c.l.b16 %v157
  %v526 = vunpack.c.l.b16 %v158
  %v527 = vunpack.c.l.b16 %v159
  %v528 = vunpack.c.l.b16 %v160
  %v529 = vunpack.c.l.b16 %v161
  %v530 = vunpack.c.l.b16 %v162
  %v531 = vunpack.c.l.b16 %v163
  %v532 = vunpack.c.l.b16 %v164
  %v533 = vunpack.c.l.b16 %v165
  %v534 = vunpack.c.l.b16 %v166
  %v535 = vunpack.c.l.b16 %v167
  %v536 = vunpack.c.l.b16 %v168
  %v537 = vunpack.c.l.b16 %v169
  %v538 = vunpack.c.l.b16 %v170
  %v539 = vunpack.c.l.b16 %v171
  %v540 = vunpack.c.l.b16 %v172
  %v541 = vunpack.c.l.b16 %v173
  %v542 = vunpack.c.l.b16 %v174
  %v543 = vunpack.c.l.b16 %v175
  %v544 = vunpack.c.l.b16 %v176
  %v545 = vunpack.c.l.b16 %v177
  %v546 = vunpack.c.l.b16 %v178
  %v547 = vpack.c.b16 %v468, %v467
  %v548 = vpack.c.b16 %v470, %v469
  %v549 = vpack.c.b16 %v472, %v471
  %v550 = vpack.c.b16 %v474, %v473
  %v551 = vpack.c.b16 %v476, %v475
  %v552 = vpack.c.b16 %v478, %v477
  %v553 = vpack.c.b16 %v480, %v479
  %v554 = vpack.c.b16 %v482, %v481
  %v555 = vpack.c.b16 %v484, %v483
  %v556 = vpack.c.b16 %v486, %v485
  %v557 = vpack.c.b16 %v488, %v487
  %v558 = vpack.c.b16 %v490, %v489
  %v559 = vpack.c.b16 %v492, %v491
  %v560 = vpack.c.b16 %v494, %v493
  %v561 = vpack.c.b16 %v496, %v495
  %v562 = vpack.c.b16 %v498, %v497
  %v563 = vpack.c.b16 %v500, %v499
  %v564 = vpack.c.b16 %v502, %v501
  %v565 = vpack.c.b16 %v504, %v503
  %v566 = vpack.c.b16 %v506, %v505
  %v567 = vpack.c.b16 %v508, %v507
  %v568 = vpack.c.b16 %v510, %v509
  %v569 = vpack.c.b16 %v512, %v511
  %v570 = vpack.c.b16 %v514, %v513
  %v571 = vpack.c.b16 %v516, %v515
  %v572 = vpack.c.b16 %v518, %v517
  %v573 = vpack.c.b16 %v520, %v519
  %v574 = vpack.c.b16 %v522, %v521
  %v575 = vpack.c.b16 %v524, %v523
  %v576 = vpack.c.b16 %v526, %v525
  %v577 = vpack.c.b16 %v528, %v527
  %v578 = vpack.c.b16 %v530, %v529
  %v579 = vpack.c.b16 %v532, %v531
  %v580 = vpack.c.b16 %v534, %v533
  %v581 = vpack.c.b16 %v536, %v535
  %v582 = vpack.c.b16 %v538, %v537
  %v583 = vpack.c.b16 %v540, %v539
  %v584 = vpack.c.b16 %v542, %v541
  %v585 = vpack.c.b16 %v544, %v543
  %v586 = vpack.c.b16 %v546, %v545
  %627 = vmatprep.subr.bf16.mxu0 0
  %628 = vmatpush1.bf16.msra.mxu0 %v547
  %629 = vmatprep.subr.bf16.mxu0 0
  %630 = vmatpush1.bf16.msra.mxu0 %v548
  %631 = vmatprep.subr.bf16.mxu0 0
  %632 = vmatpush1.bf16.msra.mxu0 %v549
  %633 = vmatprep.subr.bf16.mxu0 0
  %634 = vmatpush1.bf16.msra.mxu0 %v550
  %635 = vmatprep.subr.bf16.mxu0 0
  %636 = vmatpush1.bf16.msra.mxu0 %v551
  %637 = vmatprep.subr.bf16.mxu0 0
  %638 = vmatpush1.bf16.msra.mxu0 %v552
  %639 = vmatprep.subr.bf16.mxu0 0
  %640 = vmatpush1.bf16.msra.mxu0 %v553
  %641 = vmatprep.subr.bf16.mxu0 0
  %642 = vmatpush1.bf16.msra.mxu0 %v554
  %643 = vmatprep.subr.bf16.mxu0 0
  %644 = vmatpush1.bf16.msra.mxu0 %v555
  %645 = vmatprep.subr.bf16.mxu0 0
  %646 = vmatpush1.bf16.msra.mxu0 %v556
  %647 = vmatprep.subr.bf16.mxu0 0
  %648 = vmatpush1.bf16.msra.mxu0 %v557
  %649 = vmatprep.subr.bf16.mxu0 0
  %650 = vmatpush1.bf16.msra.mxu0 %v558
  %651 = vmatprep.subr.bf16.mxu0 0
  %652 = vmatpush1.bf16.msra.mxu0 %v559
  %653 = vmatprep.subr.bf16.mxu0 0
  %654 = vmatpush1.bf16.msra.mxu0 %v560
  %655 = vmatprep.subr.bf16.mxu0 0
  %656 = vmatpush1.bf16.msra.mxu0 %v561
  %657 = vmatprep.subr.bf16.mxu0 0
  %658 = vmatpush1.bf16.msra.mxu0 %v562
  %659 = vmatprep.mubr.bf16.mxu0 %v308
  %660 = vmatmul.mubr.bf16.gmra.mrb[0].mxu0 %v307
  %v661 = vpop.f32.mrb[0].mxu0
  %v662 = vadd.f32 0.0, %v661
  %v663 = vpop.f32.mrb[0].mxu0
  %v664 = vpop.f32.mrb[0].mxu0
  %v665 = vadd.f32 0.0, %v664
  %v666 = vpop.f32.mrb[0].mxu0
  %667 = vmatprep.mubr.bf16.mxu0 %v313
  %668 = vmatmul.mubr.bf16.gmra.mrb[0].mxu0 %v312
  %v669 = vpop.f32.mrb[0].mxu0
  %v670 = vadd.f32 0.0, %v669
  %v671 = vpop.f32.mrb[0].mxu0
  %v672 = vpop.f32.mrb[0].mxu0
  %v673 = vadd.f32 0.0, %v672
  %v674 = vpop.f32.mrb[0].mxu0
  %675 = vmatprep.mubr.bf16.mxu0 %v318
  %676 = vmatmul.mubr.bf16.gmra.mrb[0].mxu0 %v317
  %v677 = vpop.f32.mrb[0].mxu0
  %v678 = vadd.f32 0.0, %v677
  %v679 = vpop.f32.mrb[0].mxu0
  %v680 = vpop.f32.mrb[0].mxu0
  %v681 = vadd.f32 0.0, %v680
  %v682 = vpop.f32.mrb[0].mxu0
  %683 = vmatprep.mubr.bf16.mxu0 %v323
  %684 = vmatmul.mubr.bf16.gmra.mrb[0].mxu0 %v322
  %v685 = vpop.f32.mrb[0].mxu0
  %v686 = vadd.f32 0.0, %v685
  %v687 = vpop.f32.mrb[0].mxu0
  %v688 = vpop.f32.mrb[0].mxu0
  %v689 = vadd.f32 0.0, %v688
  %v690 = vpop.f32.mrb[0].mxu0
  %691 = vmatprep.mubr.bf16.mxu0 %v328
  %692 = vmatmul.mubr.bf16.gmra.mrb[0].mxu0 %v327
  %v693 = vpop.f32.mrb[0].mxu0
  %v694 = vadd.f32 0.0, %v693
  %v695 = vpop.f32.mrb[0].mxu0
  %v696 = vpop.f32.mrb[0].mxu0
  %v697 = vadd.f32 0.0, %v696
  %v698 = vpop.f32.mrb[0].mxu0
  %699 = vmatprep.mubr.bf16.mxu0 %v333
  %700 = vmatmul.mubr.bf16.gmra.mrb[0].mxu0 %v332
  %v701 = vpop.f32.mrb[0].mxu0
  %v702 = vadd.f32 0.0, %v701
  %v703 = vpop.f32.mrb[0].mxu0
  %v704 = vpop.f32.mrb[0].mxu0
  %v705 = vadd.f32 0.0, %v704
  %v706 = vpop.f32.mrb[0].mxu0
  %707 = vmatprep.mubr.bf16.mxu0 %v338
  %708 = vmatmul.mubr.bf16.gmra.mrb[0].mxu0 %v337
  %v709 = vpop.f32.mrb[0].mxu0
  %v710 = vadd.f32 0.0, %v709
  %v711 = vpop.f32.mrb[0].mxu0
  %v712 = vpop.f32.mrb[0].mxu0
  %v713 = vadd.f32 0.0, %v712
  %v714 = vpop.f32.mrb[0].mxu0
  %715 = vmatprep.mubr.bf16.mxu0 %v343
  %716 = vmatmul.mubr.bf16.gmra.mrb[0].mxu0 %v342
  %v717 = vpop.f32.mrb[0].mxu0
  %v718 = vadd.f32 0.0, %v717
  %v719 = vpop.f32.mrb[0].mxu0
  %v720 = vpop.f32.mrb[0].mxu0
  %v721 = vadd.f32 0.0, %v720
  %v722 = vpop.f32.mrb[0].mxu0
  %723 = vdwg.mxu0
  %724 = vmatprep.subr.bf16.mxu0 0
  %725 = vmatpush1.bf16.msra.mxu0 %v563
  %726 = vmatprep.subr.bf16.mxu0 0
  %727 = vmatpush1.bf16.msra.mxu0 %v564
  %728 = vmatprep.subr.bf16.mxu0 0
  %729 = vmatpush1.bf16.msra.mxu0 %v565
  %730 = vmatprep.subr.bf16.mxu0 0
  %731 = vmatpush1.bf16.msra.mxu0 %v566
  %732 = vmatprep.subr.bf16.mxu0 0
  %733 = vmatpush1.bf16.msra.mxu0 %v567
  %734 = vmatprep.subr.bf16.mxu0 0
  %735 = vmatpush1.bf16.msra.mxu0 %v568
  %736 = vmatprep.subr.bf16.mxu0 0
  %737 = vmatpush1.bf16.msra.mxu0 %v569
  %738 = vmatprep.subr.bf16.mxu0 0
  %739 = vmatpush1.bf16.msra.mxu0 %v570
  %740 = vmatprep.subr.bf16.mxu0 0
  %741 = vmatpush1.bf16.msra.mxu0 %v571
  %742 = vmatprep.subr.bf16.mxu0 0
  %743 = vmatpush1.bf16.msra.mxu0 %v572
  %744 = vmatprep.subr.bf16.mxu0 0
  %745 = vmatpush1.bf16.msra.mxu0 %v573
  %746 = vmatprep.subr.bf16.mxu0 0
  %747 = vmatpush1.bf16.msra.mxu0 %v574
  %748 = vmatprep.subr.bf16.mxu0 0
  %749 = vmatpush1.bf16.msra.mxu0 %v575
  %750 = vmatprep.subr.bf16.mxu0 0
  %751 = vmatpush1.bf16.msra.mxu0 %v576
  %752 = vmatprep.subr.bf16.mxu0 0
  %753 = vmatpush1.bf16.msra.mxu0 %v577
  %754 = vmatprep.subr.bf16.mxu0 0
  %755 = vmatpush1.bf16.msra.mxu0 %v578
  %756 = vmatprep.mubr.bf16.mxu0 %v310
  %757 = vmatmul.mubr.bf16.gmra.mrb[0].mxu0 %v309
  %v758 = vpop.f32.mrb[0].mxu0
  %v759 = vadd.f32 %v662, %v758
  %v760 = vpop.f32.mrb[0].mxu0
  %v761 = vpop.f32.mrb[0].mxu0
  %v762 = vadd.f32 %v665, %v761
  %v763 = vpop.f32.mrb[0].mxu0
  %764 = vmatprep.mubr.bf16.mxu0 %v315
  %765 = vmatmul.mubr.bf16.gmra.mrb[0].mxu0 %v314
  %v766 = vpop.f32.mrb[0].mxu0
  %v767 = vadd.f32 %v670, %v766
  %v768 = vpop.f32.mrb[0].mxu0
  %v769 = vpop.f32.mrb[0].mxu0
  %v770 = vadd.f32 %v673, %v769
  %v771 = vpop.f32.mrb[0].mxu0
  %772 = vmatprep.mubr.bf16.mxu0 %v320
  %773 = vmatmul.mubr.bf16.gmra.mrb[0].mxu0 %v319
  %v774 = vpop.f32.mrb[0].mxu0
  %v775 = vadd.f32 %v678, %v774
  %v776 = vpop.f32.mrb[0].mxu0
  %v777 = vpop.f32.mrb[0].mxu0
  %v778 = vadd.f32 %v681, %v777
  %v779 = vpop.f32.mrb[0].mxu0
  %780 = vmatprep.mubr.bf16.mxu0 %v325
  %781 = vmatmul.mubr.bf16.gmra.mrb[0].mxu0 %v324
  %v782 = vpop.f32.mrb[0].mxu0
  %v783 = vadd.f32 %v686, %v782
  %v784 = vpop.f32.mrb[0].mxu0
  %v785 = vpop.f32.mrb[0].mxu0
  %v786 = vadd.f32 %v689, %v785
  %v787 = vpop.f32.mrb[0].mxu0
  %788 = vmatprep.mubr.bf16.mxu0 %v330
  %789 = vmatmul.mubr.bf16.gmra.mrb[0].mxu0 %v329
  %v790 = vpop.f32.mrb[0].mxu0
  %v791 = vadd.f32 %v694, %v790
  %v792 = vpop.f32.mrb[0].mxu0
  %v793 = vpop.f32.mrb[0].mxu0
  %v794 = vadd.f32 %v697, %v793
  %v795 = vpop.f32.mrb[0].mxu0
  %796 = vmatprep.mubr.bf16.mxu0 %v335
  %797 = vmatmul.mubr.bf16.gmra.mrb[0].mxu0 %v334
  %v798 = vpop.f32.mrb[0].mxu0
  %v799 = vadd.f32 %v702, %v798
  %v800 = vpop.f32.mrb[0].mxu0
  %v801 = vpop.f32.mrb[0].mxu0
  %v802 = vadd.f32 %v705, %v801
  %v803 = vpop.f32.mrb[0].mxu0
  %804 = vmatprep.mubr.bf16.mxu0 %v340
  %805 = vmatmul.mubr.bf16.gmra.mrb[0].mxu0 %v339
  %v806 = vpop.f32.mrb[0].mxu0
  %v807 = vadd.f32 %v710, %v806
  %v808 = vpop.f32.mrb[0].mxu0
  %v809 = vpop.f32.mrb[0].mxu0
  %v810 = vadd.f32 %v713, %v809
  %v811 = vpop.f32.mrb[0].mxu0
  %812 = vmatprep.mubr.bf16.mxu0 %v345
  %813 = vmatmul.mubr.bf16.gmra.mrb[0].mxu0 %v344
  %v814 = vpop.f32.mrb[0].mxu0
  %v815 = vadd.f32 %v718, %v814
  %v816 = vpop.f32.mrb[0].mxu0
  %v817 = vpop.f32.mrb[0].mxu0
  %v818 = vadd.f32 %v721, %v817
  %v819 = vpop.f32.mrb[0].mxu0
  %820 = vdwg.mxu0
  %821 = vmatprep.subr.bf16.mxu0 0
  %822 = vmatpush1.bf16.msra.mxu0 %v579
  %823 = vmatprep.subr.bf16.mxu0 0
  %824 = vmatpush1.bf16.msra.mxu0 %v580
  %825 = vmatprep.subr.bf16.mxu0 0
  %826 = vmatpush1.bf16.msra.mxu0 %v581
  %827 = vmatprep.subr.bf16.mxu0 0
  %828 = vmatpush1.bf16.msra.mxu0 %v582
  %829 = vmatprep.subr.bf16.mxu0 0
  %830 = vmatpush1.bf16.msra.mxu0 %v583
  %831 = vmatprep.subr.bf16.mxu0 0
  %832 = vmatpush1.bf16.msra.mxu0 %v584
  %833 = vmatprep.subr.bf16.mxu0 0
  %834 = vmatpush1.bf16.msra.mxu0 %v585
  %835 = vmatprep.subr.bf16.mxu0 0
  %836 = vmatpush1.bf16.msra.mxu0 %v586
  %837 = vmatprep.subr.bf16.mxu0 0
  %838 = vmatpush1.bf16.msra.mxu0 0
  %839 = vmatprep.subr.bf16.mxu0 0
  %840 = vmatpush1.bf16.msra.mxu0 0
  %841 = vmatprep.subr.bf16.mxu0 0
  %842 = vmatpush1.bf16.msra.mxu0 0
  %843 = vmatprep.subr.bf16.mxu0 0
  %844 = vmatpush1.bf16.msra.mxu0 0
  %845 = vmatprep.subr.bf16.mxu0 0
  %846 = vmatpush1.bf16.msra.mxu0 0
  %847 = vmatprep.subr.bf16.mxu0 0
  %848 = vmatpush1.bf16.msra.mxu0 0
  %849 = vmatprep.subr.bf16.mxu0 0
  %850 = vmatpush1.bf16.msra.mxu0 0
  %851 = vmatprep.subr.bf16.mxu0 0
  %852 = vmatpush1.bf16.msra.mxu0 0
  %853 = vmatprep.mubr.bf16.mxu0 0
  %854 = vmatmul.mubr.bf16.gmra.mrb[0].mxu0 %v311
  %v855 = vpop.f32.mrb[0].mxu0
  %v856 = vadd.f32 %v759, %v855
  %v857 = vpop.f32.mrb[0].mxu0
  %v858 = vpop.f32.mrb[0].mxu0
  %v859 = vadd.f32 %v762, %v858
  %v860 = vpop.f32.mrb[0].mxu0
  %861 = vmatprep.mubr.bf16.mxu0 0
  %862 = vmatmul.mubr.bf16.gmra.mrb[0].mxu0 %v316
  %v863 = vpop.f32.mrb[0].mxu0
  %v864 = vadd.f32 %v767, %v863
  %v865 = vpop.f32.mrb[0].mxu0
  %v866 = vpop.f32.mrb[0].mxu0
  %v867 = vadd.f32 %v770, %v866
  %v868 = vpop.f32.mrb[0].mxu0
  %869 = vmatprep.mubr.bf16.mxu0 0
  %870 = vmatmul.mubr.bf16.gmra.mrb[0].mxu0 %v321
  %v871 = vpop.f32.mrb[0].mxu0
  %v872 = vadd.f32 %v775, %v871
  %v873 = vpop.f32.mrb[0].mxu0
  %v874 = vpop.f32.mrb[0].mxu0
  %v875 = vadd.f32 %v778, %v874
  %v876 = vpop.f32.mrb[0].mxu0
  %877 = vmatprep.mubr.bf16.mxu0 0
  %878 = vmatmul.mubr.bf16.gmra.mrb[0].mxu0 %v326
  %v879 = vpop.f32.mrb[0].mxu0
  %v880 = vadd.f32 %v783, %v879
  %v881 = vpop.f32.mrb[0].mxu0
  %v882 = vpop.f32.mrb[0].mxu0
  %v883 = vadd.f32 %v786, %v882
  %v884 = vpop.f32.mrb[0].mxu0
  %885 = vmatprep.mubr.bf16.mxu0 0
  %886 = vmatmul.mubr.bf16.gmra.mrb[0].mxu0 %v331
  %v887 = vpop.f32.mrb[0].mxu0
  %v888 = vadd.f32 %v791, %v887
  %v889 = vpop.f32.mrb[0].mxu0
  %v890 = vpop.f32.mrb[0].mxu0
  %v891 = vadd.f32 %v794, %v890
  %v892 = vpop.f32.mrb[0].mxu0
  %893 = vmatprep.mubr.bf16.mxu0 0
  %894 = vmatmul.mubr.bf16.gmra.mrb[0].mxu0 %v336
  %v895 = vpop.f32.mrb[0].mxu0
  %v896 = vadd.f32 %v799, %v895
  %v897 = vpop.f32.mrb[0].mxu0
  %v898 = vpop.f32.mrb[0].mxu0
  %v899 = vadd.f32 %v802, %v898
  %v900 = vpop.f32.mrb[0].mxu0
  %901 = vmatprep.mubr.bf16.mxu0 0
  %902 = vmatmul.mubr.bf16.gmra.mrb[0].mxu0 %v341
  %v903 = vpop.f32.mrb[0].mxu0
  %v904 = vadd.f32 %v807, %v903
  %v905 = vpop.f32.mrb[0].mxu0
  %v906 = vpop.f32.mrb[0].mxu0
  %v907 = vadd.f32 %v810, %v906
  %v908 = vpop.f32.mrb[0].mxu0
  %909 = vmatprep.mubr.bf16.mxu0 0
  %910 = vmatmul.mubr.bf16.gmra.mrb[0].mxu0 %v346
  %v911 = vpop.f32.mrb[0].mxu0
  %v912 = vadd.f32 %v815, %v911
  %v913 = vpop.f32.mrb[0].mxu0
  %v914 = vpop.f32.mrb[0].mxu0
  %v915 = vadd.f32 %v818, %v914
  %v916 = vpop.f32.mrb[0].mxu0
  %917 = vdwg.mxu0
  %v918 = vadd.f32 %v35, %v856
  %v919 = vadd.f32 %v36, %v859
  %v920 = vadd.f32 %v37, %v864
  %v921 = vadd.f32 %v38, %v867
  %v922 = vadd.f32 %v39, %v872
  %v923 = vadd.f32 %v40, %v875
  %v924 = vadd.f32 %v41, %v880
  %v925 = vadd.f32 %v42, %v883
  %v926 = vadd.f32 %v43, %v888
  %v927 = vadd.f32 %v44, %v891
  %v928 = vadd.f32 %v45, %v896
  %v929 = vadd.f32 %v46, %v899
  %v930 = vadd.f32 %v47, %v904
  %v931 = vadd.f32 %v48, %v907
  %v932 = vadd.f32 %v49, %v912
  %v933 = vadd.f32 %v50, %v915
  %934 = vst [vmem:[#allocation2] sm:$0xff] %v918
  %935 = vst [vmem:[#allocation2 + $0x8] sm:$0xff] %v919
  %936 = vst [vmem:[#allocation2 + $0x10] sm:$0xff] %v920
  %937 = vst [vmem:[#allocation2 + $0x18] sm:$0xff] %v921
  %938 = vst [vmem:[#allocation2 + $0x20] sm:$0xff] %v922
  %939 = vst [vmem:[#allocation2 + $0x28] sm:$0xff] %v923
  %940 = vst [vmem:[#allocation2 + $0x30] sm:$0xff] %v924
  %941 = vst [vmem:[#allocation2 + $0x38] sm:$0xff] %v925
  %942 = vst [vmem:[#allocation2 + $0x40] sm:$0xff] %v926
  %943 = vst [vmem:[#allocation2 + $0x48] sm:$0xff] %v927
  %944 = vst [vmem:[#allocation2 + $0x50] sm:$0xff] %v928
  %945 = vst [vmem:[#allocation2 + $0x58] sm:$0xff] %v929
  %946 = vst [vmem:[#allocation2 + $0x60] sm:$0xff] %v930
  %947 = vst [vmem:[#allocation2 + $0x68] sm:$0xff] %v931
  %948 = vst [vmem:[#allocation2 + $0x70] sm:$0xff] %v932
  %949 = vst [vmem:[#allocation2 + $0x78] sm:$0xff] %v933
  // Predicated region
  $region18: #{discriminator_forward.6} parent=0 // pred_check
    %p950 = pneg %p15
  $region19: #{discriminator_forward.6} parent=0 // pred_check_branch
    %952 = sbr.rel (%p950) target = $region21
  $region20: #{discriminator_forward.6} parent=0 // pred_region
    %v953 = vld [vmem:[#allocation2] sm:$0xff]
    %v954 = vld [vmem:[#allocation2 + $0x8] sm:$0xff]
    %v955 = vld [vmem:[#allocation2 + $0x10] sm:$0xff]
    %v956 = vld [vmem:[#allocation2 + $0x18] sm:$0xff]
    %v957 = vld [vmem:[#allocation2 + $0x20] sm:$0xff]
    %v958 = vld [vmem:[#allocation2 + $0x28] sm:$0xff]
    %v959 = vld [vmem:[#allocation2 + $0x30] sm:$0xff]
    %v960 = vld [vmem:[#allocation2 + $0x38] sm:$0xff]
    %v961 = vld [vmem:[#allocation2 + $0x40] sm:$0xff]
    %v962 = vld [vmem:[#allocation2 + $0x48] sm:$0xff]
    %v963 = vld [vmem:[#allocation2 + $0x50] sm:$0xff]
    %v964 = vld [vmem:[#allocation2 + $0x58] sm:$0xff]
    %v965 = vld [vmem:[#allocation2 + $0x60] sm:$0xff]
    %v966 = vld [vmem:[#allocation2 + $0x68] sm:$0xff]
    %v967 = vld [vmem:[#allocation2 + $0x70] sm:$0xff]
    %v968 = vld [vmem:[#allocation2 + $0x78] sm:$0xff]
    %v969 = vld [vmem:[%s2] sm:$0x1]
    %v971 = vlaneseq
    %v972 = vshrl.u32 %v971, 7
    %v973 = vsub.s32 0, %v972
    %v974 = vrot.slane %v969, %v973
    %v976 = vadd.f32 %v953, %v974
    %v977 = vadd.f32 %v954, %v974
    %v978 = vadd.f32 %v955, %v974
    %v979 = vadd.f32 %v956, %v974
    %v980 = vadd.f32 %v957, %v974
    %v981 = vadd.f32 %v958, %v974
    %v982 = vadd.f32 %v959, %v974
    %v983 = vadd.f32 %v960, %v974
    %v984 = vadd.f32 %v961, %v974
    %v985 = vadd.f32 %v962, %v974
    %v986 = vadd.f32 %v963, %v974
    %v987 = vadd.f32 %v964, %v974
    %v988 = vadd.f32 %v965, %v974
    %v989 = vadd.f32 %v966, %v974
    %v990 = vadd.f32 %v967, %v974
    %v991 = vadd.f32 %v968, %v974
    %vm992 = vcmp.ge.f32.partialorder %v976, 0.0
    %vm993 = vcmp.ge.f32.partialorder %v977, 0.0
    %vm994 = vcmp.ge.f32.partialorder %v978, 0.0
    %vm995 = vcmp.ge.f32.partialorder %v979, 0.0
    %vm996 = vcmp.ge.f32.partialorder %v980, 0.0
    %vm997 = vcmp.ge.f32.partialorder %v981, 0.0
    %vm998 = vcmp.ge.f32.partialorder %v982, 0.0
    %vm999 = vcmp.ge.f32.partialorder %v983, 0.0
    %vm1000 = vcmp.ge.f32.partialorder %v984, 0.0
    %vm1001 = vcmp.ge.f32.partialorder %v985, 0.0
    %vm1002 = vcmp.ge.f32.partialorder %v986, 0.0
    %vm1003 = vcmp.ge.f32.partialorder %v987, 0.0
    %vm1004 = vcmp.ge.f32.partialorder %v988, 0.0
    %vm1005 = vcmp.ge.f32.partialorder %v989, 0.0
    %vm1006 = vcmp.ge.f32.partialorder %v990, 0.0
    %vm1007 = vcmp.ge.f32.partialorder %v991, 0.0
    %v1008 = vmul.f32 %v976, 0.2
    %v1009 = vmul.f32 %v977, 0.2
    %v1010 = vmul.f32 %v978, 0.2
    %v1011 = vmul.f32 %v979, 0.2
    %v1012 = vmul.f32 %v980, 0.2
    %v1013 = vmul.f32 %v981, 0.2
    %v1014 = vmul.f32 %v982, 0.2
    %v1015 = vmul.f32 %v983, 0.2
    %v1016 = vmul.f32 %v984, 0.2
    %v1017 = vmul.f32 %v985, 0.2
    %v1018 = vmul.f32 %v986, 0.2
    %v1019 = vmul.f32 %v987, 0.2
    %v1020 = vmul.f32 %v988, 0.2
    %v1021 = vmul.f32 %v989, 0.2
    %v1022 = vmul.f32 %v990, 0.2
    %v1023 = vmul.f32 %v991, 0.2
    %v1024 = vsel %vm992, %v976, %v1008
    %v1025 = vsel %vm993, %v977, %v1009
    %v1026 = vsel %vm994, %v978, %v1010
    %v1027 = vsel %vm995, %v979, %v1011
    %v1028 = vsel %vm996, %v980, %v1012
    %v1029 = vsel %vm997, %v981, %v1013
    %v1030 = vsel %vm998, %v982, %v1014
    %v1031 = vsel %vm999, %v983, %v1015
    %v1032 = vsel %vm1000, %v984, %v1016
    %v1033 = vsel %vm1001, %v985, %v1017
    %v1034 = vsel %vm1002, %v986, %v1018
    %v1035 = vsel %vm1003, %v987, %v1019
    %v1036 = vsel %vm1004, %v988, %v1020
    %v1037 = vsel %vm1005, %v989, %v1021
    %v1038 = vsel %vm1006, %v990, %v1022
    %v1039 = vsel %vm1007, %v991, %v1023
    %v1040 = vpack.c.bf16 %v1025, %v1024
    %v1041 = vpack.c.bf16 %v1027, %v1026
    %v1042 = vpack.c.bf16 %v1029, %v1028
    %v1043 = vpack.c.bf16 %v1031, %v1030
    %v1044 = vpack.c.bf16 %v1033, %v1032
    %v1045 = vpack.c.bf16 %v1035, %v1034
    %v1046 = vpack.c.bf16 %v1037, %v1036
    %v1047 = vpack.c.bf16 %v1039, %v1038
    %v1056 = vunpack.c.l.b16 %v1040
    %v1057 = vunpack.c.h.b16 %v1040
    %v1058 = vunpack.c.l.b16 %v1041
    %v1059 = vunpack.c.h.b16 %v1041
    %v1060 = vunpack.c.l.b16 %v1042
    %v1061 = vunpack.c.h.b16 %v1042
    %v1062 = vunpack.c.l.b16 %v1043
    %v1063 = vunpack.c.h.b16 %v1043
    %v1064 = vunpack.c.l.b16 %v1044
    %v1065 = vunpack.c.h.b16 %v1044
    %v1066 = vunpack.c.l.b16 %v1045
    %v1067 = vunpack.c.h.b16 %v1045
    %v1068 = vunpack.c.l.b16 %v1046
    %v1069 = vunpack.c.h.b16 %v1046
    %v1070 = vunpack.c.l.b16 %v1047
    %v1071 = vunpack.c.h.b16 %v1047
    %v1072 = vpack.c.b16 %v1056, %v1056
    %v1073 = vpack.c.b16 %v1057, %v1057
    %v1074 = vpack.c.b16 %v1058, %v1058
    %v1075 = vpack.c.b16 %v1059, %v1059
    %v1076 = vpack.c.b16 %v1060, %v1060
    %v1077 = vpack.c.b16 %v1061, %v1061
    %v1078 = vpack.c.b16 %v1062, %v1062
    %v1079 = vpack.c.b16 %v1063, %v1063
    %v1080 = vpack.c.b16 %v1064, %v1064
    %v1081 = vpack.c.b16 %v1065, %v1065
    %v1082 = vpack.c.b16 %v1066, %v1066
    %v1083 = vpack.c.b16 %v1067, %v1067
    %v1084 = vpack.c.b16 %v1068, %v1068
    %v1085 = vpack.c.b16 %v1069, %v1069
    %v1086 = vpack.c.b16 %v1070, %v1070
    %v1087 = vpack.c.b16 %v1071, %v1071
    %1104 = vst [vmem:[%s3] sm:$0xf] %v1072
    %1105 = vst [vmem:[%s3 + $0x4] sm:$0xf] %v1073
    %1106 = vst [vmem:[%s3 + $0x8] sm:$0xf] %v1074
    %1107 = vst [vmem:[%s3 + $0xc] sm:$0xf] %v1075
    %1108 = vst [vmem:[%s3 + $0x10] sm:$0xf] %v1076
    %1109 = vst [vmem:[%s3 + $0x14] sm:$0xf] %v1077
    %1110 = vst [vmem:[%s3 + $0x18] sm:$0xf] %v1078
    %1111 = vst [vmem:[%s3 + $0x1c] sm:$0xf] %v1079
    %1112 = vst [vmem:[%s3 + $0x20] sm:$0xf] %v1080
    %1113 = vst [vmem:[%s3 + $0x24] sm:$0xf] %v1081
    %1114 = vst [vmem:[%s3 + $0x28] sm:$0xf] %v1082
    %1115 = vst [vmem:[%s3 + $0x2c] sm:$0xf] %v1083
    %1116 = vst [vmem:[%s3 + $0x30] sm:$0xf] %v1084
    %1117 = vst [vmem:[%s3 + $0x34] sm:$0xf] %v1085
    %1118 = vst [vmem:[%s3 + $0x38] sm:$0xf] %v1086
    %1119 = vst [vmem:[%s3 + $0x3c] sm:$0xf] %v1087
  $region21: #{discriminator_forward.6} parent=0 // pred_fallthru
    _
  // Predicated region
  $region22: #{discriminator_forward.6} parent=0 // pred_check
    _
  $region23: #{discriminator_forward.6} parent=0 // pred_check_branch
    %1121 = sbr.rel (0) target = $region25
  $region24: #{discriminator_forward.6} parent=0 // pred_region
    _
  $region25: #{discriminator_forward.6} parent=0 // pred_fallthru
    _
  // Predicated region
  $region26: #{discriminator_forward.6} parent=0 // pred_check
    _
  $region27: #{discriminator_forward.6} parent=0 // pred_check_branch
    %1123 = sbr.rel (0) target = $region29
  $region28: #{discriminator_forward.6} parent=0 // pred_region
    _
  $region29: #{discriminator_forward.6} parent=0 // pred_fallthru
    _

// kernel: discriminator_forward.7
$region0: #{discriminator_forward.7}
  #allocation0 [shape = 'u32[]', space=smem, size = 0x4, offset = 0x4, fixed_abs, tag = 'smem constant byte address 0x4 - core index']
  #allocation1 [shape = 'u32[144,128]{1,0:T(1,128)}', space=vmem, size = 0x12000, scoped, tag = 'internal scratch']
  #allocation2 [shape = 'f32[32,128]{1,0:T(8,128)}', space=vmem, size = 0x4000, scoped, tag = 'scratch operand']
  %s0 = inlined_call_operand.vmem [shape: bf16[32,1280], index: 0, kind: input, shape index: {}]
  %s1 = inlined_call_operand.vmem [shape: bf16[1280,128], index: 1, kind: input, shape index: {}]
  %s2 = inlined_call_operand.vmem [shape: f32[1,128], index: 2, kind: input, shape index: {}]
  %s3 = inlined_call_operand.vmem [shape: bf16[32,128], index: 3, kind: output, shape index: {}]
  %s4 = sld [smem:[#allocation0]]
  $region30: #{discriminator_forward.7} parent=0
    _
  %s6 = ssub.s32 1, %s4
  %s7 = scalar_select 0, %s6, %s4
  // Predicated region
  $region2: #{discriminator_forward.7} parent=0 // pred_check
    _
  $region3: #{discriminator_forward.7} parent=0 // pred_check_branch
    %9 = sbr.rel (0) target = $region5
  $region4: #{discriminator_forward.7} parent=0 // pred_region
    _
  $region5: #{discriminator_forward.7} parent=0 // pred_fallthru
    _
  // Predicated region
  $region6: #{discriminator_forward.7} parent=0 // pred_check
    _
  $region7: #{discriminator_forward.7} parent=0 // pred_check_branch
    %11 = sbr.rel (0) target = $region9
  $region8: #{discriminator_forward.7} parent=0 // pred_region
    _
  $region9: #{discriminator_forward.7} parent=0 // pred_fallthru
    _
  // Predicated region
  $region10: #{discriminator_forward.7} parent=0 // pred_check
    _
  $region11: #{discriminator_forward.7} parent=0 // pred_check_branch
    %13 = sbr.rel (0) target = $region13
  $region12: #{discriminator_forward.7} parent=0 // pred_region
    _
  $region13: #{discriminator_forward.7} parent=0 // pred_fallthru
    _
  %p15 = scmp.eq.s32.totalorder 0, 0
  // Predicated region
  $region14: #{discriminator_forward.7} parent=0 // pred_check
    %p16 = pneg %p15
  $region15: #{discriminator_forward.7} parent=0 // pred_check_branch
    %18 = sbr.rel (%p16) target = $region17
  $region16: #{discriminator_forward.7} parent=0 // pred_region
    %19 = vst [vmem:[#allocation2] sm:$0xff] 0.0
    %20 = vst [vmem:[#allocation2 + $0x8] sm:$0xff] 0.0
    %21 = vst [vmem:[#allocation2 + $0x10] sm:$0xff] 0.0
    %22 = vst [vmem:[#allocation2 + $0x18] sm:$0xff] 0.0
  $region17: #{discriminator_forward.7} parent=0 // pred_fallthru
    _
  %v23 = vld [vmem:[#allocation2] sm:$0xff]
  %v24 = vld [vmem:[#allocation2 + $0x8] sm:$0xff]
  %v25 = vld [vmem:[#allocation2 + $0x10] sm:$0xff]
  %v26 = vld [vmem:[#allocation2 + $0x18] sm:$0xff]
  %v27 = vld [vmem:[%s0] sm:$0xff]
  %v28 = vld [vmem:[%s0 + $0x8] sm:$0xff]
  %v29 = vld [vmem:[%s0 + $0x10] sm:$0xff]
  %v30 = vld [vmem:[%s0 + $0x18] sm:$0xff]
  %v31 = vld [vmem:[%s0 + $0x20] sm:$0xff]
  %v32 = vld [vmem:[%s0 + $0x28] sm:$0xff]
  %v33 = vld [vmem:[%s0 + $0x30] sm:$0xff]
  %v34 = vld [vmem:[%s0 + $0x38] sm:$0xff]
  %v35 = vld [vmem:[%s0 + $0x40] sm:$0xff]
  %v36 = vld [vmem:[%s0 + $0x48] sm:$0xff]
  %v37 = vld [vmem:[%s0 + $0x50] sm:$0xff]
  %v38 = vld [vmem:[%s0 + $0x58] sm:$0xff]
  %v39 = vld [vmem:[%s0 + $0x60] sm:$0xff]
  %v40 = vld [vmem:[%s0 + $0x68] sm:$0xff]
  %v41 = vld [vmem:[%s0 + $0x70] sm:$0xff]
  %v42 = vld [vmem:[%s0 + $0x78] sm:$0xff]
  %v43 = vld [vmem:[%s0 + $0x80] sm:$0xff]
  %v44 = vld [vmem:[%s0 + $0x88] sm:$0xff]
  %v45 = vld [vmem:[%s0 + $0x90] sm:$0xff]
  %v46 = vld [vmem:[%s0 + $0x98] sm:$0xff]
  %v47 = vld [vmem:[%s1] sm:$0xf]
  %v48 = vld [vmem:[%s1 + $0x4] sm:$0xf]
  %v49 = vld [vmem:[%s1 + $0x8] sm:$0xf]
  %v50 = vld [vmem:[%s1 + $0xc] sm:$0xf]
  %v51 = vld [vmem:[%s1 + $0x10] sm:$0xf]
  %v52 = vld [vmem:[%s1 + $0x14] sm:$0xf]
  %v53 = vld [vmem:[%s1 + $0x18] sm:$0xf]
  %v54 = vld [vmem:[%s1 + $0x1c] sm:$0xf]
  %v55 = vld [vmem:[%s1 + $0x20] sm:$0xf]
  %v56 = vld [vmem:[%s1 + $0x24] sm:$0xf]
  %v57 = vld [vmem:[%s1 + $0x28] sm:$0xf]
  %v58 = vld [vmem:[%s1 + $0x2c] sm:$0xf]
  %v59 = vld [vmem:[%s1 + $0x30] sm:$0xf]
  %v60 = vld [vmem:[%s1 + $0x34] sm:$0xf]
  %v61 = vld [vmem:[%s1 + $0x38] sm:$0xf]
  %v62 = vld [vmem:[%s1 + $0x3c] sm:$0xf]
  %v63 = vld [vmem:[%s1 + $0x40] sm:$0xf]
  %v64 = vld [vmem:[%s1 + $0x44] sm:$0xf]
  %v65 = vld [vmem:[%s1 + $0x48] sm:$0xf]
  %v66 = vld [vmem:[%s1 + $0x4c] sm:$0xf]
  %v67 = vld [vmem:[%s1 + $0x50] sm:$0xf]
  %v68 = vld [vmem:[%s1 + $0x54] sm:$0xf]
  %v69 = vld [vmem:[%s1 + $0x58] sm:$0xf]
  %v70 = vld [vmem:[%s1 + $0x5c] sm:$0xf]
  %v71 = vld [vmem:[%s1 + $0x60] sm:$0xf]
  %v72 = vld [vmem:[%s1 + $0x64] sm:$0xf]
  %v73 = vld [vmem:[%s1 + $0x68] sm:$0xf]
  %v74 = vld [vmem:[%s1 + $0x6c] sm:$0xf]
  %v75 = vld [vmem:[%s1 + $0x70] sm:$0xf]
  %v76 = vld [vmem:[%s1 + $0x74] sm:$0xf]
  %v77 = vld [vmem:[%s1 + $0x78] sm:$0xf]
  %v78 = vld [vmem:[%s1 + $0x7c] sm:$0xf]
  %v79 = vld [vmem:[%s1 + $0x80] sm:$0xf]
  %v80 = vld [vmem:[%s1 + $0x84] sm:$0xf]
  %v81 = vld [vmem:[%s1 + $0x88] sm:$0xf]
  %v82 = vld [vmem:[%s1 + $0x8c] sm:$0xf]
  %v83 = vld [vmem:[%s1 + $0x90] sm:$0xf]
  %v84 = vld [vmem:[%s1 + $0x94] sm:$0xf]
  %v85 = vld [vmem:[%s1 + $0x98] sm:$0xf]
  %v86 = vld [vmem:[%s1 + $0x9c] sm:$0xf]
  %v87 = vld [vmem:[%s1 + $0xa0] sm:$0xf]
  %v88 = vld [vmem:[%s1 + $0xa4] sm:$0xf]
  %v89 = vld [vmem:[%s1 + $0xa8] sm:$0xf]
  %v90 = vld [vmem:[%s1 + $0xac] sm:$0xf]
  %v91 = vld [vmem:[%s1 + $0xb0] sm:$0xf]
  %v92 = vld [vmem:[%s1 + $0xb4] sm:$0xf]
  %v93 = vld [vmem:[%s1 + $0xb8] sm:$0xf]
  %v94 = vld [vmem:[%s1 + $0xbc] sm:$0xf]
  %v95 = vld [vmem:[%s1 + $0xc0] sm:$0xf]
  %v96 = vld [vmem:[%s1 + $0xc4] sm:$0xf]
  %v97 = vld [vmem:[%s1 + $0xc8] sm:$0xf]
  %v98 = vld [vmem:[%s1 + $0xcc] sm:$0xf]
  %v99 = vld [vmem:[%s1 + $0xd0] sm:$0xf]
  %v100 = vld [vmem:[%s1 + $0xd4] sm:$0xf]
  %v101 = vld [vmem:[%s1 + $0xd8] sm:$0xf]
  %v102 = vld [vmem:[%s1 + $0xdc] sm:$0xf]
  %v103 = vld [vmem:[%s1 + $0xe0] sm:$0xf]
  %v104 = vld [vmem:[%s1 + $0xe4] sm:$0xf]
  %v105 = vld [vmem:[%s1 + $0xe8] sm:$0xf]
  %v106 = vld [vmem:[%s1 + $0xec] sm:$0xf]
  %v107 = vld [vmem:[%s1 + $0xf0] sm:$0xf]
  %v108 = vld [vmem:[%s1 + $0xf4] sm:$0xf]
  %v109 = vld [vmem:[%s1 + $0xf8] sm:$0xf]
  %v110 = vld [vmem:[%s1 + $0xfc] sm:$0xf]
  %v111 = vld [vmem:[%s1 + $0x100] sm:$0xf]
  %v112 = vld [vmem:[%s1 + $0x104] sm:$0xf]
  %v113 = vld [vmem:[%s1 + $0x108] sm:$0xf]
  %v114 = vld [vmem:[%s1 + $0x10c] sm:$0xf]
  %v115 = vld [vmem:[%s1 + $0x110] sm:$0xf]
  %v116 = vld [vmem:[%s1 + $0x114] sm:$0xf]
  %v117 = vld [vmem:[%s1 + $0x118] sm:$0xf]
  %v118 = vld [vmem:[%s1 + $0x11c] sm:$0xf]
  %v119 = vld [vmem:[%s1 + $0x120] sm:$0xf]
  %v120 = vld [vmem:[%s1 + $0x124] sm:$0xf]
  %v121 = vld [vmem:[%s1 + $0x128] sm:$0xf]
  %v122 = vld [vmem:[%s1 + $0x12c] sm:$0xf]
  %v123 = vld [vmem:[%s1 + $0x130] sm:$0xf]
  %v124 = vld [vmem:[%s1 + $0x134] sm:$0xf]
  %v125 = vld [vmem:[%s1 + $0x138] sm:$0xf]
  %v126 = vld [vmem:[%s1 + $0x13c] sm:$0xf]
  %v127 = vld [vmem:[%s1 + $0x140] sm:$0xf]
  %v128 = vld [vmem:[%s1 + $0x144] sm:$0xf]
  %v129 = vld [vmem:[%s1 + $0x148] sm:$0xf]
  %v130 = vld [vmem:[%s1 + $0x14c] sm:$0xf]
  %v131 = vld [vmem:[%s1 + $0x150] sm:$0xf]
  %v132 = vld [vmem:[%s1 + $0x154] sm:$0xf]
  %v133 = vld [vmem:[%s1 + $0x158] sm:$0xf]
  %v134 = vld [vmem:[%s1 + $0x15c] sm:$0xf]
  %v135 = vld [vmem:[%s1 + $0x160] sm:$0xf]
  %v136 = vld [vmem:[%s1 + $0x164] sm:$0xf]
  %v137 = vld [vmem:[%s1 + $0x168] sm:$0xf]
  %v138 = vld [vmem:[%s1 + $0x16c] sm:$0xf]
  %v139 = vld [vmem:[%s1 + $0x170] sm:$0xf]
  %v140 = vld [vmem:[%s1 + $0x174] sm:$0xf]
  %v141 = vld [vmem:[%s1 + $0x178] sm:$0xf]
  %v142 = vld [vmem:[%s1 + $0x17c] sm:$0xf]
  %v143 = vld [vmem:[%s1 + $0x180] sm:$0xf]
  %v144 = vld [vmem:[%s1 + $0x184] sm:$0xf]
  %v145 = vld [vmem:[%s1 + $0x188] sm:$0xf]
  %v146 = vld [vmem:[%s1 + $0x18c] sm:$0xf]
  %v147 = vld [vmem:[%s1 + $0x190] sm:$0xf]
  %v148 = vld [vmem:[%s1 + $0x194] sm:$0xf]
  %v149 = vld [vmem:[%s1 + $0x198] sm:$0xf]
  %v150 = vld [vmem:[%s1 + $0x19c] sm:$0xf]
  %v151 = vld [vmem:[%s1 + $0x1a0] sm:$0xf]
  %v152 = vld [vmem:[%s1 + $0x1a4] sm:$0xf]
  %v153 = vld [vmem:[%s1 + $0x1a8] sm:$0xf]
  %v154 = vld [vmem:[%s1 + $0x1ac] sm:$0xf]
  %v155 = vld [vmem:[%s1 + $0x1b0] sm:$0xf]
  %v156 = vld [vmem:[%s1 + $0x1b4] sm:$0xf]
  %v157 = vld [vmem:[%s1 + $0x1b8] sm:$0xf]
  %v158 = vld [vmem:[%s1 + $0x1bc] sm:$0xf]
  %v159 = vld [vmem:[%s1 + $0x1c0] sm:$0xf]
  %v160 = vld [vmem:[%s1 + $0x1c4] sm:$0xf]
  %v161 = vld [vmem:[%s1 + $0x1c8] sm:$0xf]
  %v162 = vld [vmem:[%s1 + $0x1cc] sm:$0xf]
  %v163 = vld [vmem:[%s1 + $0x1d0] sm:$0xf]
  %v164 = vld [vmem:[%s1 + $0x1d4] sm:$0xf]
  %v165 = vld [vmem:[%s1 + $0x1d8] sm:$0xf]
  %v166 = vld [vmem:[%s1 + $0x1dc] sm:$0xf]
  %v167 = vld [vmem:[%s1 + $0x1e0] sm:$0xf]
  %v168 = vld [vmem:[%s1 + $0x1e4] sm:$0xf]
  %v169 = vld [vmem:[%s1 + $0x1e8] sm:$0xf]
  %v170 = vld [vmem:[%s1 + $0x1ec] sm:$0xf]
  %v171 = vld [vmem:[%s1 + $0x1f0] sm:$0xf]
  %v172 = vld [vmem:[%s1 + $0x1f4] sm:$0xf]
  %v173 = vld [vmem:[%s1 + $0x1f8] sm:$0xf]
  %v174 = vld [vmem:[%s1 + $0x1fc] sm:$0xf]
  %v175 = vld [vmem:[%s1 + $0x200] sm:$0xf]
  %v176 = vld [vmem:[%s1 + $0x204] sm:$0xf]
  %v177 = vld [vmem:[%s1 + $0x208] sm:$0xf]
  %v178 = vld [vmem:[%s1 + $0x20c] sm:$0xf]
  %v179 = vld [vmem:[%s1 + $0x210] sm:$0xf]
  %v180 = vld [vmem:[%s1 + $0x214] sm:$0xf]
  %v181 = vld [vmem:[%s1 + $0x218] sm:$0xf]
  %v182 = vld [vmem:[%s1 + $0x21c] sm:$0xf]
  %v183 = vld [vmem:[%s1 + $0x220] sm:$0xf]
  %v184 = vld [vmem:[%s1 + $0x224] sm:$0xf]
  %v185 = vld [vmem:[%s1 + $0x228] sm:$0xf]
  %v186 = vld [vmem:[%s1 + $0x22c] sm:$0xf]
  %v187 = vld [vmem:[%s1 + $0x230] sm:$0xf]
  %v188 = vld [vmem:[%s1 + $0x234] sm:$0xf]
  %v189 = vld [vmem:[%s1 + $0x238] sm:$0xf]
  %v190 = vld [vmem:[%s1 + $0x23c] sm:$0xf]
  %v191 = vld [vmem:[%s1 + $0x240] sm:$0xf]
  %v192 = vld [vmem:[%s1 + $0x244] sm:$0xf]
  %v193 = vld [vmem:[%s1 + $0x248] sm:$0xf]
  %v194 = vld [vmem:[%s1 + $0x24c] sm:$0xf]
  %v195 = vld [vmem:[%s1 + $0x250] sm:$0xf]
  %v196 = vld [vmem:[%s1 + $0x254] sm:$0xf]
  %v197 = vld [vmem:[%s1 + $0x258] sm:$0xf]
  %v198 = vld [vmem:[%s1 + $0x25c] sm:$0xf]
  %v199 = vld [vmem:[%s1 + $0x260] sm:$0xf]
  %v200 = vld [vmem:[%s1 + $0x264] sm:$0xf]
  %v201 = vld [vmem:[%s1 + $0x268] sm:$0xf]
  %v202 = vld [vmem:[%s1 + $0x26c] sm:$0xf]
  %v203 = vld [vmem:[%s1 + $0x270] sm:$0xf]
  %v204 = vld [vmem:[%s1 + $0x274] sm:$0xf]
  %v205 = vld [vmem:[%s1 + $0x278] sm:$0xf]
  %v206 = vld [vmem:[%s1 + $0x27c] sm:$0xf]
  %v227 = vunpack.c.l.b16 %v27
  %v228 = vunpack.c.h.b16 %v27
  %v229 = vunpack.c.l.b16 %v28
  %v230 = vunpack.c.h.b16 %v28
  %v231 = vunpack.c.l.b16 %v29
  %v232 = vunpack.c.h.b16 %v29
  %v233 = vunpack.c.l.b16 %v30
  %v234 = vunpack.c.h.b16 %v30
  %v235 = vunpack.c.l.b16 %v31
  %v236 = vunpack.c.h.b16 %v31
  %v237 = vunpack.c.l.b16 %v32
  %v238 = vunpack.c.h.b16 %v32
  %v239 = vunpack.c.l.b16 %v33
  %v240 = vunpack.c.h.b16 %v33
  %v241 = vunpack.c.l.b16 %v34
  %v242 = vunpack.c.h.b16 %v34
  %v243 = vunpack.c.l.b16 %v35
  %v244 = vunpack.c.h.b16 %v35
  %v245 = vunpack.c.l.b16 %v36
  %v246 = vunpack.c.h.b16 %v36
  %v247 = vunpack.c.l.b16 %v37
  %v248 = vunpack.c.h.b16 %v37
  %v249 = vunpack.c.l.b16 %v38
  %v250 = vunpack.c.h.b16 %v38
  %v251 = vunpack.c.l.b16 %v39
  %v252 = vunpack.c.h.b16 %v39
  %v253 = vunpack.c.l.b16 %v40
  %v254 = vunpack.c.h.b16 %v40
  %v255 = vunpack.c.l.b16 %v41
  %v256 = vunpack.c.h.b16 %v41
  %v257 = vunpack.c.l.b16 %v42
  %v258 = vunpack.c.h.b16 %v42
  %v259 = vunpack.c.l.b16 %v43
  %v260 = vunpack.c.h.b16 %v43
  %v261 = vunpack.c.l.b16 %v44
  %v262 = vunpack.c.h.b16 %v44
  %v263 = vunpack.c.l.b16 %v45
  %v264 = vunpack.c.h.b16 %v45
  %v265 = vunpack.c.l.b16 %v46
  %v266 = vunpack.c.h.b16 %v46
  %v267 = vpack.c.b16 %v237, %v227
  %v268 = vpack.c.b16 %v238, %v228
  %v269 = vpack.c.b16 %v239, %v229
  %v270 = vpack.c.b16 %v240, %v230
  %v271 = vpack.c.b16 %v241, %v231
  %v272 = vpack.c.b16 %v242, %v232
  %v273 = vpack.c.b16 %v243, %v233
  %v274 = vpack.c.b16 %v244, %v234
  %v275 = vpack.c.b16 %v245, %v235
  %v276 = vpack.c.b16 %v246, %v236
  %v277 = vpack.c.b16 %v257, %v247
  %v278 = vpack.c.b16 %v258, %v248
  %v279 = vpack.c.b16 %v259, %v249
  %v280 = vpack.c.b16 %v260, %v250
  %v281 = vpack.c.b16 %v261, %v251
  %v282 = vpack.c.b16 %v262, %v252
  %v283 = vpack.c.b16 %v263, %v253
  %v284 = vpack.c.b16 %v264, %v254
  %v285 = vpack.c.b16 %v265, %v255
  %v286 = vpack.c.b16 %v266, %v256
  %v467 = vunpack.c.l.b16 %v47
  %v468 = vunpack.c.l.b16 %v48
  %v469 = vunpack.c.l.b16 %v49
  %v470 = vunpack.c.l.b16 %v50
  %v471 = vunpack.c.l.b16 %v51
  %v472 = vunpack.c.l.b16 %v52
  %v473 = vunpack.c.l.b16 %v53
  %v474 = vunpack.c.l.b16 %v54
  %v475 = vunpack.c.l.b16 %v55
  %v476 = vunpack.c.l.b16 %v56
  %v477 = vunpack.c.l.b16 %v57
  %v478 = vunpack.c.l.b16 %v58
  %v479 = vunpack.c.l.b16 %v59
  %v480 = vunpack.c.l.b16 %v60
  %v481 = vunpack.c.l.b16 %v61
  %v482 = vunpack.c.l.b16 %v62
  %v483 = vunpack.c.l.b16 %v63
  %v484 = vunpack.c.l.b16 %v64
  %v485 = vunpack.c.l.b16 %v65
  %v486 = vunpack.c.l.b16 %v66
  %v487 = vunpack.c.l.b16 %v67
  %v488 = vunpack.c.l.b16 %v68
  %v489 = vunpack.c.l.b16 %v69
  %v490 = vunpack.c.l.b16 %v70
  %v491 = vunpack.c.l.b16 %v71
  %v492 = vunpack.c.l.b16 %v72
  %v493 = vunpack.c.l.b16 %v73
  %v494 = vunpack.c.l.b16 %v74
  %v495 = vunpack.c.l.b16 %v75
  %v496 = vunpack.c.l.b16 %v76
  %v497 = vunpack.c.l.b16 %v77
  %v498 = vunpack.c.l.b16 %v78
  %v499 = vunpack.c.l.b16 %v79
  %v500 = vunpack.c.l.b16 %v80
  %v501 = vunpack.c.l.b16 %v81
  %v502 = vunpack.c.l.b16 %v82
  %v503 = vunpack.c.l.b16 %v83
  %v504 = vunpack.c.l.b16 %v84
  %v505 = vunpack.c.l.b16 %v85
  %v506 = vunpack.c.l.b16 %v86
  %v507 = vunpack.c.l.b16 %v87
  %v508 = vunpack.c.l.b16 %v88
  %v509 = vunpack.c.l.b16 %v89
  %v510 = vunpack.c.l.b16 %v90
  %v511 = vunpack.c.l.b16 %v91
  %v512 = vunpack.c.l.b16 %v92
  %v513 = vunpack.c.l.b16 %v93
  %v514 = vunpack.c.l.b16 %v94
  %v515 = vunpack.c.l.b16 %v95
  %v516 = vunpack.c.l.b16 %v96
  %v517 = vunpack.c.l.b16 %v97
  %v518 = vunpack.c.l.b16 %v98
  %v519 = vunpack.c.l.b16 %v99
  %v520 = vunpack.c.l.b16 %v100
  %v521 = vunpack.c.l.b16 %v101
  %v522 = vunpack.c.l.b16 %v102
  %v523 = vunpack.c.l.b16 %v103
  %v524 = vunpack.c.l.b16 %v104
  %v525 = vunpack.c.l.b16 %v105
  %v526 = vunpack.c.l.b16 %v106
  %v527 = vunpack.c.l.b16 %v107
  %v528 = vunpack.c.l.b16 %v108
  %v529 = vunpack.c.l.b16 %v109
  %v530 = vunpack.c.l.b16 %v110
  %v531 = vunpack.c.l.b16 %v111
  %v532 = vunpack.c.l.b16 %v112
  %v533 = vunpack.c.l.b16 %v113
  %v534 = vunpack.c.l.b16 %v114
  %v535 = vunpack.c.l.b16 %v115
  %v536 = vunpack.c.l.b16 %v116
  %v537 = vunpack.c.l.b16 %v117
  %v538 = vunpack.c.l.b16 %v118
  %v539 = vunpack.c.l.b16 %v119
  %v540 = vunpack.c.l.b16 %v120
  %v541 = vunpack.c.l.b16 %v121
  %v542 = vunpack.c.l.b16 %v122
  %v543 = vunpack.c.l.b16 %v123
  %v544 = vunpack.c.l.b16 %v124
  %v545 = vunpack.c.l.b16 %v125
  %v546 = vunpack.c.l.b16 %v126
  %v547 = vunpack.c.l.b16 %v127
  %v548 = vunpack.c.l.b16 %v128
  %v549 = vunpack.c.l.b16 %v129
  %v550 = vunpack.c.l.b16 %v130
  %v551 = vunpack.c.l.b16 %v131
  %v552 = vunpack.c.l.b16 %v132
  %v553 = vunpack.c.l.b16 %v133
  %v554 = vunpack.c.l.b16 %v134
  %v555 = vunpack.c.l.b16 %v135
  %v556 = vunpack.c.l.b16 %v136
  %v557 = vunpack.c.l.b16 %v137
  %v558 = vunpack.c.l.b16 %v138
  %v559 = vunpack.c.l.b16 %v139
  %v560 = vunpack.c.l.b16 %v140
  %v561 = vunpack.c.l.b16 %v141
  %v562 = vunpack.c.l.b16 %v142
  %v563 = vunpack.c.l.b16 %v143
  %v564 = vunpack.c.l.b16 %v144
  %v565 = vunpack.c.l.b16 %v145
  %v566 = vunpack.c.l.b16 %v146
  %v567 = vunpack.c.l.b16 %v147
  %v568 = vunpack.c.l.b16 %v148
  %v569 = vunpack.c.l.b16 %v149
  %v570 = vunpack.c.l.b16 %v150
  %v571 = vunpack.c.l.b16 %v151
  %v572 = vunpack.c.l.b16 %v152
  %v573 = vunpack.c.l.b16 %v153
  %v574 = vunpack.c.l.b16 %v154
  %v575 = vunpack.c.l.b16 %v155
  %v576 = vunpack.c.l.b16 %v156
  %v577 = vunpack.c.l.b16 %v157
  %v578 = vunpack.c.l.b16 %v158
  %v579 = vunpack.c.l.b16 %v159
  %v580 = vunpack.c.l.b16 %v160
  %v581 = vunpack.c.l.b16 %v161
  %v582 = vunpack.c.l.b16 %v162
  %v583 = vunpack.c.l.b16 %v163
  %v584 = vunpack.c.l.b16 %v164
  %v585 = vunpack.c.l.b16 %v165
  %v586 = vunpack.c.l.b16 %v166
  %v587 = vunpack.c.l.b16 %v167
  %v588 = vunpack.c.l.b16 %v168
  %v589 = vunpack.c.l.b16 %v169
  %v590 = vunpack.c.l.b16 %v170
  %v591 = vunpack.c.l.b16 %v171
  %v592 = vunpack.c.l.b16 %v172
  %v593 = vunpack.c.l.b16 %v173
  %v594 = vunpack.c.l.b16 %v174
  %v595 = vunpack.c.l.b16 %v175
  %v596 = vunpack.c.l.b16 %v176
  %v597 = vunpack.c.l.b16 %v177
  %v598 = vunpack.c.l.b16 %v178
  %v599 = vunpack.c.l.b16 %v179
  %v600 = vunpack.c.l.b16 %v180
  %v601 = vunpack.c.l.b16 %v181
  %v602 = vunpack.c.l.b16 %v182
  %v603 = vunpack.c.l.b16 %v183
  %v604 = vunpack.c.l.b16 %v184
  %v605 = vunpack.c.l.b16 %v185
  %v606 = vunpack.c.l.b16 %v186
  %v607 = vunpack.c.l.b16 %v187
  %v608 = vunpack.c.l.b16 %v188
  %v609 = vunpack.c.l.b16 %v189
  %v610 = vunpack.c.l.b16 %v190
  %v611 = vunpack.c.l.b16 %v191
  %v612 = vunpack.c.l.b16 %v192
  %v613 = vunpack.c.l.b16 %v193
  %v614 = vunpack.c.l.b16 %v194
  %v615 = vunpack.c.l.b16 %v195
  %v616 = vunpack.c.l.b16 %v196
  %v617 = vunpack.c.l.b16 %v197
  %v618 = vunpack.c.l.b16 %v198
  %v619 = vunpack.c.l.b16 %v199
  %v620 = vunpack.c.l.b16 %v200
  %v621 = vunpack.c.l.b16 %v201
  %v622 = vunpack.c.l.b16 %v202
  %v623 = vunpack.c.l.b16 %v203
  %v624 = vunpack.c.l.b16 %v204
  %v625 = vunpack.c.l.b16 %v205
  %v626 = vunpack.c.l.b16 %v206
  %v627 = vpack.c.b16 %v468, %v467
  %v628 = vpack.c.b16 %v470, %v469
  %v629 = vpack.c.b16 %v472, %v471
  %v630 = vpack.c.b16 %v474, %v473
  %v631 = vpack.c.b16 %v476, %v475
  %v632 = vpack.c.b16 %v478, %v477
  %v633 = vpack.c.b16 %v480, %v479
  %v634 = vpack.c.b16 %v482, %v481
  %v635 = vpack.c.b16 %v484, %v483
  %v636 = vpack.c.b16 %v486, %v485
  %v637 = vpack.c.b16 %v488, %v487
  %v638 = vpack.c.b16 %v490, %v489
  %v639 = vpack.c.b16 %v492, %v491
  %v640 = vpack.c.b16 %v494, %v493
  %v641 = vpack.c.b16 %v496, %v495
  %v642 = vpack.c.b16 %v498, %v497
  %v643 = vpack.c.b16 %v500, %v499
  %v644 = vpack.c.b16 %v502, %v501
  %v645 = vpack.c.b16 %v504, %v503
  %v646 = vpack.c.b16 %v506, %v505
  %v647 = vpack.c.b16 %v508, %v507
  %v648 = vpack.c.b16 %v510, %v509
  %v649 = vpack.c.b16 %v512, %v511
  %v650 = vpack.c.b16 %v514, %v513
  %v651 = vpack.c.b16 %v516, %v515
  %v652 = vpack.c.b16 %v518, %v517
  %v653 = vpack.c.b16 %v520, %v519
  %v654 = vpack.c.b16 %v522, %v521
  %v655 = vpack.c.b16 %v524, %v523
  %v656 = vpack.c.b16 %v526, %v525
  %v657 = vpack.c.b16 %v528, %v527
  %v658 = vpack.c.b16 %v530, %v529
  %v659 = vpack.c.b16 %v532, %v531
  %v660 = vpack.c.b16 %v534, %v533
  %v661 = vpack.c.b16 %v536, %v535
  %v662 = vpack.c.b16 %v538, %v537
  %v663 = vpack.c.b16 %v540, %v539
  %v664 = vpack.c.b16 %v542, %v541
  %v665 = vpack.c.b16 %v544, %v543
  %v666 = vpack.c.b16 %v546, %v545
  %v667 = vpack.c.b16 %v548, %v547
  %v668 = vpack.c.b16 %v550, %v549
  %v669 = vpack.c.b16 %v552, %v551
  %v670 = vpack.c.b16 %v554, %v553
  %v671 = vpack.c.b16 %v556, %v555
  %v672 = vpack.c.b16 %v558, %v557
  %v673 = vpack.c.b16 %v560, %v559
  %v674 = vpack.c.b16 %v562, %v561
  %v675 = vpack.c.b16 %v564, %v563
  %v676 = vpack.c.b16 %v566, %v565
  %v677 = vpack.c.b16 %v568, %v567
  %v678 = vpack.c.b16 %v570, %v569
  %v679 = vpack.c.b16 %v572, %v571
  %v680 = vpack.c.b16 %v574, %v573
  %v681 = vpack.c.b16 %v576, %v575
  %v682 = vpack.c.b16 %v578, %v577
  %v683 = vpack.c.b16 %v580, %v579
  %v684 = vpack.c.b16 %v582, %v581
  %v685 = vpack.c.b16 %v584, %v583
  %v686 = vpack.c.b16 %v586, %v585
  %v687 = vpack.c.b16 %v588, %v587
  %v688 = vpack.c.b16 %v590, %v589
  %v689 = vpack.c.b16 %v592, %v591
  %v690 = vpack.c.b16 %v594, %v593
  %v691 = vpack.c.b16 %v596, %v595
  %v692 = vpack.c.b16 %v598, %v597
  %v693 = vpack.c.b16 %v600, %v599
  %v694 = vpack.c.b16 %v602, %v601
  %v695 = vpack.c.b16 %v604, %v603
  %v696 = vpack.c.b16 %v606, %v605
  %v697 = vpack.c.b16 %v608, %v607
  %v698 = vpack.c.b16 %v610, %v609
  %v699 = vpack.c.b16 %v612, %v611
  %v700 = vpack.c.b16 %v614, %v613
  %v701 = vpack.c.b16 %v616, %v615
  %v702 = vpack.c.b16 %v618, %v617
  %v703 = vpack.c.b16 %v620, %v619
  %v704 = vpack.c.b16 %v622, %v621
  %v705 = vpack.c.b16 %v624, %v623
  %v706 = vpack.c.b16 %v626, %v625
  %787 = vmatprep.subr.bf16.mxu0 0
  %788 = vmatpush1.bf16.msra.mxu0 %v627
  %789 = vmatprep.subr.bf16.mxu0 0
  %790 = vmatpush1.bf16.msra.mxu0 %v628
  %791 = vmatprep.subr.bf16.mxu0 0
  %792 = vmatpush1.bf16.msra.mxu0 %v629
  %793 = vmatprep.subr.bf16.mxu0 0
  %794 = vmatpush1.bf16.msra.mxu0 %v630
  %795 = vmatprep.subr.bf16.mxu0 0
  %796 = vmatpush1.bf16.msra.mxu0 %v631
  %797 = vmatprep.subr.bf16.mxu0 0
  %798 = vmatpush1.bf16.msra.mxu0 %v632
  %799 = vmatprep.subr.bf16.mxu0 0
  %800 = vmatpush1.bf16.msra.mxu0 %v633
  %801 = vmatprep.subr.bf16.mxu0 0
  %802 = vmatpush1.bf16.msra.mxu0 %v634
  %803 = vmatprep.subr.bf16.mxu0 0
  %804 = vmatpush1.bf16.msra.mxu0 %v635
  %805 = vmatprep.subr.bf16.mxu0 0
  %806 = vmatpush1.bf16.msra.mxu0 %v636
  %807 = vmatprep.subr.bf16.mxu0 0
  %808 = vmatpush1.bf16.msra.mxu0 %v637
  %809 = vmatprep.subr.bf16.mxu0 0
  %810 = vmatpush1.bf16.msra.mxu0 %v638
  %811 = vmatprep.subr.bf16.mxu0 0
  %812 = vmatpush1.bf16.msra.mxu0 %v639
  %813 = vmatprep.subr.bf16.mxu0 0
  %814 = vmatpush1.bf16.msra.mxu0 %v640
  %815 = vmatprep.subr.bf16.mxu0 0
  %816 = vmatpush1.bf16.msra.mxu0 %v641
  %817 = vmatprep.subr.bf16.mxu0 0
  %818 = vmatpush1.bf16.msra.mxu0 %v642
  %819 = vmatprep.mubr.bf16.mxu0 %v268
  %820 = vmatmul.mubr.bf16.gmra.mrb[0].mxu0 %v267
  %v821 = vpop.f32.mrb[0].mxu0
  %v822 = vadd.f32 0.0, %v821
  %v823 = vpop.f32.mrb[0].mxu0
  %v824 = vpop.f32.mrb[0].mxu0
  %v825 = vadd.f32 0.0, %v824
  %v826 = vpop.f32.mrb[0].mxu0
  %827 = vmatprep.mubr.bf16.mxu0 %v278
  %828 = vmatmul.mubr.bf16.gmra.mrb[0].mxu0 %v277
  %v829 = vpop.f32.mrb[0].mxu0
  %v830 = vadd.f32 0.0, %v829
  %v831 = vpop.f32.mrb[0].mxu0
  %v832 = vpop.f32.mrb[0].mxu0
  %v833 = vadd.f32 0.0, %v832
  %v834 = vpop.f32.mrb[0].mxu0
  %835 = vdwg.mxu0
  %836 = vmatprep.subr.bf16.mxu0 0
  %837 = vmatpush1.bf16.msra.mxu0 %v643
  %838 = vmatprep.subr.bf16.mxu0 0
  %839 = vmatpush1.bf16.msra.mxu0 %v644
  %840 = vmatprep.subr.bf16.mxu0 0
  %841 = vmatpush1.bf16.msra.mxu0 %v645
  %842 = vmatprep.subr.bf16.mxu0 0
  %843 = vmatpush1.bf16.msra.mxu0 %v646
  %844 = vmatprep.subr.bf16.mxu0 0
  %845 = vmatpush1.bf16.msra.mxu0 %v647
  %846 = vmatprep.subr.bf16.mxu0 0
  %847 = vmatpush1.bf16.msra.mxu0 %v648
  %848 = vmatprep.subr.bf16.mxu0 0
  %849 = vmatpush1.bf16.msra.mxu0 %v649
  %850 = vmatprep.subr.bf16.mxu0 0
  %851 = vmatpush1.bf16.msra.mxu0 %v650
  %852 = vmatprep.subr.bf16.mxu0 0
  %853 = vmatpush1.bf16.msra.mxu0 %v651
  %854 = vmatprep.subr.bf16.mxu0 0
  %855 = vmatpush1.bf16.msra.mxu0 %v652
  %856 = vmatprep.subr.bf16.mxu0 0
  %857 = vmatpush1.bf16.msra.mxu0 %v653
  %858 = vmatprep.subr.bf16.mxu0 0
  %859 = vmatpush1.bf16.msra.mxu0 %v654
  %860 = vmatprep.subr.bf16.mxu0 0
  %861 = vmatpush1.bf16.msra.mxu0 %v655
  %862 = vmatprep.subr.bf16.mxu0 0
  %863 = vmatpush1.bf16.msra.mxu0 %v656
  %864 = vmatprep.subr.bf16.mxu0 0
  %865 = vmatpush1.bf16.msra.mxu0 %v657
  %866 = vmatprep.subr.bf16.mxu0 0
  %867 = vmatpush1.bf16.msra.mxu0 %v658
  %868 = vmatprep.mubr.bf16.mxu0 %v270
  %869 = vmatmul.mubr.bf16.gmra.mrb[0].mxu0 %v269
  %v870 = vpop.f32.mrb[0].mxu0
  %v871 = vadd.f32 %v822, %v870
  %v872 = vpop.f32.mrb[0].mxu0
  %v873 = vpop.f32.mrb[0].mxu0
  %v874 = vadd.f32 %v825, %v873
  %v875 = vpop.f32.mrb[0].mxu0
  %876 = vmatprep.mubr.bf16.mxu0 %v280
  %877 = vmatmul.mubr.bf16.gmra.mrb[0].mxu0 %v279
  %v878 = vpop.f32.mrb[0].mxu0
  %v879 = vadd.f32 %v830, %v878
  %v880 = vpop.f32.mrb[0].mxu0
  %v881 = vpop.f32.mrb[0].mxu0
  %v882 = vadd.f32 %v833, %v881
  %v883 = vpop.f32.mrb[0].mxu0
  %884 = vdwg.mxu0
  %885 = vmatprep.subr.bf16.mxu0 0
  %886 = vmatpush1.bf16.msra.mxu0 %v659
  %887 = vmatprep.subr.bf16.mxu0 0
  %888 = vmatpush1.bf16.msra.mxu0 %v660
  %889 = vmatprep.subr.bf16.mxu0 0
  %890 = vmatpush1.bf16.msra.mxu0 %v661
  %891 = vmatprep.subr.bf16.mxu0 0
  %892 = vmatpush1.bf16.msra.mxu0 %v662
  %893 = vmatprep.subr.bf16.mxu0 0
  %894 = vmatpush1.bf16.msra.mxu0 %v663
  %895 = vmatprep.subr.bf16.mxu0 0
  %896 = vmatpush1.bf16.msra.mxu0 %v664
  %897 = vmatprep.subr.bf16.mxu0 0
  %898 = vmatpush1.bf16.msra.mxu0 %v665
  %899 = vmatprep.subr.bf16.mxu0 0
  %900 = vmatpush1.bf16.msra.mxu0 %v666
  %901 = vmatprep.subr.bf16.mxu0 0
  %902 = vmatpush1.bf16.msra.mxu0 %v667
  %903 = vmatprep.subr.bf16.mxu0 0
  %904 = vmatpush1.bf16.msra.mxu0 %v668
  %905 = vmatprep.subr.bf16.mxu0 0
  %906 = vmatpush1.bf16.msra.mxu0 %v669
  %907 = vmatprep.subr.bf16.mxu0 0
  %908 = vmatpush1.bf16.msra.mxu0 %v670
  %909 = vmatprep.subr.bf16.mxu0 0
  %910 = vmatpush1.bf16.msra.mxu0 %v671
  %911 = vmatprep.subr.bf16.mxu0 0
  %912 = vmatpush1.bf16.msra.mxu0 %v672
  %913 = vmatprep.subr.bf16.mxu0 0
  %914 = vmatpush1.bf16.msra.mxu0 %v673
  %915 = vmatprep.subr.bf16.mxu0 0
  %916 = vmatpush1.bf16.msra.mxu0 %v674
  %917 = vmatprep.mubr.bf16.mxu0 %v272
  %918 = vmatmul.mubr.bf16.gmra.mrb[0].mxu0 %v271
  %v919 = vpop.f32.mrb[0].mxu0
  %v920 = vadd.f32 %v871, %v919
  %v921 = vpop.f32.mrb[0].mxu0
  %v922 = vpop.f32.mrb[0].mxu0
  %v923 = vadd.f32 %v874, %v922
  %v924 = vpop.f32.mrb[0].mxu0
  %925 = vmatprep.mubr.bf16.mxu0 %v282
  %926 = vmatmul.mubr.bf16.gmra.mrb[0].mxu0 %v281
  %v927 = vpop.f32.mrb[0].mxu0
  %v928 = vadd.f32 %v879, %v927
  %v929 = vpop.f32.mrb[0].mxu0
  %v930 = vpop.f32.mrb[0].mxu0
  %v931 = vadd.f32 %v882, %v930
  %v932 = vpop.f32.mrb[0].mxu0
  %933 = vdwg.mxu0
  %934 = vmatprep.subr.bf16.mxu0 0
  %935 = vmatpush1.bf16.msra.mxu0 %v675
  %936 = vmatprep.subr.bf16.mxu0 0
  %937 = vmatpush1.bf16.msra.mxu0 %v676
  %938 = vmatprep.subr.bf16.mxu0 0
  %939 = vmatpush1.bf16.msra.mxu0 %v677
  %940 = vmatprep.subr.bf16.mxu0 0
  %941 = vmatpush1.bf16.msra.mxu0 %v678
  %942 = vmatprep.subr.bf16.mxu0 0
  %943 = vmatpush1.bf16.msra.mxu0 %v679
  %944 = vmatprep.subr.bf16.mxu0 0
  %945 = vmatpush1.bf16.msra.mxu0 %v680
  %946 = vmatprep.subr.bf16.mxu0 0
  %947 = vmatpush1.bf16.msra.mxu0 %v681
  %948 = vmatprep.subr.bf16.mxu0 0
  %949 = vmatpush1.bf16.msra.mxu0 %v682
  %950 = vmatprep.subr.bf16.mxu0 0
  %951 = vmatpush1.bf16.msra.mxu0 %v683
  %952 = vmatprep.subr.bf16.mxu0 0
  %953 = vmatpush1.bf16.msra.mxu0 %v684
  %954 = vmatprep.subr.bf16.mxu0 0
  %955 = vmatpush1.bf16.msra.mxu0 %v685
  %956 = vmatprep.subr.bf16.mxu0 0
  %957 = vmatpush1.bf16.msra.mxu0 %v686
  %958 = vmatprep.subr.bf16.mxu0 0
  %959 = vmatpush1.bf16.msra.mxu0 %v687
  %960 = vmatprep.subr.bf16.mxu0 0
  %961 = vmatpush1.bf16.msra.mxu0 %v688
  %962 = vmatprep.subr.bf16.mxu0 0
  %963 = vmatpush1.bf16.msra.mxu0 %v689
  %964 = vmatprep.subr.bf16.mxu0 0
  %965 = vmatpush1.bf16.msra.mxu0 %v690
  %966 = vmatprep.mubr.bf16.mxu0 %v274
  %967 = vmatmul.mubr.bf16.gmra.mrb[0].mxu0 %v273
  %v968 = vpop.f32.mrb[0].mxu0
  %v969 = vadd.f32 %v920, %v968
  %v970 = vpop.f32.mrb[0].mxu0
  %v971 = vpop.f32.mrb[0].mxu0
  %v972 = vadd.f32 %v923, %v971
  %v973 = vpop.f32.mrb[0].mxu0
  %974 = vmatprep.mubr.bf16.mxu0 %v284
  %975 = vmatmul.mubr.bf16.gmra.mrb[0].mxu0 %v283
  %v976 = vpop.f32.mrb[0].mxu0
  %v977 = vadd.f32 %v928, %v976
  %v978 = vpop.f32.mrb[0].mxu0
  %v979 = vpop.f32.mrb[0].mxu0
  %v980 = vadd.f32 %v931, %v979
  %v981 = vpop.f32.mrb[0].mxu0
  %982 = vdwg.mxu0
  %983 = vmatprep.subr.bf16.mxu0 0
  %984 = vmatpush1.bf16.msra.mxu0 %v691
  %985 = vmatprep.subr.bf16.mxu0 0
  %986 = vmatpush1.bf16.msra.mxu0 %v692
  %987 = vmatprep.subr.bf16.mxu0 0
  %988 = vmatpush1.bf16.msra.mxu0 %v693
  %989 = vmatprep.subr.bf16.mxu0 0
  %990 = vmatpush1.bf16.msra.mxu0 %v694
  %991 = vmatprep.subr.bf16.mxu0 0
  %992 = vmatpush1.bf16.msra.mxu0 %v695
  %993 = vmatprep.subr.bf16.mxu0 0
  %994 = vmatpush1.bf16.msra.mxu0 %v696
  %995 = vmatprep.subr.bf16.mxu0 0
  %996 = vmatpush1.bf16.msra.mxu0 %v697
  %997 = vmatprep.subr.bf16.mxu0 0
  %998 = vmatpush1.bf16.msra.mxu0 %v698
  %999 = vmatprep.subr.bf16.mxu0 0
  %1000 = vmatpush1.bf16.msra.mxu0 %v699
  %1001 = vmatprep.subr.bf16.mxu0 0
  %1002 = vmatpush1.bf16.msra.mxu0 %v700
  %1003 = vmatprep.subr.bf16.mxu0 0
  %1004 = vmatpush1.bf16.msra.mxu0 %v701
  %1005 = vmatprep.subr.bf16.mxu0 0
  %1006 = vmatpush1.bf16.msra.mxu0 %v702
  %1007 = vmatprep.subr.bf16.mxu0 0
  %1008 = vmatpush1.bf16.msra.mxu0 %v703
  %1009 = vmatprep.subr.bf16.mxu0 0
  %1010 = vmatpush1.bf16.msra.mxu0 %v704
  %1011 = vmatprep.subr.bf16.mxu0 0
  %1012 = vmatpush1.bf16.msra.mxu0 %v705
  %1013 = vmatprep.subr.bf16.mxu0 0
  %1014 = vmatpush1.bf16.msra.mxu0 %v706
  %1015 = vmatprep.mubr.bf16.mxu0 %v276
  %1016 = vmatmul.mubr.bf16.gmra.mrb[0].mxu0 %v275
  %v1017 = vpop.f32.mrb[0].mxu0
  %v1018 = vadd.f32 %v969, %v1017
  %v1019 = vpop.f32.mrb[0].mxu0
  %v1020 = vpop.f32.mrb[0].mxu0
  %v1021 = vadd.f32 %v972, %v1020
  %v1022 = vpop.f32.mrb[0].mxu0
  %1023 = vmatprep.mubr.bf16.mxu0 %v286
  %1024 = vmatmul.mubr.bf16.gmra.mrb[0].mxu0 %v285
  %v1025 = vpop.f32.mrb[0].mxu0
  %v1026 = vadd.f32 %v977, %v1025
  %v1027 = vpop.f32.mrb[0].mxu0
  %v1028 = vpop.f32.mrb[0].mxu0
  %v1029 = vadd.f32 %v980, %v1028
  %v1030 = vpop.f32.mrb[0].mxu0
  %1031 = vdwg.mxu0
  %v1032 = vadd.f32 %v23, %v1018
  %v1033 = vadd.f32 %v24, %v1021
  %v1034 = vadd.f32 %v25, %v1026
  %v1035 = vadd.f32 %v26, %v1029
  %1036 = vst [vmem:[#allocation2] sm:$0xff] %v1032
  %1037 = vst [vmem:[#allocation2 + $0x8] sm:$0xff] %v1033
  %1038 = vst [vmem:[#allocation2 + $0x10] sm:$0xff] %v1034
  %1039 = vst [vmem:[#allocation2 + $0x18] sm:$0xff] %v1035
  // Predicated region
  $region18: #{discriminator_forward.7} parent=0 // pred_check
    %p1040 = pneg %p15
  $region19: #{discriminator_forward.7} parent=0 // pred_check_branch
    %1042 = sbr.rel (%p1040) target = $region21
  $region20: #{discriminator_forward.7} parent=0 // pred_region
    %v1043 = vld [vmem:[#allocation2] sm:$0xff]
    %v1044 = vld [vmem:[#allocation2 + $0x8] sm:$0xff]
    %v1045 = vld [vmem:[#allocation2 + $0x10] sm:$0xff]
    %v1046 = vld [vmem:[#allocation2 + $0x18] sm:$0xff]
    %v1047 = vld [vmem:[%s2] sm:$0x1]
    %v1049 = vlaneseq
    %v1050 = vshrl.u32 %v1049, 7
    %v1051 = vsub.s32 0, %v1050
    %v1052 = vrot.slane %v1047, %v1051
    %v1054 = vadd.f32 %v1043, %v1052
    %v1055 = vadd.f32 %v1044, %v1052
    %v1056 = vadd.f32 %v1045, %v1052
    %v1057 = vadd.f32 %v1046, %v1052
    %vm1058 = vcmp.ge.f32.partialorder %v1054, 0.0
    %vm1059 = vcmp.ge.f32.partialorder %v1055, 0.0
    %vm1060 = vcmp.ge.f32.partialorder %v1056, 0.0
    %vm1061 = vcmp.ge.f32.partialorder %v1057, 0.0
    %v1062 = vmul.f32 %v1054, 0.2
    %v1063 = vmul.f32 %v1055, 0.2
    %v1064 = vmul.f32 %v1056, 0.2
    %v1065 = vmul.f32 %v1057, 0.2
    %v1066 = vsel %vm1058, %v1054, %v1062
    %v1067 = vsel %vm1059, %v1055, %v1063
    %v1068 = vsel %vm1060, %v1056, %v1064
    %v1069 = vsel %vm1061, %v1057, %v1065
    %v1070 = vpack.c.bf16 %v1067, %v1066
    %v1071 = vpack.c.bf16 %v1069, %v1068
    %v1074 = vunpack.c.l.b16 %v1070
    %v1075 = vunpack.c.h.b16 %v1070
    %v1076 = vunpack.c.l.b16 %v1071
    %v1077 = vunpack.c.h.b16 %v1071
    %v1078 = vpack.c.b16 %v1074, %v1074
    %v1079 = vpack.c.b16 %v1075, %v1075
    %v1080 = vpack.c.b16 %v1076, %v1076
    %v1081 = vpack.c.b16 %v1077, %v1077
    %1086 = vst [vmem:[%s3] sm:$0xf] %v1078
    %1087 = vst [vmem:[%s3 + $0x4] sm:$0xf] %v1079
    %1088 = vst [vmem:[%s3 + $0x8] sm:$0xf] %v1080
    %1089 = vst [vmem:[%s3 + $0xc] sm:$0xf] %v1081
  $region21: #{discriminator_forward.7} parent=0 // pred_fallthru
    _
  // Predicated region
  $region22: #{discriminator_forward.7} parent=0 // pred_check
    _
  $region23: #{discriminator_forward.7} parent=0 // pred_check_branch
    %1091 = sbr.rel (0) target = $region25
  $region24: #{discriminator_forward.7} parent=0 // pred_region
    _
  $region25: #{discriminator_forward.7} parent=0 // pred_fallthru
    _
  // Predicated region
  $region26: #{discriminator_forward.7} parent=0 // pred_check
    _
  $region27: #{discriminator_forward.7} parent=0 // pred_check_branch
    %1093 = sbr.rel (0) target = $region29
  $region28: #{discriminator_forward.7} parent=0 // pred_region
    _
  $region29: #{discriminator_forward.7} parent=0 // pred_fallthru
    _

// kernel: discriminator_forward.8
$region0: #{discriminator_forward.8}
  #allocation0 [shape = 'u32[]', space=smem, size = 0x4, offset = 0x4, fixed_abs, tag = 'smem constant byte address 0x4 - core index']
  #allocation1 [shape = 'u32[144,128]{1,0:T(1,128)}', space=vmem, size = 0x12000, scoped, tag = 'internal scratch']
  #allocation2 [shape = 'f32[16,128]{1,0:T(8,128)}', space=vmem, size = 0x2000, scoped, tag = 'scratch operand']
  %s0 = inlined_call_operand.vmem [shape: bf16[16,2432], index: 0, kind: input, shape index: {}]
  %s1 = inlined_call_operand.vmem [shape: bf16[2432,128], index: 1, kind: input, shape index: {}]
  %s2 = inlined_call_operand.vmem [shape: f32[1,128], index: 2, kind: input, shape index: {}]
  %s3 = inlined_call_operand.vmem [shape: bf16[16,128], index: 3, kind: output, shape index: {}]
  %s4 = sld [smem:[#allocation0]]
  $region30: #{discriminator_forward.8} parent=0
    _
  %s6 = ssub.s32 1, %s4
  %s7 = scalar_select 0, %s6, %s4
  // Predicated region
  $region2: #{discriminator_forward.8} parent=0 // pred_check
    _
  $region3: #{discriminator_forward.8} parent=0 // pred_check_branch
    %9 = sbr.rel (0) target = $region5
  $region4: #{discriminator_forward.8} parent=0 // pred_region
    _
  $region5: #{discriminator_forward.8} parent=0 // pred_fallthru
    _
  // Predicated region
  $region6: #{discriminator_forward.8} parent=0 // pred_check
    _
  $region7: #{discriminator_forward.8} parent=0 // pred_check_branch
    %11 = sbr.rel (0) target = $region9
  $region8: #{discriminator_forward.8} parent=0 // pred_region
    _
  $region9: #{discriminator_forward.8} parent=0 // pred_fallthru
    _
  // Predicated region
  $region10: #{discriminator_forward.8} parent=0 // pred_check
    _
  $region11: #{discriminator_forward.8} parent=0 // pred_check_branch
    %13 = sbr.rel (0) target = $region13
  $region12: #{discriminator_forward.8} parent=0 // pred_region
    _
  $region13: #{discriminator_forward.8} parent=0 // pred_fallthru
    _
  %p15 = scmp.eq.s32.totalorder 0, 0
  // Predicated region
  $region14: #{discriminator_forward.8} parent=0 // pred_check
    %p16 = pneg %p15
  $region15: #{discriminator_forward.8} parent=0 // pred_check_branch
    %18 = sbr.rel (%p16) target = $region17
  $region16: #{discriminator_forward.8} parent=0 // pred_region
    %19 = vst [vmem:[#allocation2] sm:$0xff] 0.0
    %20 = vst [vmem:[#allocation2 + $0x8] sm:$0xff] 0.0
  $region17: #{discriminator_forward.8} parent=0 // pred_fallthru
    _
  %v21 = vld [vmem:[#allocation2] sm:$0xff]
  %v22 = vld [vmem:[#allocation2 + $0x8] sm:$0xff]
  %v23 = vld [vmem:[%s0] sm:$0xff]
  %v24 = vld [vmem:[%s0 + $0x8] sm:$0xff]
  %v25 = vld [vmem:[%s0 + $0x10] sm:$0xff]
  %v26 = vld [vmem:[%s0 + $0x18] sm:$0xff]
  %v27 = vld [vmem:[%s0 + $0x20] sm:$0xff]
  %v28 = vld [vmem:[%s0 + $0x28] sm:$0xff]
  %v29 = vld [vmem:[%s0 + $0x30] sm:$0xff]
  %v30 = vld [vmem:[%s0 + $0x38] sm:$0xff]
  %v31 = vld [vmem:[%s0 + $0x40] sm:$0xff]
  %v32 = vld [vmem:[%s0 + $0x48] sm:$0xf]
  %v33 = vld [vmem:[%s0 + $0x4c] sm:$0xff]
  %v34 = vld [vmem:[%s0 + $0x54] sm:$0xff]
  %v35 = vld [vmem:[%s0 + $0x5c] sm:$0xff]
  %v36 = vld [vmem:[%s0 + $0x64] sm:$0xff]
  %v37 = vld [vmem:[%s0 + $0x6c] sm:$0xff]
  %v38 = vld [vmem:[%s0 + $0x74] sm:$0xff]
  %v39 = vld [vmem:[%s0 + $0x7c] sm:$0xff]
  %v40 = vld [vmem:[%s0 + $0x84] sm:$0xff]
  %v41 = vld [vmem:[%s0 + $0x8c] sm:$0xff]
  %v42 = vld [vmem:[%s0 + $0x94] sm:$0xf]
  %v43 = vld [vmem:[%s1] sm:$0xf]
  %v44 = vld [vmem:[%s1 + $0x4] sm:$0xf]
  %v45 = vld [vmem:[%s1 + $0x8] sm:$0xf]
  %v46 = vld [vmem:[%s1 + $0xc] sm:$0xf]
  %v47 = vld [vmem:[%s1 + $0x10] sm:$0xf]
  %v48 = vld [vmem:[%s1 + $0x14] sm:$0xf]
  %v49 = vld [vmem:[%s1 + $0x18] sm:$0xf]
  %v50 = vld [vmem:[%s1 + $0x1c] sm:$0xf]
  %v51 = vld [vmem:[%s1 + $0x20] sm:$0xf]
  %v52 = vld [vmem:[%s1 + $0x24] sm:$0xf]
  %v53 = vld [vmem:[%s1 + $0x28] sm:$0xf]
  %v54 = vld [vmem:[%s1 + $0x2c] sm:$0xf]
  %v55 = vld [vmem:[%s1 + $0x30] sm:$0xf]
  %v56 = vld [vmem:[%s1 + $0x34] sm:$0xf]
  %v57 = vld [vmem:[%s1 + $0x38] sm:$0xf]
  %v58 = vld [vmem:[%s1 + $0x3c] sm:$0xf]
  %v59 = vld [vmem:[%s1 + $0x40] sm:$0xf]
  %v60 = vld [vmem:[%s1 + $0x44] sm:$0xf]
  %v61 = vld [vmem:[%s1 + $0x48] sm:$0xf]
  %v62 = vld [vmem:[%s1 + $0x4c] sm:$0xf]
  %v63 = vld [vmem:[%s1 + $0x50] sm:$0xf]
  %v64 = vld [vmem:[%s1 + $0x54] sm:$0xf]
  %v65 = vld [vmem:[%s1 + $0x58] sm:$0xf]
  %v66 = vld [vmem:[%s1 + $0x5c] sm:$0xf]
  %v67 = vld [vmem:[%s1 + $0x60] sm:$0xf]
  %v68 = vld [vmem:[%s1 + $0x64] sm:$0xf]
  %v69 = vld [vmem:[%s1 + $0x68] sm:$0xf]
  %v70 = vld [vmem:[%s1 + $0x6c] sm:$0xf]
  %v71 = vld [vmem:[%s1 + $0x70] sm:$0xf]
  %v72 = vld [vmem:[%s1 + $0x74] sm:$0xf]
  %v73 = vld [vmem:[%s1 + $0x78] sm:$0xf]
  %v74 = vld [vmem:[%s1 + $0x7c] sm:$0xf]
  %v75 = vld [vmem:[%s1 + $0x80] sm:$0xf]
  %v76 = vld [vmem:[%s1 + $0x84] sm:$0xf]
  %v77 = vld [vmem:[%s1 + $0x88] sm:$0xf]
  %v78 = vld [vmem:[%s1 + $0x8c] sm:$0xf]
  %v79 = vld [vmem:[%s1 + $0x90] sm:$0xf]
  %v80 = vld [vmem:[%s1 + $0x94] sm:$0xf]
  %v81 = vld [vmem:[%s1 + $0x98] sm:$0xf]
  %v82 = vld [vmem:[%s1 + $0x9c] sm:$0xf]
  %v83 = vld [vmem:[%s1 + $0xa0] sm:$0xf]
  %v84 = vld [vmem:[%s1 + $0xa4] sm:$0xf]
  %v85 = vld [vmem:[%s1 + $0xa8] sm:$0xf]
  %v86 = vld [vmem:[%s1 + $0xac] sm:$0xf]
  %v87 = vld [vmem:[%s1 + $0xb0] sm:$0xf]
  %v88 = vld [vmem:[%s1 + $0xb4] sm:$0xf]
  %v89 = vld [vmem:[%s1 + $0xb8] sm:$0xf]
  %v90 = vld [vmem:[%s1 + $0xbc] sm:$0xf]
  %v91 = vld [vmem:[%s1 + $0xc0] sm:$0xf]
  %v92 = vld [vmem:[%s1 + $0xc4] sm:$0xf]
  %v93 = vld [vmem:[%s1 + $0xc8] sm:$0xf]
  %v94 = vld [vmem:[%s1 + $0xcc] sm:$0xf]
  %v95 = vld [vmem:[%s1 + $0xd0] sm:$0xf]
  %v96 = vld [vmem:[%s1 + $0xd4] sm:$0xf]
  %v97 = vld [vmem:[%s1 + $0xd8] sm:$0xf]
  %v98 = vld [vmem:[%s1 + $0xdc] sm:$0xf]
  %v99 = vld [vmem:[%s1 + $0xe0] sm:$0xf]
  %v100 = vld [vmem:[%s1 + $0xe4] sm:$0xf]
  %v101 = vld [vmem:[%s1 + $0xe8] sm:$0xf]
  %v102 = vld [vmem:[%s1 + $0xec] sm:$0xf]
  %v103 = vld [vmem:[%s1 + $0xf0] sm:$0xf]
  %v104 = vld [vmem:[%s1 + $0xf4] sm:$0xf]
  %v105 = vld [vmem:[%s1 + $0xf8] sm:$0xf]
  %v106 = vld [vmem:[%s1 + $0xfc] sm:$0xf]
  %v107 = vld [vmem:[%s1 + $0x100] sm:$0xf]
  %v108 = vld [vmem:[%s1 + $0x104] sm:$0xf]
  %v109 = vld [vmem:[%s1 + $0x108] sm:$0xf]
  %v110 = vld [vmem:[%s1 + $0x10c] sm:$0xf]
  %v111 = vld [vmem:[%s1 + $0x110] sm:$0xf]
  %v112 = vld [vmem:[%s1 + $0x114] sm:$0xf]
  %v113 = vld [vmem:[%s1 + $0x118] sm:$0xf]
  %v114 = vld [vmem:[%s1 + $0x11c] sm:$0xf]
  %v115 = vld [vmem:[%s1 + $0x120] sm:$0xf]
  %v116 = vld [vmem:[%s1 + $0x124] sm:$0xf]
  %v117 = vld [vmem:[%s1 + $0x128] sm:$0xf]
  %v118 = vld [vmem:[%s1 + $0x12c] sm:$0xf]
  %v119 = vld [vmem:[%s1 + $0x130] sm:$0xf]
  %v120 = vld [vmem:[%s1 + $0x134] sm:$0xf]
  %v121 = vld [vmem:[%s1 + $0x138] sm:$0xf]
  %v122 = vld [vmem:[%s1 + $0x13c] sm:$0xf]
  %v123 = vld [vmem:[%s1 + $0x140] sm:$0xf]
  %v124 = vld [vmem:[%s1 + $0x144] sm:$0xf]
  %v125 = vld [vmem:[%s1 + $0x148] sm:$0xf]
  %v126 = vld [vmem:[%s1 + $0x14c] sm:$0xf]
  %v127 = vld [vmem:[%s1 + $0x150] sm:$0xf]
  %v128 = vld [vmem:[%s1 + $0x154] sm:$0xf]
  %v129 = vld [vmem:[%s1 + $0x158] sm:$0xf]
  %v130 = vld [vmem:[%s1 + $0x15c] sm:$0xf]
  %v131 = vld [vmem:[%s1 + $0x160] sm:$0xf]
  %v132 = vld [vmem:[%s1 + $0x164] sm:$0xf]
  %v133 = vld [vmem:[%s1 + $0x168] sm:$0xf]
  %v134 = vld [vmem:[%s1 + $0x16c] sm:$0xf]
  %v135 = vld [vmem:[%s1 + $0x170] sm:$0xf]
  %v136 = vld [vmem:[%s1 + $0x174] sm:$0xf]
  %v137 = vld [vmem:[%s1 + $0x178] sm:$0xf]
  %v138 = vld [vmem:[%s1 + $0x17c] sm:$0xf]
  %v139 = vld [vmem:[%s1 + $0x180] sm:$0xf]
  %v140 = vld [vmem:[%s1 + $0x184] sm:$0xf]
  %v141 = vld [vmem:[%s1 + $0x188] sm:$0xf]
  %v142 = vld [vmem:[%s1 + $0x18c] sm:$0xf]
  %v143 = vld [vmem:[%s1 + $0x190] sm:$0xf]
  %v144 = vld [vmem:[%s1 + $0x194] sm:$0xf]
  %v145 = vld [vmem:[%s1 + $0x198] sm:$0xf]
  %v146 = vld [vmem:[%s1 + $0x19c] sm:$0xf]
  %v147 = vld [vmem:[%s1 + $0x1a0] sm:$0xf]
  %v148 = vld [vmem:[%s1 + $0x1a4] sm:$0xf]
  %v149 = vld [vmem:[%s1 + $0x1a8] sm:$0xf]
  %v150 = vld [vmem:[%s1 + $0x1ac] sm:$0xf]
  %v151 = vld [vmem:[%s1 + $0x1b0] sm:$0xf]
  %v152 = vld [vmem:[%s1 + $0x1b4] sm:$0xf]
  %v153 = vld [vmem:[%s1 + $0x1b8] sm:$0xf]
  %v154 = vld [vmem:[%s1 + $0x1bc] sm:$0xf]
  %v155 = vld [vmem:[%s1 + $0x1c0] sm:$0xf]
  %v156 = vld [vmem:[%s1 + $0x1c4] sm:$0xf]
  %v157 = vld [vmem:[%s1 + $0x1c8] sm:$0xf]
  %v158 = vld [vmem:[%s1 + $0x1cc] sm:$0xf]
  %v159 = vld [vmem:[%s1 + $0x1d0] sm:$0xf]
  %v160 = vld [vmem:[%s1 + $0x1d4] sm:$0xf]
  %v161 = vld [vmem:[%s1 + $0x1d8] sm:$0xf]
  %v162 = vld [vmem:[%s1 + $0x1dc] sm:$0xf]
  %v163 = vld [vmem:[%s1 + $0x1e0] sm:$0xf]
  %v164 = vld [vmem:[%s1 + $0x1e4] sm:$0xf]
  %v165 = vld [vmem:[%s1 + $0x1e8] sm:$0xf]
  %v166 = vld [vmem:[%s1 + $0x1ec] sm:$0xf]
  %v167 = vld [vmem:[%s1 + $0x1f0] sm:$0xf]
  %v168 = vld [vmem:[%s1 + $0x1f4] sm:$0xf]
  %v169 = vld [vmem:[%s1 + $0x1f8] sm:$0xf]
  %v170 = vld [vmem:[%s1 + $0x1fc] sm:$0xf]
  %v171 = vld [vmem:[%s1 + $0x200] sm:$0xf]
  %v172 = vld [vmem:[%s1 + $0x204] sm:$0xf]
  %v173 = vld [vmem:[%s1 + $0x208] sm:$0xf]
  %v174 = vld [vmem:[%s1 + $0x20c] sm:$0xf]
  %v175 = vld [vmem:[%s1 + $0x210] sm:$0xf]
  %v176 = vld [vmem:[%s1 + $0x214] sm:$0xf]
  %v177 = vld [vmem:[%s1 + $0x218] sm:$0xf]
  %v178 = vld [vmem:[%s1 + $0x21c] sm:$0xf]
  %v179 = vld [vmem:[%s1 + $0x220] sm:$0xf]
  %v180 = vld [vmem:[%s1 + $0x224] sm:$0xf]
  %v181 = vld [vmem:[%s1 + $0x228] sm:$0xf]
  %v182 = vld [vmem:[%s1 + $0x22c] sm:$0xf]
  %v183 = vld [vmem:[%s1 + $0x230] sm:$0xf]
  %v184 = vld [vmem:[%s1 + $0x234] sm:$0xf]
  %v185 = vld [vmem:[%s1 + $0x238] sm:$0xf]
  %v186 = vld [vmem:[%s1 + $0x23c] sm:$0xf]
  %v187 = vld [vmem:[%s1 + $0x240] sm:$0xf]
  %v188 = vld [vmem:[%s1 + $0x244] sm:$0xf]
  %v189 = vld [vmem:[%s1 + $0x248] sm:$0xf]
  %v190 = vld [vmem:[%s1 + $0x24c] sm:$0xf]
  %v191 = vld [vmem:[%s1 + $0x250] sm:$0xf]
  %v192 = vld [vmem:[%s1 + $0x254] sm:$0xf]
  %v193 = vld [vmem:[%s1 + $0x258] sm:$0xf]
  %v194 = vld [vmem:[%s1 + $0x25c] sm:$0xf]
  %v195 = vld [vmem:[%s1 + $0x260] sm:$0xf]
  %v196 = vld [vmem:[%s1 + $0x264] sm:$0xf]
  %v197 = vld [vmem:[%s1 + $0x268] sm:$0xf]
  %v198 = vld [vmem:[%s1 + $0x26c] sm:$0xf]
  %v199 = vld [vmem:[%s1 + $0x270] sm:$0xf]
  %v200 = vld [vmem:[%s1 + $0x274] sm:$0xf]
  %v201 = vld [vmem:[%s1 + $0x278] sm:$0xf]
  %v202 = vld [vmem:[%s1 + $0x27c] sm:$0xf]
  %v203 = vld [vmem:[%s1 + $0x280] sm:$0xf]
  %v204 = vld [vmem:[%s1 + $0x284] sm:$0xf]
  %v205 = vld [vmem:[%s1 + $0x288] sm:$0xf]
  %v206 = vld [vmem:[%s1 + $0x28c] sm:$0xf]
  %v207 = vld [vmem:[%s1 + $0x290] sm:$0xf]
  %v208 = vld [vmem:[%s1 + $0x294] sm:$0xf]
  %v209 = vld [vmem:[%s1 + $0x298] sm:$0xf]
  %v210 = vld [vmem:[%s1 + $0x29c] sm:$0xf]
  %v211 = vld [vmem:[%s1 + $0x2a0] sm:$0xf]
  %v212 = vld [vmem:[%s1 + $0x2a4] sm:$0xf]
  %v213 = vld [vmem:[%s1 + $0x2a8] sm:$0xf]
  %v214 = vld [vmem:[%s1 + $0x2ac] sm:$0xf]
  %v215 = vld [vmem:[%s1 + $0x2b0] sm:$0xf]
  %v216 = vld [vmem:[%s1 + $0x2b4] sm:$0xf]
  %v217 = vld [vmem:[%s1 + $0x2b8] sm:$0xf]
  %v218 = vld [vmem:[%s1 + $0x2bc] sm:$0xf]
  %v219 = vld [vmem:[%s1 + $0x2c0] sm:$0xf]
  %v220 = vld [vmem:[%s1 + $0x2c4] sm:$0xf]
  %v221 = vld [vmem:[%s1 + $0x2c8] sm:$0xf]
  %v222 = vld [vmem:[%s1 + $0x2cc] sm:$0xf]
  %v223 = vld [vmem:[%s1 + $0x2d0] sm:$0xf]
  %v224 = vld [vmem:[%s1 + $0x2d4] sm:$0xf]
  %v225 = vld [vmem:[%s1 + $0x2d8] sm:$0xf]
  %v226 = vld [vmem:[%s1 + $0x2dc] sm:$0xf]
  %v227 = vld [vmem:[%s1 + $0x2e0] sm:$0xf]
  %v228 = vld [vmem:[%s1 + $0x2e4] sm:$0xf]
  %v229 = vld [vmem:[%s1 + $0x2e8] sm:$0xf]
  %v230 = vld [vmem:[%s1 + $0x2ec] sm:$0xf]
  %v231 = vld [vmem:[%s1 + $0x2f0] sm:$0xf]
  %v232 = vld [vmem:[%s1 + $0x2f4] sm:$0xf]
  %v233 = vld [vmem:[%s1 + $0x2f8] sm:$0xf]
  %v234 = vld [vmem:[%s1 + $0x2fc] sm:$0xf]
  %v235 = vld [vmem:[%s1 + $0x300] sm:$0xf]
  %v236 = vld [vmem:[%s1 + $0x304] sm:$0xf]
  %v237 = vld [vmem:[%s1 + $0x308] sm:$0xf]
  %v238 = vld [vmem:[%s1 + $0x30c] sm:$0xf]
  %v239 = vld [vmem:[%s1 + $0x310] sm:$0xf]
  %v240 = vld [vmem:[%s1 + $0x314] sm:$0xf]
  %v241 = vld [vmem:[%s1 + $0x318] sm:$0xf]
  %v242 = vld [vmem:[%s1 + $0x31c] sm:$0xf]
  %v243 = vld [vmem:[%s1 + $0x320] sm:$0xf]
  %v244 = vld [vmem:[%s1 + $0x324] sm:$0xf]
  %v245 = vld [vmem:[%s1 + $0x328] sm:$0xf]
  %v246 = vld [vmem:[%s1 + $0x32c] sm:$0xf]
  %v247 = vld [vmem:[%s1 + $0x330] sm:$0xf]
  %v248 = vld [vmem:[%s1 + $0x334] sm:$0xf]
  %v249 = vld [vmem:[%s1 + $0x338] sm:$0xf]
  %v250 = vld [vmem:[%s1 + $0x33c] sm:$0xf]
  %v251 = vld [vmem:[%s1 + $0x340] sm:$0xf]
  %v252 = vld [vmem:[%s1 + $0x344] sm:$0xf]
  %v253 = vld [vmem:[%s1 + $0x348] sm:$0xf]
  %v254 = vld [vmem:[%s1 + $0x34c] sm:$0xf]
  %v255 = vld [vmem:[%s1 + $0x350] sm:$0xf]
  %v256 = vld [vmem:[%s1 + $0x354] sm:$0xf]
  %v257 = vld [vmem:[%s1 + $0x358] sm:$0xf]
  %v258 = vld [vmem:[%s1 + $0x35c] sm:$0xf]
  %v259 = vld [vmem:[%s1 + $0x360] sm:$0xf]
  %v260 = vld [vmem:[%s1 + $0x364] sm:$0xf]
  %v261 = vld [vmem:[%s1 + $0x368] sm:$0xf]
  %v262 = vld [vmem:[%s1 + $0x36c] sm:$0xf]
  %v263 = vld [vmem:[%s1 + $0x370] sm:$0xf]
  %v264 = vld [vmem:[%s1 + $0x374] sm:$0xf]
  %v265 = vld [vmem:[%s1 + $0x378] sm:$0xf]
  %v266 = vld [vmem:[%s1 + $0x37c] sm:$0xf]
  %v267 = vld [vmem:[%s1 + $0x380] sm:$0xf]
  %v268 = vld [vmem:[%s1 + $0x384] sm:$0xf]
  %v269 = vld [vmem:[%s1 + $0x388] sm:$0xf]
  %v270 = vld [vmem:[%s1 + $0x38c] sm:$0xf]
  %v271 = vld [vmem:[%s1 + $0x390] sm:$0xf]
  %v272 = vld [vmem:[%s1 + $0x394] sm:$0xf]
  %v273 = vld [vmem:[%s1 + $0x398] sm:$0xf]
  %v274 = vld [vmem:[%s1 + $0x39c] sm:$0xf]
  %v275 = vld [vmem:[%s1 + $0x3a0] sm:$0xf]
  %v276 = vld [vmem:[%s1 + $0x3a4] sm:$0xf]
  %v277 = vld [vmem:[%s1 + $0x3a8] sm:$0xf]
  %v278 = vld [vmem:[%s1 + $0x3ac] sm:$0xf]
  %v279 = vld [vmem:[%s1 + $0x3b0] sm:$0xf]
  %v280 = vld [vmem:[%s1 + $0x3b4] sm:$0xf]
  %v281 = vld [vmem:[%s1 + $0x3b8] sm:$0xf]
  %v282 = vld [vmem:[%s1 + $0x3bc] sm:$0xf]
  %v283 = vld [vmem:[%s1 + $0x3c0] sm:$0xf]
  %v284 = vld [vmem:[%s1 + $0x3c4] sm:$0xf]
  %v285 = vld [vmem:[%s1 + $0x3c8] sm:$0xf]
  %v286 = vld [vmem:[%s1 + $0x3cc] sm:$0xf]
  %v287 = vld [vmem:[%s1 + $0x3d0] sm:$0xf]
  %v288 = vld [vmem:[%s1 + $0x3d4] sm:$0xf]
  %v289 = vld [vmem:[%s1 + $0x3d8] sm:$0xf]
  %v290 = vld [vmem:[%s1 + $0x3dc] sm:$0xf]
  %v291 = vld [vmem:[%s1 + $0x3e0] sm:$0xf]
  %v292 = vld [vmem:[%s1 + $0x3e4] sm:$0xf]
  %v293 = vld [vmem:[%s1 + $0x3e8] sm:$0xf]
  %v294 = vld [vmem:[%s1 + $0x3ec] sm:$0xf]
  %v295 = vld [vmem:[%s1 + $0x3f0] sm:$0xf]
  %v296 = vld [vmem:[%s1 + $0x3f4] sm:$0xf]
  %v297 = vld [vmem:[%s1 + $0x3f8] sm:$0xf]
  %v298 = vld [vmem:[%s1 + $0x3fc] sm:$0xf]
  %v299 = vld [vmem:[%s1 + $0x400] sm:$0xf]
  %v300 = vld [vmem:[%s1 + $0x404] sm:$0xf]
  %v301 = vld [vmem:[%s1 + $0x408] sm:$0xf]
  %v302 = vld [vmem:[%s1 + $0x40c] sm:$0xf]
  %v303 = vld [vmem:[%s1 + $0x410] sm:$0xf]
  %v304 = vld [vmem:[%s1 + $0x414] sm:$0xf]
  %v305 = vld [vmem:[%s1 + $0x418] sm:$0xf]
  %v306 = vld [vmem:[%s1 + $0x41c] sm:$0xf]
  %v307 = vld [vmem:[%s1 + $0x420] sm:$0xf]
  %v308 = vld [vmem:[%s1 + $0x424] sm:$0xf]
  %v309 = vld [vmem:[%s1 + $0x428] sm:$0xf]
  %v310 = vld [vmem:[%s1 + $0x42c] sm:$0xf]
  %v311 = vld [vmem:[%s1 + $0x430] sm:$0xf]
  %v312 = vld [vmem:[%s1 + $0x434] sm:$0xf]
  %v313 = vld [vmem:[%s1 + $0x438] sm:$0xf]
  %v314 = vld [vmem:[%s1 + $0x43c] sm:$0xf]
  %v315 = vld [vmem:[%s1 + $0x440] sm:$0xf]
  %v316 = vld [vmem:[%s1 + $0x444] sm:$0xf]
  %v317 = vld [vmem:[%s1 + $0x448] sm:$0xf]
  %v318 = vld [vmem:[%s1 + $0x44c] sm:$0xf]
  %v319 = vld [vmem:[%s1 + $0x450] sm:$0xf]
  %v320 = vld [vmem:[%s1 + $0x454] sm:$0xf]
  %v321 = vld [vmem:[%s1 + $0x458] sm:$0xf]
  %v322 = vld [vmem:[%s1 + $0x45c] sm:$0xf]
  %v323 = vld [vmem:[%s1 + $0x460] sm:$0xf]
  %v324 = vld [vmem:[%s1 + $0x464] sm:$0xf]
  %v325 = vld [vmem:[%s1 + $0x468] sm:$0xf]
  %v326 = vld [vmem:[%s1 + $0x46c] sm:$0xf]
  %v327 = vld [vmem:[%s1 + $0x470] sm:$0xf]
  %v328 = vld [vmem:[%s1 + $0x474] sm:$0xf]
  %v329 = vld [vmem:[%s1 + $0x478] sm:$0xf]
  %v330 = vld [vmem:[%s1 + $0x47c] sm:$0xf]
  %v331 = vld [vmem:[%s1 + $0x480] sm:$0xf]
  %v332 = vld [vmem:[%s1 + $0x484] sm:$0xf]
  %v333 = vld [vmem:[%s1 + $0x488] sm:$0xf]
  %v334 = vld [vmem:[%s1 + $0x48c] sm:$0xf]
  %v335 = vld [vmem:[%s1 + $0x490] sm:$0xf]
  %v336 = vld [vmem:[%s1 + $0x494] sm:$0xf]
  %v337 = vld [vmem:[%s1 + $0x498] sm:$0xf]
  %v338 = vld [vmem:[%s1 + $0x49c] sm:$0xf]
  %v339 = vld [vmem:[%s1 + $0x4a0] sm:$0xf]
  %v340 = vld [vmem:[%s1 + $0x4a4] sm:$0xf]
  %v341 = vld [vmem:[%s1 + $0x4a8] sm:$0xf]
  %v342 = vld [vmem:[%s1 + $0x4ac] sm:$0xf]
  %v343 = vld [vmem:[%s1 + $0x4b0] sm:$0xf]
  %v344 = vld [vmem:[%s1 + $0x4b4] sm:$0xf]
  %v345 = vld [vmem:[%s1 + $0x4b8] sm:$0xf]
  %v346 = vld [vmem:[%s1 + $0x4bc] sm:$0xf]
  %v367 = vunpack.c.l.b16 %v23
  %v368 = vunpack.c.h.b16 %v23
  %v369 = vunpack.c.l.b16 %v24
  %v370 = vunpack.c.h.b16 %v24
  %v371 = vunpack.c.l.b16 %v25
  %v372 = vunpack.c.h.b16 %v25
  %v373 = vunpack.c.l.b16 %v26
  %v374 = vunpack.c.h.b16 %v26
  %v375 = vunpack.c.l.b16 %v27
  %v376 = vunpack.c.h.b16 %v27
  %v377 = vunpack.c.l.b16 %v28
  %v378 = vunpack.c.h.b16 %v28
  %v379 = vunpack.c.l.b16 %v29
  %v380 = vunpack.c.h.b16 %v29
  %v381 = vunpack.c.l.b16 %v30
  %v382 = vunpack.c.h.b16 %v30
  %v383 = vunpack.c.l.b16 %v31
  %v384 = vunpack.c.h.b16 %v31
  %v385 = vunpack.c.l.b16 %v32
  %v386 = vunpack.c.l.b16 %v33
  %v387 = vunpack.c.h.b16 %v33
  %v388 = vunpack.c.l.b16 %v34
  %v389 = vunpack.c.h.b16 %v34
  %v390 = vunpack.c.l.b16 %v35
  %v391 = vunpack.c.h.b16 %v35
  %v392 = vunpack.c.l.b16 %v36
  %v393 = vunpack.c.h.b16 %v36
  %v394 = vunpack.c.l.b16 %v37
  %v395 = vunpack.c.h.b16 %v37
  %v396 = vunpack.c.l.b16 %v38
  %v397 = vunpack.c.h.b16 %v38
  %v398 = vunpack.c.l.b16 %v39
  %v399 = vunpack.c.h.b16 %v39
  %v400 = vunpack.c.l.b16 %v40
  %v401 = vunpack.c.h.b16 %v40
  %v402 = vunpack.c.l.b16 %v41
  %v403 = vunpack.c.h.b16 %v41
  %v404 = vunpack.c.l.b16 %v42
  %v405 = vpack.c.b16 %v386, %v367
  %v406 = vpack.c.b16 %v387, %v368
  %v407 = vpack.c.b16 %v388, %v369
  %v408 = vpack.c.b16 %v389, %v370
  %v409 = vpack.c.b16 %v390, %v371
  %v410 = vpack.c.b16 %v391, %v372
  %v411 = vpack.c.b16 %v392, %v373
  %v412 = vpack.c.b16 %v393, %v374
  %v413 = vpack.c.b16 %v394, %v375
  %v414 = vpack.c.b16 %v395, %v376
  %v415 = vpack.c.b16 %v396, %v377
  %v416 = vpack.c.b16 %v397, %v378
  %v417 = vpack.c.b16 %v398, %v379
  %v418 = vpack.c.b16 %v399, %v380
  %v419 = vpack.c.b16 %v400, %v381
  %v420 = vpack.c.b16 %v401, %v382
  %v421 = vpack.c.b16 %v402, %v383
  %v422 = vpack.c.b16 %v403, %v384
  %v423 = vpack.c.b16 %v404, %v385
  %v747 = vunpack.c.l.b16 %v43
  %v748 = vunpack.c.l.b16 %v44
  %v749 = vunpack.c.l.b16 %v45
  %v750 = vunpack.c.l.b16 %v46
  %v751 = vunpack.c.l.b16 %v47
  %v752 = vunpack.c.l.b16 %v48
  %v753 = vunpack.c.l.b16 %v49
  %v754 = vunpack.c.l.b16 %v50
  %v755 = vunpack.c.l.b16 %v51
  %v756 = vunpack.c.l.b16 %v52
  %v757 = vunpack.c.l.b16 %v53
  %v758 = vunpack.c.l.b16 %v54
  %v759 = vunpack.c.l.b16 %v55
  %v760 = vunpack.c.l.b16 %v56
  %v761 = vunpack.c.l.b16 %v57
  %v762 = vunpack.c.l.b16 %v58
  %v763 = vunpack.c.l.b16 %v59
  %v764 = vunpack.c.l.b16 %v60
  %v765 = vunpack.c.l.b16 %v61
  %v766 = vunpack.c.l.b16 %v62
  %v767 = vunpack.c.l.b16 %v63
  %v768 = vunpack.c.l.b16 %v64
  %v769 = vunpack.c.l.b16 %v65
  %v770 = vunpack.c.l.b16 %v66
  %v771 = vunpack.c.l.b16 %v67
  %v772 = vunpack.c.l.b16 %v68
  %v773 = vunpack.c.l.b16 %v69
  %v774 = vunpack.c.l.b16 %v70
  %v775 = vunpack.c.l.b16 %v71
  %v776 = vunpack.c.l.b16 %v72
  %v777 = vunpack.c.l.b16 %v73
  %v778 = vunpack.c.l.b16 %v74
  %v779 = vunpack.c.l.b16 %v75
  %v780 = vunpack.c.l.b16 %v76
  %v781 = vunpack.c.l.b16 %v77
  %v782 = vunpack.c.l.b16 %v78
  %v783 = vunpack.c.l.b16 %v79
  %v784 = vunpack.c.l.b16 %v80
  %v785 = vunpack.c.l.b16 %v81
  %v786 = vunpack.c.l.b16 %v82
  %v787 = vunpack.c.l.b16 %v83
  %v788 = vunpack.c.l.b16 %v84
  %v789 = vunpack.c.l.b16 %v85
  %v790 = vunpack.c.l.b16 %v86
  %v791 = vunpack.c.l.b16 %v87
  %v792 = vunpack.c.l.b16 %v88
  %v793 = vunpack.c.l.b16 %v89
  %v794 = vunpack.c.l.b16 %v90
  %v795 = vunpack.c.l.b16 %v91
  %v796 = vunpack.c.l.b16 %v92
  %v797 = vunpack.c.l.b16 %v93
  %v798 = vunpack.c.l.b16 %v94
  %v799 = vunpack.c.l.b16 %v95
  %v800 = vunpack.c.l.b16 %v96
  %v801 = vunpack.c.l.b16 %v97
  %v802 = vunpack.c.l.b16 %v98
  %v803 = vunpack.c.l.b16 %v99
  %v804 = vunpack.c.l.b16 %v100
  %v805 = vunpack.c.l.b16 %v101
  %v806 = vunpack.c.l.b16 %v102
  %v807 = vunpack.c.l.b16 %v103
  %v808 = vunpack.c.l.b16 %v104
  %v809 = vunpack.c.l.b16 %v105
  %v810 = vunpack.c.l.b16 %v106
  %v811 = vunpack.c.l.b16 %v107
  %v812 = vunpack.c.l.b16 %v108
  %v813 = vunpack.c.l.b16 %v109
  %v814 = vunpack.c.l.b16 %v110
  %v815 = vunpack.c.l.b16 %v111
  %v816 = vunpack.c.l.b16 %v112
  %v817 = vunpack.c.l.b16 %v113
  %v818 = vunpack.c.l.b16 %v114
  %v819 = vunpack.c.l.b16 %v115
  %v820 = vunpack.c.l.b16 %v116
  %v821 = vunpack.c.l.b16 %v117
  %v822 = vunpack.c.l.b16 %v118
  %v823 = vunpack.c.l.b16 %v119
  %v824 = vunpack.c.l.b16 %v120
  %v825 = vunpack.c.l.b16 %v121
  %v826 = vunpack.c.l.b16 %v122
  %v827 = vunpack.c.l.b16 %v123
  %v828 = vunpack.c.l.b16 %v124
  %v829 = vunpack.c.l.b16 %v125
  %v830 = vunpack.c.l.b16 %v126
  %v831 = vunpack.c.l.b16 %v127
  %v832 = vunpack.c.l.b16 %v128
  %v833 = vunpack.c.l.b16 %v129
  %v834 = vunpack.c.l.b16 %v130
  %v835 = vunpack.c.l.b16 %v131
  %v836 = vunpack.c.l.b16 %v132
  %v837 = vunpack.c.l.b16 %v133
  %v838 = vunpack.c.l.b16 %v134
  %v839 = vunpack.c.l.b16 %v135
  %v840 = vunpack.c.l.b16 %v136
  %v841 = vunpack.c.l.b16 %v137
  %v842 = vunpack.c.l.b16 %v138
  %v843 = vunpack.c.l.b16 %v139
  %v844 = vunpack.c.l.b16 %v140
  %v845 = vunpack.c.l.b16 %v141
  %v846 = vunpack.c.l.b16 %v142
  %v847 = vunpack.c.l.b16 %v143
  %v848 = vunpack.c.l.b16 %v144
  %v849 = vunpack.c.l.b16 %v145
  %v850 = vunpack.c.l.b16 %v146
  %v851 = vunpack.c.l.b16 %v147
  %v852 = vunpack.c.l.b16 %v148
  %v853 = vunpack.c.l.b16 %v149
  %v854 = vunpack.c.l.b16 %v150
  %v855 = vunpack.c.l.b16 %v151
  %v856 = vunpack.c.l.b16 %v152
  %v857 = vunpack.c.l.b16 %v153
  %v858 = vunpack.c.l.b16 %v154
  %v859 = vunpack.c.l.b16 %v155
  %v860 = vunpack.c.l.b16 %v156
  %v861 = vunpack.c.l.b16 %v157
  %v862 = vunpack.c.l.b16 %v158
  %v863 = vunpack.c.l.b16 %v159
  %v864 = vunpack.c.l.b16 %v160
  %v865 = vunpack.c.l.b16 %v161
  %v866 = vunpack.c.l.b16 %v162
  %v867 = vunpack.c.l.b16 %v163
  %v868 = vunpack.c.l.b16 %v164
  %v869 = vunpack.c.l.b16 %v165
  %v870 = vunpack.c.l.b16 %v166
  %v871 = vunpack.c.l.b16 %v167
  %v872 = vunpack.c.l.b16 %v168
  %v873 = vunpack.c.l.b16 %v169
  %v874 = vunpack.c.l.b16 %v170
  %v875 = vunpack.c.l.b16 %v171
  %v876 = vunpack.c.l.b16 %v172
  %v877 = vunpack.c.l.b16 %v173
  %v878 = vunpack.c.l.b16 %v174
  %v879 = vunpack.c.l.b16 %v175
  %v880 = vunpack.c.l.b16 %v176
  %v881 = vunpack.c.l.b16 %v177
  %v882 = vunpack.c.l.b16 %v178
  %v883 = vunpack.c.l.b16 %v179
  %v884 = vunpack.c.l.b16 %v180
  %v885 = vunpack.c.l.b16 %v181
  %v886 = vunpack.c.l.b16 %v182
  %v887 = vunpack.c.l.b16 %v183
  %v888 = vunpack.c.l.b16 %v184
  %v889 = vunpack.c.l.b16 %v185
  %v890 = vunpack.c.l.b16 %v186
  %v891 = vunpack.c.l.b16 %v187
  %v892 = vunpack.c.l.b16 %v188
  %v893 = vunpack.c.l.b16 %v189
  %v894 = vunpack.c.l.b16 %v190
  %v895 = vunpack.c.l.b16 %v191
  %v896 = vunpack.c.l.b16 %v192
  %v897 = vunpack.c.l.b16 %v193
  %v898 = vunpack.c.l.b16 %v194
  %v899 = vunpack.c.l.b16 %v195
  %v900 = vunpack.c.l.b16 %v196
  %v901 = vunpack.c.l.b16 %v197
  %v902 = vunpack.c.l.b16 %v198
  %v903 = vunpack.c.l.b16 %v199
  %v904 = vunpack.c.l.b16 %v200
  %v905 = vunpack.c.l.b16 %v201
  %v906 = vunpack.c.l.b16 %v202
  %v907 = vunpack.c.l.b16 %v203
  %v908 = vunpack.c.l.b16 %v204
  %v909 = vunpack.c.l.b16 %v205
  %v910 = vunpack.c.l.b16 %v206
  %v911 = vunpack.c.l.b16 %v207
  %v912 = vunpack.c.l.b16 %v208
  %v913 = vunpack.c.l.b16 %v209
  %v914 = vunpack.c.l.b16 %v210
  %v915 = vunpack.c.l.b16 %v211
  %v916 = vunpack.c.l.b16 %v212
  %v917 = vunpack.c.l.b16 %v213
  %v918 = vunpack.c.l.b16 %v214
  %v919 = vunpack.c.l.b16 %v215
  %v920 = vunpack.c.l.b16 %v216
  %v921 = vunpack.c.l.b16 %v217
  %v922 = vunpack.c.l.b16 %v218
  %v923 = vunpack.c.l.b16 %v219
  %v924 = vunpack.c.l.b16 %v220
  %v925 = vunpack.c.l.b16 %v221
  %v926 = vunpack.c.l.b16 %v222
  %v927 = vunpack.c.l.b16 %v223
  %v928 = vunpack.c.l.b16 %v224
  %v929 = vunpack.c.l.b16 %v225
  %v930 = vunpack.c.l.b16 %v226
  %v931 = vunpack.c.l.b16 %v227
  %v932 = vunpack.c.l.b16 %v228
  %v933 = vunpack.c.l.b16 %v229
  %v934 = vunpack.c.l.b16 %v230
  %v935 = vunpack.c.l.b16 %v231
  %v936 = vunpack.c.l.b16 %v232
  %v937 = vunpack.c.l.b16 %v233
  %v938 = vunpack.c.l.b16 %v234
  %v939 = vunpack.c.l.b16 %v235
  %v940 = vunpack.c.l.b16 %v236
  %v941 = vunpack.c.l.b16 %v237
  %v942 = vunpack.c.l.b16 %v238
  %v943 = vunpack.c.l.b16 %v239
  %v944 = vunpack.c.l.b16 %v240
  %v945 = vunpack.c.l.b16 %v241
  %v946 = vunpack.c.l.b16 %v242
  %v947 = vunpack.c.l.b16 %v243
  %v948 = vunpack.c.l.b16 %v244
  %v949 = vunpack.c.l.b16 %v245
  %v950 = vunpack.c.l.b16 %v246
  %v951 = vunpack.c.l.b16 %v247
  %v952 = vunpack.c.l.b16 %v248
  %v953 = vunpack.c.l.b16 %v249
  %v954 = vunpack.c.l.b16 %v250
  %v955 = vunpack.c.l.b16 %v251
  %v956 = vunpack.c.l.b16 %v252
  %v957 = vunpack.c.l.b16 %v253
  %v958 = vunpack.c.l.b16 %v254
  %v959 = vunpack.c.l.b16 %v255
  %v960 = vunpack.c.l.b16 %v256
  %v961 = vunpack.c.l.b16 %v257
  %v962 = vunpack.c.l.b16 %v258
  %v963 = vunpack.c.l.b16 %v259
  %v964 = vunpack.c.l.b16 %v260
  %v965 = vunpack.c.l.b16 %v261
  %v966 = vunpack.c.l.b16 %v262
  %v967 = vunpack.c.l.b16 %v263
  %v968 = vunpack.c.l.b16 %v264
  %v969 = vunpack.c.l.b16 %v265
  %v970 = vunpack.c.l.b16 %v266
  %v971 = vunpack.c.l.b16 %v267
  %v972 = vunpack.c.l.b16 %v268
  %v973 = vunpack.c.l.b16 %v269
  %v974 = vunpack.c.l.b16 %v270
  %v975 = vunpack.c.l.b16 %v271
  %v976 = vunpack.c.l.b16 %v272
  %v977 = vunpack.c.l.b16 %v273
  %v978 = vunpack.c.l.b16 %v274
  %v979 = vunpack.c.l.b16 %v275
  %v980 = vunpack.c.l.b16 %v276
  %v981 = vunpack.c.l.b16 %v277
  %v982 = vunpack.c.l.b16 %v278
  %v983 = vunpack.c.l.b16 %v279
  %v984 = vunpack.c.l.b16 %v280
  %v985 = vunpack.c.l.b16 %v281
  %v986 = vunpack.c.l.b16 %v282
  %v987 = vunpack.c.l.b16 %v283
  %v988 = vunpack.c.l.b16 %v284
  %v989 = vunpack.c.l.b16 %v285
  %v990 = vunpack.c.l.b16 %v286
  %v991 = vunpack.c.l.b16 %v287
  %v992 = vunpack.c.l.b16 %v288
  %v993 = vunpack.c.l.b16 %v289
  %v994 = vunpack.c.l.b16 %v290
  %v995 = vunpack.c.l.b16 %v291
  %v996 = vunpack.c.l.b16 %v292
  %v997 = vunpack.c.l.b16 %v293
  %v998 = vunpack.c.l.b16 %v294
  %v999 = vunpack.c.l.b16 %v295
  %v1000 = vunpack.c.l.b16 %v296
  %v1001 = vunpack.c.l.b16 %v297
  %v1002 = vunpack.c.l.b16 %v298
  %v1003 = vunpack.c.l.b16 %v299
  %v1004 = vunpack.c.l.b16 %v300
  %v1005 = vunpack.c.l.b16 %v301
  %v1006 = vunpack.c.l.b16 %v302
  %v1007 = vunpack.c.l.b16 %v303
  %v1008 = vunpack.c.l.b16 %v304
  %v1009 = vunpack.c.l.b16 %v305
  %v1010 = vunpack.c.l.b16 %v306
  %v1011 = vunpack.c.l.b16 %v307
  %v1012 = vunpack.c.l.b16 %v308
  %v1013 = vunpack.c.l.b16 %v309
  %v1014 = vunpack.c.l.b16 %v310
  %v1015 = vunpack.c.l.b16 %v311
  %v1016 = vunpack.c.l.b16 %v312
  %v1017 = vunpack.c.l.b16 %v313
  %v1018 = vunpack.c.l.b16 %v314
  %v1019 = vunpack.c.l.b16 %v315
  %v1020 = vunpack.c.l.b16 %v316
  %v1021 = vunpack.c.l.b16 %v317
  %v1022 = vunpack.c.l.b16 %v318
  %v1023 = vunpack.c.l.b16 %v319
  %v1024 = vunpack.c.l.b16 %v320
  %v1025 = vunpack.c.l.b16 %v321
  %v1026 = vunpack.c.l.b16 %v322
  %v1027 = vunpack.c.l.b16 %v323
  %v1028 = vunpack.c.l.b16 %v324
  %v1029 = vunpack.c.l.b16 %v325
  %v1030 = vunpack.c.l.b16 %v326
  %v1031 = vunpack.c.l.b16 %v327
  %v1032 = vunpack.c.l.b16 %v328
  %v1033 = vunpack.c.l.b16 %v329
  %v1034 = vunpack.c.l.b16 %v330
  %v1035 = vunpack.c.l.b16 %v331
  %v1036 = vunpack.c.l.b16 %v332
  %v1037 = vunpack.c.l.b16 %v333
  %v1038 = vunpack.c.l.b16 %v334
  %v1039 = vunpack.c.l.b16 %v335
  %v1040 = vunpack.c.l.b16 %v336
  %v1041 = vunpack.c.l.b16 %v337
  %v1042 = vunpack.c.l.b16 %v338
  %v1043 = vunpack.c.l.b16 %v339
  %v1044 = vunpack.c.l.b16 %v340
  %v1045 = vunpack.c.l.b16 %v341
  %v1046 = vunpack.c.l.b16 %v342
  %v1047 = vunpack.c.l.b16 %v343
  %v1048 = vunpack.c.l.b16 %v344
  %v1049 = vunpack.c.l.b16 %v345
  %v1050 = vunpack.c.l.b16 %v346
  %v1051 = vpack.c.b16 %v748, %v747
  %v1052 = vpack.c.b16 %v750, %v749
  %v1053 = vpack.c.b16 %v752, %v751
  %v1054 = vpack.c.b16 %v754, %v753
  %v1055 = vpack.c.b16 %v756, %v755
  %v1056 = vpack.c.b16 %v758, %v757
  %v1057 = vpack.c.b16 %v760, %v759
  %v1058 = vpack.c.b16 %v762, %v761
  %v1059 = vpack.c.b16 %v764, %v763
  %v1060 = vpack.c.b16 %v766, %v765
  %v1061 = vpack.c.b16 %v768, %v767
  %v1062 = vpack.c.b16 %v770, %v769
  %v1063 = vpack.c.b16 %v772, %v771
  %v1064 = vpack.c.b16 %v774, %v773
  %v1065 = vpack.c.b16 %v776, %v775
  %v1066 = vpack.c.b16 %v778, %v777
  %v1067 = vpack.c.b16 %v780, %v779
  %v1068 = vpack.c.b16 %v782, %v781
  %v1069 = vpack.c.b16 %v784, %v783
  %v1070 = vpack.c.b16 %v786, %v785
  %v1071 = vpack.c.b16 %v788, %v787
  %v1072 = vpack.c.b16 %v790, %v789
  %v1073 = vpack.c.b16 %v792, %v791
  %v1074 = vpack.c.b16 %v794, %v793
  %v1075 = vpack.c.b16 %v796, %v795
  %v1076 = vpack.c.b16 %v798, %v797
  %v1077 = vpack.c.b16 %v800, %v799
  %v1078 = vpack.c.b16 %v802, %v801
  %v1079 = vpack.c.b16 %v804, %v803
  %v1080 = vpack.c.b16 %v806, %v805
  %v1081 = vpack.c.b16 %v808, %v807
  %v1082 = vpack.c.b16 %v810, %v809
  %v1083 = vpack.c.b16 %v812, %v811
  %v1084 = vpack.c.b16 %v814, %v813
  %v1085 = vpack.c.b16 %v816, %v815
  %v1086 = vpack.c.b16 %v818, %v817
  %v1087 = vpack.c.b16 %v820, %v819
  %v1088 = vpack.c.b16 %v822, %v821
  %v1089 = vpack.c.b16 %v824, %v823
  %v1090 = vpack.c.b16 %v826, %v825
  %v1091 = vpack.c.b16 %v828, %v827
  %v1092 = vpack.c.b16 %v830, %v829
  %v1093 = vpack.c.b16 %v832, %v831
  %v1094 = vpack.c.b16 %v834, %v833
  %v1095 = vpack.c.b16 %v836, %v835
  %v1096 = vpack.c.b16 %v838, %v837
  %v1097 = vpack.c.b16 %v840, %v839
  %v1098 = vpack.c.b16 %v842, %v841
  %v1099 = vpack.c.b16 %v844, %v843
  %v1100 = vpack.c.b16 %v846, %v845
  %v1101 = vpack.c.b16 %v848, %v847
  %v1102 = vpack.c.b16 %v850, %v849
  %v1103 = vpack.c.b16 %v852, %v851
  %v1104 = vpack.c.b16 %v854, %v853
  %v1105 = vpack.c.b16 %v856, %v855
  %v1106 = vpack.c.b16 %v858, %v857
  %v1107 = vpack.c.b16 %v860, %v859
  %v1108 = vpack.c.b16 %v862, %v861
  %v1109 = vpack.c.b16 %v864, %v863
  %v1110 = vpack.c.b16 %v866, %v865
  %v1111 = vpack.c.b16 %v868, %v867
  %v1112 = vpack.c.b16 %v870, %v869
  %v1113 = vpack.c.b16 %v872, %v871
  %v1114 = vpack.c.b16 %v874, %v873
  %v1115 = vpack.c.b16 %v876, %v875
  %v1116 = vpack.c.b16 %v878, %v877
  %v1117 = vpack.c.b16 %v880, %v879
  %v1118 = vpack.c.b16 %v882, %v881
  %v1119 = vpack.c.b16 %v884, %v883
  %v1120 = vpack.c.b16 %v886, %v885
  %v1121 = vpack.c.b16 %v888, %v887
  %v1122 = vpack.c.b16 %v890, %v889
  %v1123 = vpack.c.b16 %v892, %v891
  %v1124 = vpack.c.b16 %v894, %v893
  %v1125 = vpack.c.b16 %v896, %v895
  %v1126 = vpack.c.b16 %v898, %v897
  %v1127 = vpack.c.b16 %v900, %v899
  %v1128 = vpack.c.b16 %v902, %v901
  %v1129 = vpack.c.b16 %v904, %v903
  %v1130 = vpack.c.b16 %v906, %v905
  %v1131 = vpack.c.b16 %v908, %v907
  %v1132 = vpack.c.b16 %v910, %v909
  %v1133 = vpack.c.b16 %v912, %v911
  %v1134 = vpack.c.b16 %v914, %v913
  %v1135 = vpack.c.b16 %v916, %v915
  %v1136 = vpack.c.b16 %v918, %v917
  %v1137 = vpack.c.b16 %v920, %v919
  %v1138 = vpack.c.b16 %v922, %v921
  %v1139 = vpack.c.b16 %v924, %v923
  %v1140 = vpack.c.b16 %v926, %v925
  %v1141 = vpack.c.b16 %v928, %v927
  %v1142 = vpack.c.b16 %v930, %v929
  %v1143 = vpack.c.b16 %v932, %v931
  %v1144 = vpack.c.b16 %v934, %v933
  %v1145 = vpack.c.b16 %v936, %v935
  %v1146 = vpack.c.b16 %v938, %v937
  %v1147 = vpack.c.b16 %v940, %v939
  %v1148 = vpack.c.b16 %v942, %v941
  %v1149 = vpack.c.b16 %v944, %v943
  %v1150 = vpack.c.b16 %v946, %v945
  %v1151 = vpack.c.b16 %v948, %v947
  %v1152 = vpack.c.b16 %v950, %v949
  %v1153 = vpack.c.b16 %v952, %v951
  %v1154 = vpack.c.b16 %v954, %v953
  %v1155 = vpack.c.b16 %v956, %v955
  %v1156 = vpack.c.b16 %v958, %v957
  %v1157 = vpack.c.b16 %v960, %v959
  %v1158 = vpack.c.b16 %v962, %v961
  %v1159 = vpack.c.b16 %v964, %v963
  %v1160 = vpack.c.b16 %v966, %v965
  %v1161 = vpack.c.b16 %v968, %v967
  %v1162 = vpack.c.b16 %v970, %v969
  %v1163 = vpack.c.b16 %v972, %v971
  %v1164 = vpack.c.b16 %v974, %v973
  %v1165 = vpack.c.b16 %v976, %v975
  %v1166 = vpack.c.b16 %v978, %v977
  %v1167 = vpack.c.b16 %v980, %v979
  %v1168 = vpack.c.b16 %v982, %v981
  %v1169 = vpack.c.b16 %v984, %v983
  %v1170 = vpack.c.b16 %v986, %v985
  %v1171 = vpack.c.b16 %v988, %v987
  %v1172 = vpack.c.b16 %v990, %v989
  %v1173 = vpack.c.b16 %v992, %v991
  %v1174 = vpack.c.b16 %v994, %v993
  %v1175 = vpack.c.b16 %v996, %v995
  %v1176 = vpack.c.b16 %v998, %v997
  %v1177 = vpack.c.b16 %v1000, %v999
  %v1178 = vpack.c.b16 %v1002, %v1001
  %v1179 = vpack.c.b16 %v1004, %v1003
  %v1180 = vpack.c.b16 %v1006, %v1005
  %v1181 = vpack.c.b16 %v1008, %v1007
  %v1182 = vpack.c.b16 %v1010, %v1009
  %v1183 = vpack.c.b16 %v1012, %v1011
  %v1184 = vpack.c.b16 %v1014, %v1013
  %v1185 = vpack.c.b16 %v1016, %v1015
  %v1186 = vpack.c.b16 %v1018, %v1017
  %v1187 = vpack.c.b16 %v1020, %v1019
  %v1188 = vpack.c.b16 %v1022, %v1021
  %v1189 = vpack.c.b16 %v1024, %v1023
  %v1190 = vpack.c.b16 %v1026, %v1025
  %v1191 = vpack.c.b16 %v1028, %v1027
  %v1192 = vpack.c.b16 %v1030, %v1029
  %v1193 = vpack.c.b16 %v1032, %v1031
  %v1194 = vpack.c.b16 %v1034, %v1033
  %v1195 = vpack.c.b16 %v1036, %v1035
  %v1196 = vpack.c.b16 %v1038, %v1037
  %v1197 = vpack.c.b16 %v1040, %v1039
  %v1198 = vpack.c.b16 %v1042, %v1041
  %v1199 = vpack.c.b16 %v1044, %v1043
  %v1200 = vpack.c.b16 %v1046, %v1045
  %v1201 = vpack.c.b16 %v1048, %v1047
  %v1202 = vpack.c.b16 %v1050, %v1049
  %1355 = vmatprep.subr.bf16.mxu0 0
  %1356 = vmatpush1.bf16.msra.mxu0 %v1051
  %1357 = vmatprep.subr.bf16.mxu0 0
  %1358 = vmatpush1.bf16.msra.mxu0 %v1052
  %1359 = vmatprep.subr.bf16.mxu0 0
  %1360 = vmatpush1.bf16.msra.mxu0 %v1053
  %1361 = vmatprep.subr.bf16.mxu0 0
  %1362 = vmatpush1.bf16.msra.mxu0 %v1054
  %1363 = vmatprep.subr.bf16.mxu0 0
  %1364 = vmatpush1.bf16.msra.mxu0 %v1055
  %1365 = vmatprep.subr.bf16.mxu0 0
  %1366 = vmatpush1.bf16.msra.mxu0 %v1056
  %1367 = vmatprep.subr.bf16.mxu0 0
  %1368 = vmatpush1.bf16.msra.mxu0 %v1057
  %1369 = vmatprep.subr.bf16.mxu0 0
  %1370 = vmatpush1.bf16.msra.mxu0 %v1058
  %1371 = vmatprep.subr.bf16.mxu0 0
  %1372 = vmatpush1.bf16.msra.mxu0 %v1059
  %1373 = vmatprep.subr.bf16.mxu0 0
  %1374 = vmatpush1.bf16.msra.mxu0 %v1060
  %1375 = vmatprep.subr.bf16.mxu0 0
  %1376 = vmatpush1.bf16.msra.mxu0 %v1061
  %1377 = vmatprep.subr.bf16.mxu0 0
  %1378 = vmatpush1.bf16.msra.mxu0 %v1062
  %1379 = vmatprep.subr.bf16.mxu0 0
  %1380 = vmatpush1.bf16.msra.mxu0 %v1063
  %1381 = vmatprep.subr.bf16.mxu0 0
  %1382 = vmatpush1.bf16.msra.mxu0 %v1064
  %1383 = vmatprep.subr.bf16.mxu0 0
  %1384 = vmatpush1.bf16.msra.mxu0 %v1065
  %1385 = vmatprep.subr.bf16.mxu0 0
  %1386 = vmatpush1.bf16.msra.mxu0 %v1066
  %1387 = vmatprep.mubr.bf16.mxu0 %v406
  %1388 = vmatmul.mubr.bf16.gmra.mrb[0].mxu0 %v405
  %v1389 = vpop.f32.mrb[0].mxu0
  %v1390 = vadd.f32 0.0, %v1389
  %v1391 = vpop.f32.mrb[0].mxu0
  %v1392 = vpop.f32.mrb[0].mxu0
  %v1393 = vadd.f32 0.0, %v1392
  %v1394 = vpop.f32.mrb[0].mxu0
  %1395 = vdwg.mxu0
  %1396 = vmatprep.subr.bf16.mxu0 0
  %1397 = vmatpush1.bf16.msra.mxu0 %v1067
  %1398 = vmatprep.subr.bf16.mxu0 0
  %1399 = vmatpush1.bf16.msra.mxu0 %v1068
  %1400 = vmatprep.subr.bf16.mxu0 0
  %1401 = vmatpush1.bf16.msra.mxu0 %v1069
  %1402 = vmatprep.subr.bf16.mxu0 0
  %1403 = vmatpush1.bf16.msra.mxu0 %v1070
  %1404 = vmatprep.subr.bf16.mxu0 0
  %1405 = vmatpush1.bf16.msra.mxu0 %v1071
  %1406 = vmatprep.subr.bf16.mxu0 0
  %1407 = vmatpush1.bf16.msra.mxu0 %v1072
  %1408 = vmatprep.subr.bf16.mxu0 0
  %1409 = vmatpush1.bf16.msra.mxu0 %v1073
  %1410 = vmatprep.subr.bf16.mxu0 0
  %1411 = vmatpush1.bf16.msra.mxu0 %v1074
  %1412 = vmatprep.subr.bf16.mxu0 0
  %1413 = vmatpush1.bf16.msra.mxu0 %v1075
  %1414 = vmatprep.subr.bf16.mxu0 0
  %1415 = vmatpush1.bf16.msra.mxu0 %v1076
  %1416 = vmatprep.subr.bf16.mxu0 0
  %1417 = vmatpush1.bf16.msra.mxu0 %v1077
  %1418 = vmatprep.subr.bf16.mxu0 0
  %1419 = vmatpush1.bf16.msra.mxu0 %v1078
  %1420 = vmatprep.subr.bf16.mxu0 0
  %1421 = vmatpush1.bf16.msra.mxu0 %v1079
  %1422 = vmatprep.subr.bf16.mxu0 0
  %1423 = vmatpush1.bf16.msra.mxu0 %v1080
  %1424 = vmatprep.subr.bf16.mxu0 0
  %1425 = vmatpush1.bf16.msra.mxu0 %v1081
  %1426 = vmatprep.subr.bf16.mxu0 0
  %1427 = vmatpush1.bf16.msra.mxu0 %v1082
  %1428 = vmatprep.mubr.bf16.mxu0 %v408
  %1429 = vmatmul.mubr.bf16.gmra.mrb[0].mxu0 %v407
  %v1430 = vpop.f32.mrb[0].mxu0
  %v1431 = vadd.f32 %v1390, %v1430
  %v1432 = vpop.f32.mrb[0].mxu0
  %v1433 = vpop.f32.mrb[0].mxu0
  %v1434 = vadd.f32 %v1393, %v1433
  %v1435 = vpop.f32.mrb[0].mxu0
  %1436 = vdwg.mxu0
  %1437 = vmatprep.subr.bf16.mxu0 0
  %1438 = vmatpush1.bf16.msra.mxu0 %v1083
  %1439 = vmatprep.subr.bf16.mxu0 0
  %1440 = vmatpush1.bf16.msra.mxu0 %v1084
  %1441 = vmatprep.subr.bf16.mxu0 0
  %1442 = vmatpush1.bf16.msra.mxu0 %v1085
  %1443 = vmatprep.subr.bf16.mxu0 0
  %1444 = vmatpush1.bf16.msra.mxu0 %v1086
  %1445 = vmatprep.subr.bf16.mxu0 0
  %1446 = vmatpush1.bf16.msra.mxu0 %v1087
  %1447 = vmatprep.subr.bf16.mxu0 0
  %1448 = vmatpush1.bf16.msra.mxu0 %v1088
  %1449 = vmatprep.subr.bf16.mxu0 0
  %1450 = vmatpush1.bf16.msra.mxu0 %v1089
  %1451 = vmatprep.subr.bf16.mxu0 0
  %1452 = vmatpush1.bf16.msra.mxu0 %v1090
  %1453 = vmatprep.subr.bf16.mxu0 0
  %1454 = vmatpush1.bf16.msra.mxu0 %v1091
  %1455 = vmatprep.subr.bf16.mxu0 0
  %1456 = vmatpush1.bf16.msra.mxu0 %v1092
  %1457 = vmatprep.subr.bf16.mxu0 0
  %1458 = vmatpush1.bf16.msra.mxu0 %v1093
  %1459 = vmatprep.subr.bf16.mxu0 0
  %1460 = vmatpush1.bf16.msra.mxu0 %v1094
  %1461 = vmatprep.subr.bf16.mxu0 0
  %1462 = vmatpush1.bf16.msra.mxu0 %v1095
  %1463 = vmatprep.subr.bf16.mxu0 0
  %1464 = vmatpush1.bf16.msra.mxu0 %v1096
  %1465 = vmatprep.subr.bf16.mxu0 0
  %1466 = vmatpush1.bf16.msra.mxu0 %v1097
  %1467 = vmatprep.subr.bf16.mxu0 0
  %1468 = vmatpush1.bf16.msra.mxu0 %v1098
  %1469 = vmatprep.mubr.bf16.mxu0 %v410
  %1470 = vmatmul.mubr.bf16.gmra.mrb[0].mxu0 %v409
  %v1471 = vpop.f32.mrb[0].mxu0
  %v1472 = vadd.f32 %v1431, %v1471
  %v1473 = vpop.f32.mrb[0].mxu0
  %v1474 = vpop.f32.mrb[0].mxu0
  %v1475 = vadd.f32 %v1434, %v1474
  %v1476 = vpop.f32.mrb[0].mxu0
  %1477 = vdwg.mxu0
  %1478 = vmatprep.subr.bf16.mxu0 0
  %1479 = vmatpush1.bf16.msra.mxu0 %v1099
  %1480 = vmatprep.subr.bf16.mxu0 0
  %1481 = vmatpush1.bf16.msra.mxu0 %v1100
  %1482 = vmatprep.subr.bf16.mxu0 0
  %1483 = vmatpush1.bf16.msra.mxu0 %v1101
  %1484 = vmatprep.subr.bf16.mxu0 0
  %1485 = vmatpush1.bf16.msra.mxu0 %v1102
  %1486 = vmatprep.subr.bf16.mxu0 0
  %1487 = vmatpush1.bf16.msra.mxu0 %v1103
  %1488 = vmatprep.subr.bf16.mxu0 0
  %1489 = vmatpush1.bf16.msra.mxu0 %v1104
  %1490 = vmatprep.subr.bf16.mxu0 0
  %1491 = vmatpush1.bf16.msra.mxu0 %v1105
  %1492 = vmatprep.subr.bf16.mxu0 0
  %1493 = vmatpush1.bf16.msra.mxu0 %v1106
  %1494 = vmatprep.subr.bf16.mxu0 0
  %1495 = vmatpush1.bf16.msra.mxu0 %v1107
  %1496 = vmatprep.subr.bf16.mxu0 0
  %1497 = vmatpush1.bf16.msra.mxu0 %v1108
  %1498 = vmatprep.subr.bf16.mxu0 0
  %1499 = vmatpush1.bf16.msra.mxu0 %v1109
  %1500 = vmatprep.subr.bf16.mxu0 0
  %1501 = vmatpush1.bf16.msra.mxu0 %v1110
  %1502 = vmatprep.subr.bf16.mxu0 0
  %1503 = vmatpush1.bf16.msra.mxu0 %v1111
  %1504 = vmatprep.subr.bf16.mxu0 0
  %1505 = vmatpush1.bf16.msra.mxu0 %v1112
  %1506 = vmatprep.subr.bf16.mxu0 0
  %1507 = vmatpush1.bf16.msra.mxu0 %v1113
  %1508 = vmatprep.subr.bf16.mxu0 0
  %1509 = vmatpush1.bf16.msra.mxu0 %v1114
  %1510 = vmatprep.mubr.bf16.mxu0 %v412
  %1511 = vmatmul.mubr.bf16.gmra.mrb[0].mxu0 %v411
  %v1512 = vpop.f32.mrb[0].mxu0
  %v1513 = vadd.f32 %v1472, %v1512
  %v1514 = vpop.f32.mrb[0].mxu0
  %v1515 = vpop.f32.mrb[0].mxu0
  %v1516 = vadd.f32 %v1475, %v1515
  %v1517 = vpop.f32.mrb[0].mxu0
  %1518 = vdwg.mxu0
  %1519 = vmatprep.subr.bf16.mxu0 0
  %1520 = vmatpush1.bf16.msra.mxu0 %v1115
  %1521 = vmatprep.subr.bf16.mxu0 0
  %1522 = vmatpush1.bf16.msra.mxu0 %v1116
  %1523 = vmatprep.subr.bf16.mxu0 0
  %1524 = vmatpush1.bf16.msra.mxu0 %v1117
  %1525 = vmatprep.subr.bf16.mxu0 0
  %1526 = vmatpush1.bf16.msra.mxu0 %v1118
  %1527 = vmatprep.subr.bf16.mxu0 0
  %1528 = vmatpush1.bf16.msra.mxu0 %v1119
  %1529 = vmatprep.subr.bf16.mxu0 0
  %1530 = vmatpush1.bf16.msra.mxu0 %v1120
  %1531 = vmatprep.subr.bf16.mxu0 0
  %1532 = vmatpush1.bf16.msra.mxu0 %v1121
  %1533 = vmatprep.subr.bf16.mxu0 0
  %1534 = vmatpush1.bf16.msra.mxu0 %v1122
  %1535 = vmatprep.subr.bf16.mxu0 0
  %1536 = vmatpush1.bf16.msra.mxu0 %v1123
  %1537 = vmatprep.subr.bf16.mxu0 0
  %1538 = vmatpush1.bf16.msra.mxu0 %v1124
  %1539 = vmatprep.subr.bf16.mxu0 0
  %1540 = vmatpush1.bf16.msra.mxu0 %v1125
  %1541 = vmatprep.subr.bf16.mxu0 0
  %1542 = vmatpush1.bf16.msra.mxu0 %v1126
  %1543 = vmatprep.subr.bf16.mxu0 0
  %1544 = vmatpush1.bf16.msra.mxu0 %v1127
  %1545 = vmatprep.subr.bf16.mxu0 0
  %1546 = vmatpush1.bf16.msra.mxu0 %v1128
  %1547 = vmatprep.subr.bf16.mxu0 0
  %1548 = vmatpush1.bf16.msra.mxu0 %v1129
  %1549 = vmatprep.subr.bf16.mxu0 0
  %1550 = vmatpush1.bf16.msra.mxu0 %v1130
  %1551 = vmatprep.mubr.bf16.mxu0 %v414
  %1552 = vmatmul.mubr.bf16.gmra.mrb[0].mxu0 %v413
  %v1553 = vpop.f32.mrb[0].mxu0
  %v1554 = vadd.f32 %v1513, %v1553
  %v1555 = vpop.f32.mrb[0].mxu0
  %v1556 = vpop.f32.mrb[0].mxu0
  %v1557 = vadd.f32 %v1516, %v1556
  %v1558 = vpop.f32.mrb[0].mxu0
  %1559 = vdwg.mxu0
  %1560 = vmatprep.subr.bf16.mxu0 0
  %1561 = vmatpush1.bf16.msra.mxu0 %v1131
  %1562 = vmatprep.subr.bf16.mxu0 0
  %1563 = vmatpush1.bf16.msra.mxu0 %v1132
  %1564 = vmatprep.subr.bf16.mxu0 0
  %1565 = vmatpush1.bf16.msra.mxu0 %v1133
  %1566 = vmatprep.subr.bf16.mxu0 0
  %1567 = vmatpush1.bf16.msra.mxu0 %v1134
  %1568 = vmatprep.subr.bf16.mxu0 0
  %1569 = vmatpush1.bf16.msra.mxu0 %v1135
  %1570 = vmatprep.subr.bf16.mxu0 0
  %1571 = vmatpush1.bf16.msra.mxu0 %v1136
  %1572 = vmatprep.subr.bf16.mxu0 0
  %1573 = vmatpush1.bf16.msra.mxu0 %v1137
  %1574 = vmatprep.subr.bf16.mxu0 0
  %1575 = vmatpush1.bf16.msra.mxu0 %v1138
  %1576 = vmatprep.subr.bf16.mxu0 0
  %1577 = vmatpush1.bf16.msra.mxu0 %v1139
  %1578 = vmatprep.subr.bf16.mxu0 0
  %1579 = vmatpush1.bf16.msra.mxu0 %v1140
  %1580 = vmatprep.subr.bf16.mxu0 0
  %1581 = vmatpush1.bf16.msra.mxu0 %v1141
  %1582 = vmatprep.subr.bf16.mxu0 0
  %1583 = vmatpush1.bf16.msra.mxu0 %v1142
  %1584 = vmatprep.subr.bf16.mxu0 0
  %1585 = vmatpush1.bf16.msra.mxu0 %v1143
  %1586 = vmatprep.subr.bf16.mxu0 0
  %1587 = vmatpush1.bf16.msra.mxu0 %v1144
  %1588 = vmatprep.subr.bf16.mxu0 0
  %1589 = vmatpush1.bf16.msra.mxu0 %v1145
  %1590 = vmatprep.subr.bf16.mxu0 0
  %1591 = vmatpush1.bf16.msra.mxu0 %v1146
  %1592 = vmatprep.mubr.bf16.mxu0 %v416
  %1593 = vmatmul.mubr.bf16.gmra.mrb[0].mxu0 %v415
  %v1594 = vpop.f32.mrb[0].mxu0
  %v1595 = vadd.f32 %v1554, %v1594
  %v1596 = vpop.f32.mrb[0].mxu0
  %v1597 = vpop.f32.mrb[0].mxu0
  %v1598 = vadd.f32 %v1557, %v1597
  %v1599 = vpop.f32.mrb[0].mxu0
  %1600 = vdwg.mxu0
  %1601 = vmatprep.subr.bf16.mxu0 0
  %1602 = vmatpush1.bf16.msra.mxu0 %v1147
  %1603 = vmatprep.subr.bf16.mxu0 0
  %1604 = vmatpush1.bf16.msra.mxu0 %v1148
  %1605 = vmatprep.subr.bf16.mxu0 0
  %1606 = vmatpush1.bf16.msra.mxu0 %v1149
  %1607 = vmatprep.subr.bf16.mxu0 0
  %1608 = vmatpush1.bf16.msra.mxu0 %v1150
  %1609 = vmatprep.subr.bf16.mxu0 0
  %1610 = vmatpush1.bf16.msra.mxu0 %v1151
  %1611 = vmatprep.subr.bf16.mxu0 0
  %1612 = vmatpush1.bf16.msra.mxu0 %v1152
  %1613 = vmatprep.subr.bf16.mxu0 0
  %1614 = vmatpush1.bf16.msra.mxu0 %v1153
  %1615 = vmatprep.subr.bf16.mxu0 0
  %1616 = vmatpush1.bf16.msra.mxu0 %v1154
  %1617 = vmatprep.subr.bf16.mxu0 0
  %1618 = vmatpush1.bf16.msra.mxu0 %v1155
  %1619 = vmatprep.subr.bf16.mxu0 0
  %1620 = vmatpush1.bf16.msra.mxu0 %v1156
  %1621 = vmatprep.subr.bf16.mxu0 0
  %1622 = vmatpush1.bf16.msra.mxu0 %v1157
  %1623 = vmatprep.subr.bf16.mxu0 0
  %1624 = vmatpush1.bf16.msra.mxu0 %v1158
  %1625 = vmatprep.subr.bf16.mxu0 0
  %1626 = vmatpush1.bf16.msra.mxu0 %v1159
  %1627 = vmatprep.subr.bf16.mxu0 0
  %1628 = vmatpush1.bf16.msra.mxu0 %v1160
  %1629 = vmatprep.subr.bf16.mxu0 0
  %1630 = vmatpush1.bf16.msra.mxu0 %v1161
  %1631 = vmatprep.subr.bf16.mxu0 0
  %1632 = vmatpush1.bf16.msra.mxu0 %v1162
  %1633 = vmatprep.mubr.bf16.mxu0 %v418
  %1634 = vmatmul.mubr.bf16.gmra.mrb[0].mxu0 %v417
  %v1635 = vpop.f32.mrb[0].mxu0
  %v1636 = vadd.f32 %v1595, %v1635
  %v1637 = vpop.f32.mrb[0].mxu0
  %v1638 = vpop.f32.mrb[0].mxu0
  %v1639 = vadd.f32 %v1598, %v1638
  %v1640 = vpop.f32.mrb[0].mxu0
  %1641 = vdwg.mxu0
  %1642 = vmatprep.subr.bf16.mxu0 0
  %1643 = vmatpush1.bf16.msra.mxu0 %v1163
  %1644 = vmatprep.subr.bf16.mxu0 0
  %1645 = vmatpush1.bf16.msra.mxu0 %v1164
  %1646 = vmatprep.subr.bf16.mxu0 0
  %1647 = vmatpush1.bf16.msra.mxu0 %v1165
  %1648 = vmatprep.subr.bf16.mxu0 0
  %1649 = vmatpush1.bf16.msra.mxu0 %v1166
  %1650 = vmatprep.subr.bf16.mxu0 0
  %1651 = vmatpush1.bf16.msra.mxu0 %v1167
  %1652 = vmatprep.subr.bf16.mxu0 0
  %1653 = vmatpush1.bf16.msra.mxu0 %v1168
  %1654 = vmatprep.subr.bf16.mxu0 0
  %1655 = vmatpush1.bf16.msra.mxu0 %v1169
  %1656 = vmatprep.subr.bf16.mxu0 0
  %1657 = vmatpush1.bf16.msra.mxu0 %v1170
  %1658 = vmatprep.subr.bf16.mxu0 0
  %1659 = vmatpush1.bf16.msra.mxu0 %v1171
  %1660 = vmatprep.subr.bf16.mxu0 0
  %1661 = vmatpush1.bf16.msra.mxu0 %v1172
  %1662 = vmatprep.subr.bf16.mxu0 0
  %1663 = vmatpush1.bf16.msra.mxu0 %v1173
  %1664 = vmatprep.subr.bf16.mxu0 0
  %1665 = vmatpush1.bf16.msra.mxu0 %v1174
  %1666 = vmatprep.subr.bf16.mxu0 0
  %1667 = vmatpush1.bf16.msra.mxu0 %v1175
  %1668 = vmatprep.subr.bf16.mxu0 0
  %1669 = vmatpush1.bf16.msra.mxu0 %v1176
  %1670 = vmatprep.subr.bf16.mxu0 0
  %1671 = vmatpush1.bf16.msra.mxu0 %v1177
  %1672 = vmatprep.subr.bf16.mxu0 0
  %1673 = vmatpush1.bf16.msra.mxu0 %v1178
  %1674 = vmatprep.mubr.bf16.mxu0 %v420
  %1675 = vmatmul.mubr.bf16.gmra.mrb[0].mxu0 %v419
  %v1676 = vpop.f32.mrb[0].mxu0
  %v1677 = vadd.f32 %v1636, %v1676
  %v1678 = vpop.f32.mrb[0].mxu0
  %v1679 = vpop.f32.mrb[0].mxu0
  %v1680 = vadd.f32 %v1639, %v1679
  %v1681 = vpop.f32.mrb[0].mxu0
  %1682 = vdwg.mxu0
  %1683 = vmatprep.subr.bf16.mxu0 0
  %1684 = vmatpush1.bf16.msra.mxu0 %v1179
  %1685 = vmatprep.subr.bf16.mxu0 0
  %1686 = vmatpush1.bf16.msra.mxu0 %v1180
  %1687 = vmatprep.subr.bf16.mxu0 0
  %1688 = vmatpush1.bf16.msra.mxu0 %v1181
  %1689 = vmatprep.subr.bf16.mxu0 0
  %1690 = vmatpush1.bf16.msra.mxu0 %v1182
  %1691 = vmatprep.subr.bf16.mxu0 0
  %1692 = vmatpush1.bf16.msra.mxu0 %v1183
  %1693 = vmatprep.subr.bf16.mxu0 0
  %1694 = vmatpush1.bf16.msra.mxu0 %v1184
  %1695 = vmatprep.subr.bf16.mxu0 0
  %1696 = vmatpush1.bf16.msra.mxu0 %v1185
  %1697 = vmatprep.subr.bf16.mxu0 0
  %1698 = vmatpush1.bf16.msra.mxu0 %v1186
  %1699 = vmatprep.subr.bf16.mxu0 0
  %1700 = vmatpush1.bf16.msra.mxu0 %v1187
  %1701 = vmatprep.subr.bf16.mxu0 0
  %1702 = vmatpush1.bf16.msra.mxu0 %v1188
  %1703 = vmatprep.subr.bf16.mxu0 0
  %1704 = vmatpush1.bf16.msra.mxu0 %v1189
  %1705 = vmatprep.subr.bf16.mxu0 0
  %1706 = vmatpush1.bf16.msra.mxu0 %v1190
  %1707 = vmatprep.subr.bf16.mxu0 0
  %1708 = vmatpush1.bf16.msra.mxu0 %v1191
  %1709 = vmatprep.subr.bf16.mxu0 0
  %1710 = vmatpush1.bf16.msra.mxu0 %v1192
  %1711 = vmatprep.subr.bf16.mxu0 0
  %1712 = vmatpush1.bf16.msra.mxu0 %v1193
  %1713 = vmatprep.subr.bf16.mxu0 0
  %1714 = vmatpush1.bf16.msra.mxu0 %v1194
  %1715 = vmatprep.mubr.bf16.mxu0 %v422
  %1716 = vmatmul.mubr.bf16.gmra.mrb[0].mxu0 %v421
  %v1717 = vpop.f32.mrb[0].mxu0
  %v1718 = vadd.f32 %v1677, %v1717
  %v1719 = vpop.f32.mrb[0].mxu0
  %v1720 = vpop.f32.mrb[0].mxu0
  %v1721 = vadd.f32 %v1680, %v1720
  %v1722 = vpop.f32.mrb[0].mxu0
  %1723 = vdwg.mxu0
  %1724 = vmatprep.subr.bf16.mxu0 0
  %1725 = vmatpush1.bf16.msra.mxu0 %v1195
  %1726 = vmatprep.subr.bf16.mxu0 0
  %1727 = vmatpush1.bf16.msra.mxu0 %v1196
  %1728 = vmatprep.subr.bf16.mxu0 0
  %1729 = vmatpush1.bf16.msra.mxu0 %v1197
  %1730 = vmatprep.subr.bf16.mxu0 0
  %1731 = vmatpush1.bf16.msra.mxu0 %v1198
  %1732 = vmatprep.subr.bf16.mxu0 0
  %1733 = vmatpush1.bf16.msra.mxu0 %v1199
  %1734 = vmatprep.subr.bf16.mxu0 0
  %1735 = vmatpush1.bf16.msra.mxu0 %v1200
  %1736 = vmatprep.subr.bf16.mxu0 0
  %1737 = vmatpush1.bf16.msra.mxu0 %v1201
  %1738 = vmatprep.subr.bf16.mxu0 0
  %1739 = vmatpush1.bf16.msra.mxu0 %v1202
  %1740 = vmatprep.subr.bf16.mxu0 0
  %1741 = vmatpush1.bf16.msra.mxu0 0
  %1742 = vmatprep.subr.bf16.mxu0 0
  %1743 = vmatpush1.bf16.msra.mxu0 0
  %1744 = vmatprep.subr.bf16.mxu0 0
  %1745 = vmatpush1.bf16.msra.mxu0 0
  %1746 = vmatprep.subr.bf16.mxu0 0
  %1747 = vmatpush1.bf16.msra.mxu0 0
  %1748 = vmatprep.subr.bf16.mxu0 0
  %1749 = vmatpush1.bf16.msra.mxu0 0
  %1750 = vmatprep.subr.bf16.mxu0 0
  %1751 = vmatpush1.bf16.msra.mxu0 0
  %1752 = vmatprep.subr.bf16.mxu0 0
  %1753 = vmatpush1.bf16.msra.mxu0 0
  %1754 = vmatprep.subr.bf16.mxu0 0
  %1755 = vmatpush1.bf16.msra.mxu0 0
  %1756 = vmatprep.mubr.bf16.mxu0 0
  %1757 = vmatmul.mubr.bf16.gmra.mrb[0].mxu0 %v423
  %v1758 = vpop.f32.mrb[0].mxu0
  %v1759 = vadd.f32 %v1718, %v1758
  %v1760 = vpop.f32.mrb[0].mxu0
  %v1761 = vpop.f32.mrb[0].mxu0
  %v1762 = vadd.f32 %v1721, %v1761
  %v1763 = vpop.f32.mrb[0].mxu0
  %1764 = vdwg.mxu0
  %v1765 = vadd.f32 %v21, %v1759
  %v1766 = vadd.f32 %v22, %v1762
  %1767 = vst [vmem:[#allocation2] sm:$0xff] %v1765
  %1768 = vst [vmem:[#allocation2 + $0x8] sm:$0xff] %v1766
  // Predicated region
  $region18: #{discriminator_forward.8} parent=0 // pred_check
    %p1769 = pneg %p15
  $region19: #{discriminator_forward.8} parent=0 // pred_check_branch
    %1771 = sbr.rel (%p1769) target = $region21
  $region20: #{discriminator_forward.8} parent=0 // pred_region
    %v1772 = vld [vmem:[#allocation2] sm:$0xff]
    %v1773 = vld [vmem:[#allocation2 + $0x8] sm:$0xff]
    %v1774 = vld [vmem:[%s2] sm:$0x1]
    %v1776 = vlaneseq
    %v1777 = vshrl.u32 %v1776, 7
    %v1778 = vsub.s32 0, %v1777
    %v1779 = vrot.slane %v1774, %v1778
    %v1781 = vadd.f32 %v1772, %v1779
    %v1782 = vadd.f32 %v1773, %v1779
    %vm1783 = vcmp.ge.f32.partialorder %v1781, 0.0
    %vm1784 = vcmp.ge.f32.partialorder %v1782, 0.0
    %v1785 = vmul.f32 %v1781, 0.2
    %v1786 = vmul.f32 %v1782, 0.2
    %v1787 = vsel %vm1783, %v1781, %v1785
    %v1788 = vsel %vm1784, %v1782, %v1786
    %v1789 = vpack.c.bf16 %v1788, %v1787
    %v1791 = vunpack.c.l.b16 %v1789
    %v1792 = vunpack.c.h.b16 %v1789
    %v1793 = vpack.c.b16 %v1791, %v1791
    %v1794 = vpack.c.b16 %v1792, %v1792
    %1797 = vst [vmem:[%s3] sm:$0xf] %v1793
    %1798 = vst [vmem:[%s3 + $0x4] sm:$0xf] %v1794
  $region21: #{discriminator_forward.8} parent=0 // pred_fallthru
    _
  // Predicated region
  $region22: #{discriminator_forward.8} parent=0 // pred_check
    _
  $region23: #{discriminator_forward.8} parent=0 // pred_check_branch
    %1800 = sbr.rel (0) target = $region25
  $region24: #{discriminator_forward.8} parent=0 // pred_region
    _
  $region25: #{discriminator_forward.8} parent=0 // pred_fallthru
    _
  // Predicated region
  $region26: #{discriminator_forward.8} parent=0 // pred_check
    _
  $region27: #{discriminator_forward.8} parent=0 // pred_check_branch
    %1802 = sbr.rel (0) target = $region29
  $region28: #{discriminator_forward.8} parent=0 // pred_region
    _
  $region29: #{discriminator_forward.8} parent=0 // pred_fallthru
    _

// kernel: discriminator_forward.9
$region0: #{discriminator_forward.9}
  #allocation0 [shape = 'u32[]', space=smem, size = 0x4, offset = 0x4, fixed_abs, tag = 'smem constant byte address 0x4 - core index']
  #allocation1 [shape = 'u32[144,128]{1,0:T(1,128)}', space=vmem, size = 0x12000, scoped, tag = 'internal scratch']
  #allocation2 [shape = 'f32[16,128]{1,0:T(8,128)}', space=vmem, size = 0x2000, scoped, tag = 'scratch operand']
  %s0 = inlined_call_operand.vmem [shape: bf16[16,2432], index: 0, kind: input, shape index: {}]
  %s1 = inlined_call_operand.vmem [shape: bf16[2432,128], index: 1, kind: input, shape index: {}]
  %s2 = inlined_call_operand.vmem [shape: f32[1,128], index: 2, kind: input, shape index: {}]
  %s3 = inlined_call_operand.vmem [shape: f32[16,128], index: 3, kind: output, shape index: {}]
  %s4 = sld [smem:[#allocation0]]
  $region30: #{discriminator_forward.9} parent=0
    _
  %s6 = ssub.s32 1, %s4
  %s7 = scalar_select 0, %s6, %s4
  // Predicated region
  $region2: #{discriminator_forward.9} parent=0 // pred_check
    _
  $region3: #{discriminator_forward.9} parent=0 // pred_check_branch
    %9 = sbr.rel (0) target = $region5
  $region4: #{discriminator_forward.9} parent=0 // pred_region
    _
  $region5: #{discriminator_forward.9} parent=0 // pred_fallthru
    _
  // Predicated region
  $region6: #{discriminator_forward.9} parent=0 // pred_check
    _
  $region7: #{discriminator_forward.9} parent=0 // pred_check_branch
    %11 = sbr.rel (0) target = $region9
  $region8: #{discriminator_forward.9} parent=0 // pred_region
    _
  $region9: #{discriminator_forward.9} parent=0 // pred_fallthru
    _
  // Predicated region
  $region10: #{discriminator_forward.9} parent=0 // pred_check
    _
  $region11: #{discriminator_forward.9} parent=0 // pred_check_branch
    %13 = sbr.rel (0) target = $region13
  $region12: #{discriminator_forward.9} parent=0 // pred_region
    _
  $region13: #{discriminator_forward.9} parent=0 // pred_fallthru
    _
  %p15 = scmp.eq.s32.totalorder 0, 0
  // Predicated region
  $region14: #{discriminator_forward.9} parent=0 // pred_check
    %p16 = pneg %p15
  $region15: #{discriminator_forward.9} parent=0 // pred_check_branch
    %18 = sbr.rel (%p16) target = $region17
  $region16: #{discriminator_forward.9} parent=0 // pred_region
    %19 = vst [vmem:[#allocation2] sm:$0xff] 0.0
    %20 = vst [vmem:[#allocation2 + $0x8] sm:$0xff] 0.0
  $region17: #{discriminator_forward.9} parent=0 // pred_fallthru
    _
  %v21 = vld [vmem:[#allocation2] sm:$0xff]
  %v22 = vld [vmem:[#allocation2 + $0x8] sm:$0xff]
  %v23 = vld [vmem:[%s0] sm:$0xff]
  %v24 = vld [vmem:[%s0 + $0x8] sm:$0xff]
  %v25 = vld [vmem:[%s0 + $0x10] sm:$0xff]
  %v26 = vld [vmem:[%s0 + $0x18] sm:$0xff]
  %v27 = vld [vmem:[%s0 + $0x20] sm:$0xff]
  %v28 = vld [vmem:[%s0 + $0x28] sm:$0xff]
  %v29 = vld [vmem:[%s0 + $0x30] sm:$0xff]
  %v30 = vld [vmem:[%s0 + $0x38] sm:$0xff]
  %v31 = vld [vmem:[%s0 + $0x40] sm:$0xff]
  %v32 = vld [vmem:[%s0 + $0x48] sm:$0xf]
  %v33 = vld [vmem:[%s0 + $0x4c] sm:$0xff]
  %v34 = vld [vmem:[%s0 + $0x54] sm:$0xff]
  %v35 = vld [vmem:[%s0 + $0x5c] sm:$0xff]
  %v36 = vld [vmem:[%s0 + $0x64] sm:$0xff]
  %v37 = vld [vmem:[%s0 + $0x6c] sm:$0xff]
  %v38 = vld [vmem:[%s0 + $0x74] sm:$0xff]
  %v39 = vld [vmem:[%s0 + $0x7c] sm:$0xff]
  %v40 = vld [vmem:[%s0 + $0x84] sm:$0xff]
  %v41 = vld [vmem:[%s0 + $0x8c] sm:$0xff]
  %v42 = vld [vmem:[%s0 + $0x94] sm:$0xf]
  %v43 = vld [vmem:[%s1] sm:$0xf]
  %v44 = vld [vmem:[%s1 + $0x4] sm:$0xf]
  %v45 = vld [vmem:[%s1 + $0x8] sm:$0xf]
  %v46 = vld [vmem:[%s1 + $0xc] sm:$0xf]
  %v47 = vld [vmem:[%s1 + $0x10] sm:$0xf]
  %v48 = vld [vmem:[%s1 + $0x14] sm:$0xf]
  %v49 = vld [vmem:[%s1 + $0x18] sm:$0xf]
  %v50 = vld [vmem:[%s1 + $0x1c] sm:$0xf]
  %v51 = vld [vmem:[%s1 + $0x20] sm:$0xf]
  %v52 = vld [vmem:[%s1 + $0x24] sm:$0xf]
  %v53 = vld [vmem:[%s1 + $0x28] sm:$0xf]
  %v54 = vld [vmem:[%s1 + $0x2c] sm:$0xf]
  %v55 = vld [vmem:[%s1 + $0x30] sm:$0xf]
  %v56 = vld [vmem:[%s1 + $0x34] sm:$0xf]
  %v57 = vld [vmem:[%s1 + $0x38] sm:$0xf]
  %v58 = vld [vmem:[%s1 + $0x3c] sm:$0xf]
  %v59 = vld [vmem:[%s1 + $0x40] sm:$0xf]
  %v60 = vld [vmem:[%s1 + $0x44] sm:$0xf]
  %v61 = vld [vmem:[%s1 + $0x48] sm:$0xf]
  %v62 = vld [vmem:[%s1 + $0x4c] sm:$0xf]
  %v63 = vld [vmem:[%s1 + $0x50] sm:$0xf]
  %v64 = vld [vmem:[%s1 + $0x54] sm:$0xf]
  %v65 = vld [vmem:[%s1 + $0x58] sm:$0xf]
  %v66 = vld [vmem:[%s1 + $0x5c] sm:$0xf]
  %v67 = vld [vmem:[%s1 + $0x60] sm:$0xf]
  %v68 = vld [vmem:[%s1 + $0x64] sm:$0xf]
  %v69 = vld [vmem:[%s1 + $0x68] sm:$0xf]
  %v70 = vld [vmem:[%s1 + $0x6c] sm:$0xf]
  %v71 = vld [vmem:[%s1 + $0x70] sm:$0xf]
  %v72 = vld [vmem:[%s1 + $0x74] sm:$0xf]
  %v73 = vld [vmem:[%s1 + $0x78] sm:$0xf]
  %v74 = vld [vmem:[%s1 + $0x7c] sm:$0xf]
  %v75 = vld [vmem:[%s1 + $0x80] sm:$0xf]
  %v76 = vld [vmem:[%s1 + $0x84] sm:$0xf]
  %v77 = vld [vmem:[%s1 + $0x88] sm:$0xf]
  %v78 = vld [vmem:[%s1 + $0x8c] sm:$0xf]
  %v79 = vld [vmem:[%s1 + $0x90] sm:$0xf]
  %v80 = vld [vmem:[%s1 + $0x94] sm:$0xf]
  %v81 = vld [vmem:[%s1 + $0x98] sm:$0xf]
  %v82 = vld [vmem:[%s1 + $0x9c] sm:$0xf]
  %v83 = vld [vmem:[%s1 + $0xa0] sm:$0xf]
  %v84 = vld [vmem:[%s1 + $0xa4] sm:$0xf]
  %v85 = vld [vmem:[%s1 + $0xa8] sm:$0xf]
  %v86 = vld [vmem:[%s1 + $0xac] sm:$0xf]
  %v87 = vld [vmem:[%s1 + $0xb0] sm:$0xf]
  %v88 = vld [vmem:[%s1 + $0xb4] sm:$0xf]
  %v89 = vld [vmem:[%s1 + $0xb8] sm:$0xf]
  %v90 = vld [vmem:[%s1 + $0xbc] sm:$0xf]
  %v91 = vld [vmem:[%s1 + $0xc0] sm:$0xf]
  %v92 = vld [vmem:[%s1 + $0xc4] sm:$0xf]
  %v93 = vld [vmem:[%s1 + $0xc8] sm:$0xf]
  %v94 = vld [vmem:[%s1 + $0xcc] sm:$0xf]
  %v95 = vld [vmem:[%s1 + $0xd0] sm:$0xf]
  %v96 = vld [vmem:[%s1 + $0xd4] sm:$0xf]
  %v97 = vld [vmem:[%s1 + $0xd8] sm:$0xf]
  %v98 = vld [vmem:[%s1 + $0xdc] sm:$0xf]
  %v99 = vld [vmem:[%s1 + $0xe0] sm:$0xf]
  %v100 = vld [vmem:[%s1 + $0xe4] sm:$0xf]
  %v101 = vld [vmem:[%s1 + $0xe8] sm:$0xf]
  %v102 = vld [vmem:[%s1 + $0xec] sm:$0xf]
  %v103 = vld [vmem:[%s1 + $0xf0] sm:$0xf]
  %v104 = vld [vmem:[%s1 + $0xf4] sm:$0xf]
  %v105 = vld [vmem:[%s1 + $0xf8] sm:$0xf]
  %v106 = vld [vmem:[%s1 + $0xfc] sm:$0xf]
  %v107 = vld [vmem:[%s1 + $0x100] sm:$0xf]
  %v108 = vld [vmem:[%s1 + $0x104] sm:$0xf]
  %v109 = vld [vmem:[%s1 + $0x108] sm:$0xf]
  %v110 = vld [vmem:[%s1 + $0x10c] sm:$0xf]
  %v111 = vld [vmem:[%s1 + $0x110] sm:$0xf]
  %v112 = vld [vmem:[%s1 + $0x114] sm:$0xf]
  %v113 = vld [vmem:[%s1 + $0x118] sm:$0xf]
  %v114 = vld [vmem:[%s1 + $0x11c] sm:$0xf]
  %v115 = vld [vmem:[%s1 + $0x120] sm:$0xf]
  %v116 = vld [vmem:[%s1 + $0x124] sm:$0xf]
  %v117 = vld [vmem:[%s1 + $0x128] sm:$0xf]
  %v118 = vld [vmem:[%s1 + $0x12c] sm:$0xf]
  %v119 = vld [vmem:[%s1 + $0x130] sm:$0xf]
  %v120 = vld [vmem:[%s1 + $0x134] sm:$0xf]
  %v121 = vld [vmem:[%s1 + $0x138] sm:$0xf]
  %v122 = vld [vmem:[%s1 + $0x13c] sm:$0xf]
  %v123 = vld [vmem:[%s1 + $0x140] sm:$0xf]
  %v124 = vld [vmem:[%s1 + $0x144] sm:$0xf]
  %v125 = vld [vmem:[%s1 + $0x148] sm:$0xf]
  %v126 = vld [vmem:[%s1 + $0x14c] sm:$0xf]
  %v127 = vld [vmem:[%s1 + $0x150] sm:$0xf]
  %v128 = vld [vmem:[%s1 + $0x154] sm:$0xf]
  %v129 = vld [vmem:[%s1 + $0x158] sm:$0xf]
  %v130 = vld [vmem:[%s1 + $0x15c] sm:$0xf]
  %v131 = vld [vmem:[%s1 + $0x160] sm:$0xf]
  %v132 = vld [vmem:[%s1 + $0x164] sm:$0xf]
  %v133 = vld [vmem:[%s1 + $0x168] sm:$0xf]
  %v134 = vld [vmem:[%s1 + $0x16c] sm:$0xf]
  %v135 = vld [vmem:[%s1 + $0x170] sm:$0xf]
  %v136 = vld [vmem:[%s1 + $0x174] sm:$0xf]
  %v137 = vld [vmem:[%s1 + $0x178] sm:$0xf]
  %v138 = vld [vmem:[%s1 + $0x17c] sm:$0xf]
  %v139 = vld [vmem:[%s1 + $0x180] sm:$0xf]
  %v140 = vld [vmem:[%s1 + $0x184] sm:$0xf]
  %v141 = vld [vmem:[%s1 + $0x188] sm:$0xf]
  %v142 = vld [vmem:[%s1 + $0x18c] sm:$0xf]
  %v143 = vld [vmem:[%s1 + $0x190] sm:$0xf]
  %v144 = vld [vmem:[%s1 + $0x194] sm:$0xf]
  %v145 = vld [vmem:[%s1 + $0x198] sm:$0xf]
  %v146 = vld [vmem:[%s1 + $0x19c] sm:$0xf]
  %v147 = vld [vmem:[%s1 + $0x1a0] sm:$0xf]
  %v148 = vld [vmem:[%s1 + $0x1a4] sm:$0xf]
  %v149 = vld [vmem:[%s1 + $0x1a8] sm:$0xf]
  %v150 = vld [vmem:[%s1 + $0x1ac] sm:$0xf]
  %v151 = vld [vmem:[%s1 + $0x1b0] sm:$0xf]
  %v152 = vld [vmem:[%s1 + $0x1b4] sm:$0xf]
  %v153 = vld [vmem:[%s1 + $0x1b8] sm:$0xf]
  %v154 = vld [vmem:[%s1 + $0x1bc] sm:$0xf]
  %v155 = vld [vmem:[%s1 + $0x1c0] sm:$0xf]
  %v156 = vld [vmem:[%s1 + $0x1c4] sm:$0xf]
  %v157 = vld [vmem:[%s1 + $0x1c8] sm:$0xf]
  %v158 = vld [vmem:[%s1 + $0x1cc] sm:$0xf]
  %v159 = vld [vmem:[%s1 + $0x1d0] sm:$0xf]
  %v160 = vld [vmem:[%s1 + $0x1d4] sm:$0xf]
  %v161 = vld [vmem:[%s1 + $0x1d8] sm:$0xf]
  %v162 = vld [vmem:[%s1 + $0x1dc] sm:$0xf]
  %v163 = vld [vmem:[%s1 + $0x1e0] sm:$0xf]
  %v164 = vld [vmem:[%s1 + $0x1e4] sm:$0xf]
  %v165 = vld [vmem:[%s1 + $0x1e8] sm:$0xf]
  %v166 = vld [vmem:[%s1 + $0x1ec] sm:$0xf]
  %v167 = vld [vmem:[%s1 + $0x1f0] sm:$0xf]
  %v168 = vld [vmem:[%s1 + $0x1f4] sm:$0xf]
  %v169 = vld [vmem:[%s1 + $0x1f8] sm:$0xf]
  %v170 = vld [vmem:[%s1 + $0x1fc] sm:$0xf]
  %v171 = vld [vmem:[%s1 + $0x200] sm:$0xf]
  %v172 = vld [vmem:[%s1 + $0x204] sm:$0xf]
  %v173 = vld [vmem:[%s1 + $0x208] sm:$0xf]
  %v174 = vld [vmem:[%s1 + $0x20c] sm:$0xf]
  %v175 = vld [vmem:[%s1 + $0x210] sm:$0xf]
  %v176 = vld [vmem:[%s1 + $0x214] sm:$0xf]
  %v177 = vld [vmem:[%s1 + $0x218] sm:$0xf]
  %v178 = vld [vmem:[%s1 + $0x21c] sm:$0xf]
  %v179 = vld [vmem:[%s1 + $0x220] sm:$0xf]
  %v180 = vld [vmem:[%s1 + $0x224] sm:$0xf]
  %v181 = vld [vmem:[%s1 + $0x228] sm:$0xf]
  %v182 = vld [vmem:[%s1 + $0x22c] sm:$0xf]
  %v183 = vld [vmem:[%s1 + $0x230] sm:$0xf]
  %v184 = vld [vmem:[%s1 + $0x234] sm:$0xf]
  %v185 = vld [vmem:[%s1 + $0x238] sm:$0xf]
  %v186 = vld [vmem:[%s1 + $0x23c] sm:$0xf]
  %v187 = vld [vmem:[%s1 + $0x240] sm:$0xf]
  %v188 = vld [vmem:[%s1 + $0x244] sm:$0xf]
  %v189 = vld [vmem:[%s1 + $0x248] sm:$0xf]
  %v190 = vld [vmem:[%s1 + $0x24c] sm:$0xf]
  %v191 = vld [vmem:[%s1 + $0x250] sm:$0xf]
  %v192 = vld [vmem:[%s1 + $0x254] sm:$0xf]
  %v193 = vld [vmem:[%s1 + $0x258] sm:$0xf]
  %v194 = vld [vmem:[%s1 + $0x25c] sm:$0xf]
  %v195 = vld [vmem:[%s1 + $0x260] sm:$0xf]
  %v196 = vld [vmem:[%s1 + $0x264] sm:$0xf]
  %v197 = vld [vmem:[%s1 + $0x268] sm:$0xf]
  %v198 = vld [vmem:[%s1 + $0x26c] sm:$0xf]
  %v199 = vld [vmem:[%s1 + $0x270] sm:$0xf]
  %v200 = vld [vmem:[%s1 + $0x274] sm:$0xf]
  %v201 = vld [vmem:[%s1 + $0x278] sm:$0xf]
  %v202 = vld [vmem:[%s1 + $0x27c] sm:$0xf]
  %v203 = vld [vmem:[%s1 + $0x280] sm:$0xf]
  %v204 = vld [vmem:[%s1 + $0x284] sm:$0xf]
  %v205 = vld [vmem:[%s1 + $0x288] sm:$0xf]
  %v206 = vld [vmem:[%s1 + $0x28c] sm:$0xf]
  %v207 = vld [vmem:[%s1 + $0x290] sm:$0xf]
  %v208 = vld [vmem:[%s1 + $0x294] sm:$0xf]
  %v209 = vld [vmem:[%s1 + $0x298] sm:$0xf]
  %v210 = vld [vmem:[%s1 + $0x29c] sm:$0xf]
  %v211 = vld [vmem:[%s1 + $0x2a0] sm:$0xf]
  %v212 = vld [vmem:[%s1 + $0x2a4] sm:$0xf]
  %v213 = vld [vmem:[%s1 + $0x2a8] sm:$0xf]
  %v214 = vld [vmem:[%s1 + $0x2ac] sm:$0xf]
  %v215 = vld [vmem:[%s1 + $0x2b0] sm:$0xf]
  %v216 = vld [vmem:[%s1 + $0x2b4] sm:$0xf]
  %v217 = vld [vmem:[%s1 + $0x2b8] sm:$0xf]
  %v218 = vld [vmem:[%s1 + $0x2bc] sm:$0xf]
  %v219 = vld [vmem:[%s1 + $0x2c0] sm:$0xf]
  %v220 = vld [vmem:[%s1 + $0x2c4] sm:$0xf]
  %v221 = vld [vmem:[%s1 + $0x2c8] sm:$0xf]
  %v222 = vld [vmem:[%s1 + $0x2cc] sm:$0xf]
  %v223 = vld [vmem:[%s1 + $0x2d0] sm:$0xf]
  %v224 = vld [vmem:[%s1 + $0x2d4] sm:$0xf]
  %v225 = vld [vmem:[%s1 + $0x2d8] sm:$0xf]
  %v226 = vld [vmem:[%s1 + $0x2dc] sm:$0xf]
  %v227 = vld [vmem:[%s1 + $0x2e0] sm:$0xf]
  %v228 = vld [vmem:[%s1 + $0x2e4] sm:$0xf]
  %v229 = vld [vmem:[%s1 + $0x2e8] sm:$0xf]
  %v230 = vld [vmem:[%s1 + $0x2ec] sm:$0xf]
  %v231 = vld [vmem:[%s1 + $0x2f0] sm:$0xf]
  %v232 = vld [vmem:[%s1 + $0x2f4] sm:$0xf]
  %v233 = vld [vmem:[%s1 + $0x2f8] sm:$0xf]
  %v234 = vld [vmem:[%s1 + $0x2fc] sm:$0xf]
  %v235 = vld [vmem:[%s1 + $0x300] sm:$0xf]
  %v236 = vld [vmem:[%s1 + $0x304] sm:$0xf]
  %v237 = vld [vmem:[%s1 + $0x308] sm:$0xf]
  %v238 = vld [vmem:[%s1 + $0x30c] sm:$0xf]
  %v239 = vld [vmem:[%s1 + $0x310] sm:$0xf]
  %v240 = vld [vmem:[%s1 + $0x314] sm:$0xf]
  %v241 = vld [vmem:[%s1 + $0x318] sm:$0xf]
  %v242 = vld [vmem:[%s1 + $0x31c] sm:$0xf]
  %v243 = vld [vmem:[%s1 + $0x320] sm:$0xf]
  %v244 = vld [vmem:[%s1 + $0x324] sm:$0xf]
  %v245 = vld [vmem:[%s1 + $0x328] sm:$0xf]
  %v246 = vld [vmem:[%s1 + $0x32c] sm:$0xf]
  %v247 = vld [vmem:[%s1 + $0x330] sm:$0xf]
  %v248 = vld [vmem:[%s1 + $0x334] sm:$0xf]
  %v249 = vld [vmem:[%s1 + $0x338] sm:$0xf]
  %v250 = vld [vmem:[%s1 + $0x33c] sm:$0xf]
  %v251 = vld [vmem:[%s1 + $0x340] sm:$0xf]
  %v252 = vld [vmem:[%s1 + $0x344] sm:$0xf]
  %v253 = vld [vmem:[%s1 + $0x348] sm:$0xf]
  %v254 = vld [vmem:[%s1 + $0x34c] sm:$0xf]
  %v255 = vld [vmem:[%s1 + $0x350] sm:$0xf]
  %v256 = vld [vmem:[%s1 + $0x354] sm:$0xf]
  %v257 = vld [vmem:[%s1 + $0x358] sm:$0xf]
  %v258 = vld [vmem:[%s1 + $0x35c] sm:$0xf]
  %v259 = vld [vmem:[%s1 + $0x360] sm:$0xf]
  %v260 = vld [vmem:[%s1 + $0x364] sm:$0xf]
  %v261 = vld [vmem:[%s1 + $0x368] sm:$0xf]
  %v262 = vld [vmem:[%s1 + $0x36c] sm:$0xf]
  %v263 = vld [vmem:[%s1 + $0x370] sm:$0xf]
  %v264 = vld [vmem:[%s1 + $0x374] sm:$0xf]
  %v265 = vld [vmem:[%s1 + $0x378] sm:$0xf]
  %v266 = vld [vmem:[%s1 + $0x37c] sm:$0xf]
  %v267 = vld [vmem:[%s1 + $0x380] sm:$0xf]
  %v268 = vld [vmem:[%s1 + $0x384] sm:$0xf]
  %v269 = vld [vmem:[%s1 + $0x388] sm:$0xf]
  %v270 = vld [vmem:[%s1 + $0x38c] sm:$0xf]
  %v271 = vld [vmem:[%s1 + $0x390] sm:$0xf]
  %v272 = vld [vmem:[%s1 + $0x394] sm:$0xf]
  %v273 = vld [vmem:[%s1 + $0x398] sm:$0xf]
  %v274 = vld [vmem:[%s1 + $0x39c] sm:$0xf]
  %v275 = vld [vmem:[%s1 + $0x3a0] sm:$0xf]
  %v276 = vld [vmem:[%s1 + $0x3a4] sm:$0xf]
  %v277 = vld [vmem:[%s1 + $0x3a8] sm:$0xf]
  %v278 = vld [vmem:[%s1 + $0x3ac] sm:$0xf]
  %v279 = vld [vmem:[%s1 + $0x3b0] sm:$0xf]
  %v280 = vld [vmem:[%s1 + $0x3b4] sm:$0xf]
  %v281 = vld [vmem:[%s1 + $0x3b8] sm:$0xf]
  %v282 = vld [vmem:[%s1 + $0x3bc] sm:$0xf]
  %v283 = vld [vmem:[%s1 + $0x3c0] sm:$0xf]
  %v284 = vld [vmem:[%s1 + $0x3c4] sm:$0xf]
  %v285 = vld [vmem:[%s1 + $0x3c8] sm:$0xf]
  %v286 = vld [vmem:[%s1 + $0x3cc] sm:$0xf]
  %v287 = vld [vmem:[%s1 + $0x3d0] sm:$0xf]
  %v288 = vld [vmem:[%s1 + $0x3d4] sm:$0xf]
  %v289 = vld [vmem:[%s1 + $0x3d8] sm:$0xf]
  %v290 = vld [vmem:[%s1 + $0x3dc] sm:$0xf]
  %v291 = vld [vmem:[%s1 + $0x3e0] sm:$0xf]
  %v292 = vld [vmem:[%s1 + $0x3e4] sm:$0xf]
  %v293 = vld [vmem:[%s1 + $0x3e8] sm:$0xf]
  %v294 = vld [vmem:[%s1 + $0x3ec] sm:$0xf]
  %v295 = vld [vmem:[%s1 + $0x3f0] sm:$0xf]
  %v296 = vld [vmem:[%s1 + $0x3f4] sm:$0xf]
  %v297 = vld [vmem:[%s1 + $0x3f8] sm:$0xf]
  %v298 = vld [vmem:[%s1 + $0x3fc] sm:$0xf]
  %v299 = vld [vmem:[%s1 + $0x400] sm:$0xf]
  %v300 = vld [vmem:[%s1 + $0x404] sm:$0xf]
  %v301 = vld [vmem:[%s1 + $0x408] sm:$0xf]
  %v302 = vld [vmem:[%s1 + $0x40c] sm:$0xf]
  %v303 = vld [vmem:[%s1 + $0x410] sm:$0xf]
  %v304 = vld [vmem:[%s1 + $0x414] sm:$0xf]
  %v305 = vld [vmem:[%s1 + $0x418] sm:$0xf]
  %v306 = vld [vmem:[%s1 + $0x41c] sm:$0xf]
  %v307 = vld [vmem:[%s1 + $0x420] sm:$0xf]
  %v308 = vld [vmem:[%s1 + $0x424] sm:$0xf]
  %v309 = vld [vmem:[%s1 + $0x428] sm:$0xf]
  %v310 = vld [vmem:[%s1 + $0x42c] sm:$0xf]
  %v311 = vld [vmem:[%s1 + $0x430] sm:$0xf]
  %v312 = vld [vmem:[%s1 + $0x434] sm:$0xf]
  %v313 = vld [vmem:[%s1 + $0x438] sm:$0xf]
  %v314 = vld [vmem:[%s1 + $0x43c] sm:$0xf]
  %v315 = vld [vmem:[%s1 + $0x440] sm:$0xf]
  %v316 = vld [vmem:[%s1 + $0x444] sm:$0xf]
  %v317 = vld [vmem:[%s1 + $0x448] sm:$0xf]
  %v318 = vld [vmem:[%s1 + $0x44c] sm:$0xf]
  %v319 = vld [vmem:[%s1 + $0x450] sm:$0xf]
  %v320 = vld [vmem:[%s1 + $0x454] sm:$0xf]
  %v321 = vld [vmem:[%s1 + $0x458] sm:$0xf]
  %v322 = vld [vmem:[%s1 + $0x45c] sm:$0xf]
  %v323 = vld [vmem:[%s1 + $0x460] sm:$0xf]
  %v324 = vld [vmem:[%s1 + $0x464] sm:$0xf]
  %v325 = vld [vmem:[%s1 + $0x468] sm:$0xf]
  %v326 = vld [vmem:[%s1 + $0x46c] sm:$0xf]
  %v327 = vld [vmem:[%s1 + $0x470] sm:$0xf]
  %v328 = vld [vmem:[%s1 + $0x474] sm:$0xf]
  %v329 = vld [vmem:[%s1 + $0x478] sm:$0xf]
  %v330 = vld [vmem:[%s1 + $0x47c] sm:$0xf]
  %v331 = vld [vmem:[%s1 + $0x480] sm:$0xf]
  %v332 = vld [vmem:[%s1 + $0x484] sm:$0xf]
  %v333 = vld [vmem:[%s1 + $0x488] sm:$0xf]
  %v334 = vld [vmem:[%s1 + $0x48c] sm:$0xf]
  %v335 = vld [vmem:[%s1 + $0x490] sm:$0xf]
  %v336 = vld [vmem:[%s1 + $0x494] sm:$0xf]
  %v337 = vld [vmem:[%s1 + $0x498] sm:$0xf]
  %v338 = vld [vmem:[%s1 + $0x49c] sm:$0xf]
  %v339 = vld [vmem:[%s1 + $0x4a0] sm:$0xf]
  %v340 = vld [vmem:[%s1 + $0x4a4] sm:$0xf]
  %v341 = vld [vmem:[%s1 + $0x4a8] sm:$0xf]
  %v342 = vld [vmem:[%s1 + $0x4ac] sm:$0xf]
  %v343 = vld [vmem:[%s1 + $0x4b0] sm:$0xf]
  %v344 = vld [vmem:[%s1 + $0x4b4] sm:$0xf]
  %v345 = vld [vmem:[%s1 + $0x4b8] sm:$0xf]
  %v346 = vld [vmem:[%s1 + $0x4bc] sm:$0xf]
  %v367 = vunpack.c.l.b16 %v23
  %v368 = vunpack.c.h.b16 %v23
  %v369 = vunpack.c.l.b16 %v24
  %v370 = vunpack.c.h.b16 %v24
  %v371 = vunpack.c.l.b16 %v25
  %v372 = vunpack.c.h.b16 %v25
  %v373 = vunpack.c.l.b16 %v26
  %v374 = vunpack.c.h.b16 %v26
  %v375 = vunpack.c.l.b16 %v27
  %v376 = vunpack.c.h.b16 %v27
  %v377 = vunpack.c.l.b16 %v28
  %v378 = vunpack.c.h.b16 %v28
  %v379 = vunpack.c.l.b16 %v29
  %v380 = vunpack.c.h.b16 %v29
  %v381 = vunpack.c.l.b16 %v30
  %v382 = vunpack.c.h.b16 %v30
  %v383 = vunpack.c.l.b16 %v31
  %v384 = vunpack.c.h.b16 %v31
  %v385 = vunpack.c.l.b16 %v32
  %v386 = vunpack.c.l.b16 %v33
  %v387 = vunpack.c.h.b16 %v33
  %v388 = vunpack.c.l.b16 %v34
  %v389 = vunpack.c.h.b16 %v34
  %v390 = vunpack.c.l.b16 %v35
  %v391 = vunpack.c.h.b16 %v35
  %v392 = vunpack.c.l.b16 %v36
  %v393 = vunpack.c.h.b16 %v36
  %v394 = vunpack.c.l.b16 %v37
  %v395 = vunpack.c.h.b16 %v37
  %v396 = vunpack.c.l.b16 %v38
  %v397 = vunpack.c.h.b16 %v38
  %v398 = vunpack.c.l.b16 %v39
  %v399 = vunpack.c.h.b16 %v39
  %v400 = vunpack.c.l.b16 %v40
  %v401 = vunpack.c.h.b16 %v40
  %v402 = vunpack.c.l.b16 %v41
  %v403 = vunpack.c.h.b16 %v41
  %v404 = vunpack.c.l.b16 %v42
  %v405 = vpack.c.b16 %v386, %v367
  %v406 = vpack.c.b16 %v387, %v368
  %v407 = vpack.c.b16 %v388, %v369
  %v408 = vpack.c.b16 %v389, %v370
  %v409 = vpack.c.b16 %v390, %v371
  %v410 = vpack.c.b16 %v391, %v372
  %v411 = vpack.c.b16 %v392, %v373
  %v412 = vpack.c.b16 %v393, %v374
  %v413 = vpack.c.b16 %v394, %v375
  %v414 = vpack.c.b16 %v395, %v376
  %v415 = vpack.c.b16 %v396, %v377
  %v416 = vpack.c.b16 %v397, %v378
  %v417 = vpack.c.b16 %v398, %v379
  %v418 = vpack.c.b16 %v399, %v380
  %v419 = vpack.c.b16 %v400, %v381
  %v420 = vpack.c.b16 %v401, %v382
  %v421 = vpack.c.b16 %v402, %v383
  %v422 = vpack.c.b16 %v403, %v384
  %v423 = vpack.c.b16 %v404, %v385
  %v747 = vunpack.c.l.b16 %v43
  %v748 = vunpack.c.l.b16 %v44
  %v749 = vunpack.c.l.b16 %v45
  %v750 = vunpack.c.l.b16 %v46
  %v751 = vunpack.c.l.b16 %v47
  %v752 = vunpack.c.l.b16 %v48
  %v753 = vunpack.c.l.b16 %v49
  %v754 = vunpack.c.l.b16 %v50
  %v755 = vunpack.c.l.b16 %v51
  %v756 = vunpack.c.l.b16 %v52
  %v757 = vunpack.c.l.b16 %v53
  %v758 = vunpack.c.l.b16 %v54
  %v759 = vunpack.c.l.b16 %v55
  %v760 = vunpack.c.l.b16 %v56
  %v761 = vunpack.c.l.b16 %v57
  %v762 = vunpack.c.l.b16 %v58
  %v763 = vunpack.c.l.b16 %v59
  %v764 = vunpack.c.l.b16 %v60
  %v765 = vunpack.c.l.b16 %v61
  %v766 = vunpack.c.l.b16 %v62
  %v767 = vunpack.c.l.b16 %v63
  %v768 = vunpack.c.l.b16 %v64
  %v769 = vunpack.c.l.b16 %v65
  %v770 = vunpack.c.l.b16 %v66
  %v771 = vunpack.c.l.b16 %v67
  %v772 = vunpack.c.l.b16 %v68
  %v773 = vunpack.c.l.b16 %v69
  %v774 = vunpack.c.l.b16 %v70
  %v775 = vunpack.c.l.b16 %v71
  %v776 = vunpack.c.l.b16 %v72
  %v777 = vunpack.c.l.b16 %v73
  %v778 = vunpack.c.l.b16 %v74
  %v779 = vunpack.c.l.b16 %v75
  %v780 = vunpack.c.l.b16 %v76
  %v781 = vunpack.c.l.b16 %v77
  %v782 = vunpack.c.l.b16 %v78
  %v783 = vunpack.c.l.b16 %v79
  %v784 = vunpack.c.l.b16 %v80
  %v785 = vunpack.c.l.b16 %v81
  %v786 = vunpack.c.l.b16 %v82
  %v787 = vunpack.c.l.b16 %v83
  %v788 = vunpack.c.l.b16 %v84
  %v789 = vunpack.c.l.b16 %v85
  %v790 = vunpack.c.l.b16 %v86
  %v791 = vunpack.c.l.b16 %v87
  %v792 = vunpack.c.l.b16 %v88
  %v793 = vunpack.c.l.b16 %v89
  %v794 = vunpack.c.l.b16 %v90
  %v795 = vunpack.c.l.b16 %v91
  %v796 = vunpack.c.l.b16 %v92
  %v797 = vunpack.c.l.b16 %v93
  %v798 = vunpack.c.l.b16 %v94
  %v799 = vunpack.c.l.b16 %v95
  %v800 = vunpack.c.l.b16 %v96
  %v801 = vunpack.c.l.b16 %v97
  %v802 = vunpack.c.l.b16 %v98
  %v803 = vunpack.c.l.b16 %v99
  %v804 = vunpack.c.l.b16 %v100
  %v805 = vunpack.c.l.b16 %v101
  %v806 = vunpack.c.l.b16 %v102
  %v807 = vunpack.c.l.b16 %v103
  %v808 = vunpack.c.l.b16 %v104
  %v809 = vunpack.c.l.b16 %v105
  %v810 = vunpack.c.l.b16 %v106
  %v811 = vunpack.c.l.b16 %v107
  %v812 = vunpack.c.l.b16 %v108
  %v813 = vunpack.c.l.b16 %v109
  %v814 = vunpack.c.l.b16 %v110
  %v815 = vunpack.c.l.b16 %v111
  %v816 = vunpack.c.l.b16 %v112
  %v817 = vunpack.c.l.b16 %v113
  %v818 = vunpack.c.l.b16 %v114
  %v819 = vunpack.c.l.b16 %v115
  %v820 = vunpack.c.l.b16 %v116
  %v821 = vunpack.c.l.b16 %v117
  %v822 = vunpack.c.l.b16 %v118
  %v823 = vunpack.c.l.b16 %v119
  %v824 = vunpack.c.l.b16 %v120
  %v825 = vunpack.c.l.b16 %v121
  %v826 = vunpack.c.l.b16 %v122
  %v827 = vunpack.c.l.b16 %v123
  %v828 = vunpack.c.l.b16 %v124
  %v829 = vunpack.c.l.b16 %v125
  %v830 = vunpack.c.l.b16 %v126
  %v831 = vunpack.c.l.b16 %v127
  %v832 = vunpack.c.l.b16 %v128
  %v833 = vunpack.c.l.b16 %v129
  %v834 = vunpack.c.l.b16 %v130
  %v835 = vunpack.c.l.b16 %v131
  %v836 = vunpack.c.l.b16 %v132
  %v837 = vunpack.c.l.b16 %v133
  %v838 = vunpack.c.l.b16 %v134
  %v839 = vunpack.c.l.b16 %v135
  %v840 = vunpack.c.l.b16 %v136
  %v841 = vunpack.c.l.b16 %v137
  %v842 = vunpack.c.l.b16 %v138
  %v843 = vunpack.c.l.b16 %v139
  %v844 = vunpack.c.l.b16 %v140
  %v845 = vunpack.c.l.b16 %v141
  %v846 = vunpack.c.l.b16 %v142
  %v847 = vunpack.c.l.b16 %v143
  %v848 = vunpack.c.l.b16 %v144
  %v849 = vunpack.c.l.b16 %v145
  %v850 = vunpack.c.l.b16 %v146
  %v851 = vunpack.c.l.b16 %v147
  %v852 = vunpack.c.l.b16 %v148
  %v853 = vunpack.c.l.b16 %v149
  %v854 = vunpack.c.l.b16 %v150
  %v855 = vunpack.c.l.b16 %v151
  %v856 = vunpack.c.l.b16 %v152
  %v857 = vunpack.c.l.b16 %v153
  %v858 = vunpack.c.l.b16 %v154
  %v859 = vunpack.c.l.b16 %v155
  %v860 = vunpack.c.l.b16 %v156
  %v861 = vunpack.c.l.b16 %v157
  %v862 = vunpack.c.l.b16 %v158
  %v863 = vunpack.c.l.b16 %v159
  %v864 = vunpack.c.l.b16 %v160
  %v865 = vunpack.c.l.b16 %v161
  %v866 = vunpack.c.l.b16 %v162
  %v867 = vunpack.c.l.b16 %v163
  %v868 = vunpack.c.l.b16 %v164
  %v869 = vunpack.c.l.b16 %v165
  %v870 = vunpack.c.l.b16 %v166
  %v871 = vunpack.c.l.b16 %v167
  %v872 = vunpack.c.l.b16 %v168
  %v873 = vunpack.c.l.b16 %v169
  %v874 = vunpack.c.l.b16 %v170
  %v875 = vunpack.c.l.b16 %v171
  %v876 = vunpack.c.l.b16 %v172
  %v877 = vunpack.c.l.b16 %v173
  %v878 = vunpack.c.l.b16 %v174
  %v879 = vunpack.c.l.b16 %v175
  %v880 = vunpack.c.l.b16 %v176
  %v881 = vunpack.c.l.b16 %v177
  %v882 = vunpack.c.l.b16 %v178
  %v883 = vunpack.c.l.b16 %v179
  %v884 = vunpack.c.l.b16 %v180
  %v885 = vunpack.c.l.b16 %v181
  %v886 = vunpack.c.l.b16 %v182
  %v887 = vunpack.c.l.b16 %v183
  %v888 = vunpack.c.l.b16 %v184
  %v889 = vunpack.c.l.b16 %v185
  %v890 = vunpack.c.l.b16 %v186
  %v891 = vunpack.c.l.b16 %v187
  %v892 = vunpack.c.l.b16 %v188
  %v893 = vunpack.c.l.b16 %v189
  %v894 = vunpack.c.l.b16 %v190
  %v895 = vunpack.c.l.b16 %v191
  %v896 = vunpack.c.l.b16 %v192
  %v897 = vunpack.c.l.b16 %v193
  %v898 = vunpack.c.l.b16 %v194
  %v899 = vunpack.c.l.b16 %v195
  %v900 = vunpack.c.l.b16 %v196
  %v901 = vunpack.c.l.b16 %v197
  %v902 = vunpack.c.l.b16 %v198
  %v903 = vunpack.c.l.b16 %v199
  %v904 = vunpack.c.l.b16 %v200
  %v905 = vunpack.c.l.b16 %v201
  %v906 = vunpack.c.l.b16 %v202
  %v907 = vunpack.c.l.b16 %v203
  %v908 = vunpack.c.l.b16 %v204
  %v909 = vunpack.c.l.b16 %v205
  %v910 = vunpack.c.l.b16 %v206
  %v911 = vunpack.c.l.b16 %v207
  %v912 = vunpack.c.l.b16 %v208
  %v913 = vunpack.c.l.b16 %v209
  %v914 = vunpack.c.l.b16 %v210
  %v915 = vunpack.c.l.b16 %v211
  %v916 = vunpack.c.l.b16 %v212
  %v917 = vunpack.c.l.b16 %v213
  %v918 = vunpack.c.l.b16 %v214
  %v919 = vunpack.c.l.b16 %v215
  %v920 = vunpack.c.l.b16 %v216
  %v921 = vunpack.c.l.b16 %v217
  %v922 = vunpack.c.l.b16 %v218
  %v923 = vunpack.c.l.b16 %v219
  %v924 = vunpack.c.l.b16 %v220
  %v925 = vunpack.c.l.b16 %v221
  %v926 = vunpack.c.l.b16 %v222
  %v927 = vunpack.c.l.b16 %v223
  %v928 = vunpack.c.l.b16 %v224
  %v929 = vunpack.c.l.b16 %v225
  %v930 = vunpack.c.l.b16 %v226
  %v931 = vunpack.c.l.b16 %v227
  %v932 = vunpack.c.l.b16 %v228
  %v933 = vunpack.c.l.b16 %v229
  %v934 = vunpack.c.l.b16 %v230
  %v935 = vunpack.c.l.b16 %v231
  %v936 = vunpack.c.l.b16 %v232
  %v937 = vunpack.c.l.b16 %v233
  %v938 = vunpack.c.l.b16 %v234
  %v939 = vunpack.c.l.b16 %v235
  %v940 = vunpack.c.l.b16 %v236
  %v941 = vunpack.c.l.b16 %v237
  %v942 = vunpack.c.l.b16 %v238
  %v943 = vunpack.c.l.b16 %v239
  %v944 = vunpack.c.l.b16 %v240
  %v945 = vunpack.c.l.b16 %v241
  %v946 = vunpack.c.l.b16 %v242
  %v947 = vunpack.c.l.b16 %v243
  %v948 = vunpack.c.l.b16 %v244
  %v949 = vunpack.c.l.b16 %v245
  %v950 = vunpack.c.l.b16 %v246
  %v951 = vunpack.c.l.b16 %v247
  %v952 = vunpack.c.l.b16 %v248
  %v953 = vunpack.c.l.b16 %v249
  %v954 = vunpack.c.l.b16 %v250
  %v955 = vunpack.c.l.b16 %v251
  %v956 = vunpack.c.l.b16 %v252
  %v957 = vunpack.c.l.b16 %v253
  %v958 = vunpack.c.l.b16 %v254
  %v959 = vunpack.c.l.b16 %v255
  %v960 = vunpack.c.l.b16 %v256
  %v961 = vunpack.c.l.b16 %v257
  %v962 = vunpack.c.l.b16 %v258
  %v963 = vunpack.c.l.b16 %v259
  %v964 = vunpack.c.l.b16 %v260
  %v965 = vunpack.c.l.b16 %v261
  %v966 = vunpack.c.l.b16 %v262
  %v967 = vunpack.c.l.b16 %v263
  %v968 = vunpack.c.l.b16 %v264
  %v969 = vunpack.c.l.b16 %v265
  %v970 = vunpack.c.l.b16 %v266
  %v971 = vunpack.c.l.b16 %v267
  %v972 = vunpack.c.l.b16 %v268
  %v973 = vunpack.c.l.b16 %v269
  %v974 = vunpack.c.l.b16 %v270
  %v975 = vunpack.c.l.b16 %v271
  %v976 = vunpack.c.l.b16 %v272
  %v977 = vunpack.c.l.b16 %v273
  %v978 = vunpack.c.l.b16 %v274
  %v979 = vunpack.c.l.b16 %v275
  %v980 = vunpack.c.l.b16 %v276
  %v981 = vunpack.c.l.b16 %v277
  %v982 = vunpack.c.l.b16 %v278
  %v983 = vunpack.c.l.b16 %v279
  %v984 = vunpack.c.l.b16 %v280
  %v985 = vunpack.c.l.b16 %v281
  %v986 = vunpack.c.l.b16 %v282
  %v987 = vunpack.c.l.b16 %v283
  %v988 = vunpack.c.l.b16 %v284
  %v989 = vunpack.c.l.b16 %v285
  %v990 = vunpack.c.l.b16 %v286
  %v991 = vunpack.c.l.b16 %v287
  %v992 = vunpack.c.l.b16 %v288
  %v993 = vunpack.c.l.b16 %v289
  %v994 = vunpack.c.l.b16 %v290
  %v995 = vunpack.c.l.b16 %v291
  %v996 = vunpack.c.l.b16 %v292
  %v997 = vunpack.c.l.b16 %v293
  %v998 = vunpack.c.l.b16 %v294
  %v999 = vunpack.c.l.b16 %v295
  %v1000 = vunpack.c.l.b16 %v296
  %v1001 = vunpack.c.l.b16 %v297
  %v1002 = vunpack.c.l.b16 %v298
  %v1003 = vunpack.c.l.b16 %v299
  %v1004 = vunpack.c.l.b16 %v300
  %v1005 = vunpack.c.l.b16 %v301
  %v1006 = vunpack.c.l.b16 %v302
  %v1007 = vunpack.c.l.b16 %v303
  %v1008 = vunpack.c.l.b16 %v304
  %v1009 = vunpack.c.l.b16 %v305
  %v1010 = vunpack.c.l.b16 %v306
  %v1011 = vunpack.c.l.b16 %v307
  %v1012 = vunpack.c.l.b16 %v308
  %v1013 = vunpack.c.l.b16 %v309
  %v1014 = vunpack.c.l.b16 %v310
  %v1015 = vunpack.c.l.b16 %v311
  %v1016 = vunpack.c.l.b16 %v312
  %v1017 = vunpack.c.l.b16 %v313
  %v1018 = vunpack.c.l.b16 %v314
  %v1019 = vunpack.c.l.b16 %v315
  %v1020 = vunpack.c.l.b16 %v316
  %v1021 = vunpack.c.l.b16 %v317
  %v1022 = vunpack.c.l.b16 %v318
  %v1023 = vunpack.c.l.b16 %v319
  %v1024 = vunpack.c.l.b16 %v320
  %v1025 = vunpack.c.l.b16 %v321
  %v1026 = vunpack.c.l.b16 %v322
  %v1027 = vunpack.c.l.b16 %v323
  %v1028 = vunpack.c.l.b16 %v324
  %v1029 = vunpack.c.l.b16 %v325
  %v1030 = vunpack.c.l.b16 %v326
  %v1031 = vunpack.c.l.b16 %v327
  %v1032 = vunpack.c.l.b16 %v328
  %v1033 = vunpack.c.l.b16 %v329
  %v1034 = vunpack.c.l.b16 %v330
  %v1035 = vunpack.c.l.b16 %v331
  %v1036 = vunpack.c.l.b16 %v332
  %v1037 = vunpack.c.l.b16 %v333
  %v1038 = vunpack.c.l.b16 %v334
  %v1039 = vunpack.c.l.b16 %v335
  %v1040 = vunpack.c.l.b16 %v336
  %v1041 = vunpack.c.l.b16 %v337
  %v1042 = vunpack.c.l.b16 %v338
  %v1043 = vunpack.c.l.b16 %v339
  %v1044 = vunpack.c.l.b16 %v340
  %v1045 = vunpack.c.l.b16 %v341
  %v1046 = vunpack.c.l.b16 %v342
  %v1047 = vunpack.c.l.b16 %v343
  %v1048 = vunpack.c.l.b16 %v344
  %v1049 = vunpack.c.l.b16 %v345
  %v1050 = vunpack.c.l.b16 %v346
  %v1051 = vpack.c.b16 %v748, %v747
  %v1052 = vpack.c.b16 %v750, %v749
  %v1053 = vpack.c.b16 %v752, %v751
  %v1054 = vpack.c.b16 %v754, %v753
  %v1055 = vpack.c.b16 %v756, %v755
  %v1056 = vpack.c.b16 %v758, %v757
  %v1057 = vpack.c.b16 %v760, %v759
  %v1058 = vpack.c.b16 %v762, %v761
  %v1059 = vpack.c.b16 %v764, %v763
  %v1060 = vpack.c.b16 %v766, %v765
  %v1061 = vpack.c.b16 %v768, %v767
  %v1062 = vpack.c.b16 %v770, %v769
  %v1063 = vpack.c.b16 %v772, %v771
  %v1064 = vpack.c.b16 %v774, %v773
  %v1065 = vpack.c.b16 %v776, %v775
  %v1066 = vpack.c.b16 %v778, %v777
  %v1067 = vpack.c.b16 %v780, %v779
  %v1068 = vpack.c.b16 %v782, %v781
  %v1069 = vpack.c.b16 %v784, %v783
  %v1070 = vpack.c.b16 %v786, %v785
  %v1071 = vpack.c.b16 %v788, %v787
  %v1072 = vpack.c.b16 %v790, %v789
  %v1073 = vpack.c.b16 %v792, %v791
  %v1074 = vpack.c.b16 %v794, %v793
  %v1075 = vpack.c.b16 %v796, %v795
  %v1076 = vpack.c.b16 %v798, %v797
  %v1077 = vpack.c.b16 %v800, %v799
  %v1078 = vpack.c.b16 %v802, %v801
  %v1079 = vpack.c.b16 %v804, %v803
  %v1080 = vpack.c.b16 %v806, %v805
  %v1081 = vpack.c.b16 %v808, %v807
  %v1082 = vpack.c.b16 %v810, %v809
  %v1083 = vpack.c.b16 %v812, %v811
  %v1084 = vpack.c.b16 %v814, %v813
  %v1085 = vpack.c.b16 %v816, %v815
  %v1086 = vpack.c.b16 %v818, %v817
  %v1087 = vpack.c.b16 %v820, %v819
  %v1088 = vpack.c.b16 %v822, %v821
  %v1089 = vpack.c.b16 %v824, %v823
  %v1090 = vpack.c.b16 %v826, %v825
  %v1091 = vpack.c.b16 %v828, %v827
  %v1092 = vpack.c.b16 %v830, %v829
  %v1093 = vpack.c.b16 %v832, %v831
  %v1094 = vpack.c.b16 %v834, %v833
  %v1095 = vpack.c.b16 %v836, %v835
  %v1096 = vpack.c.b16 %v838, %v837
  %v1097 = vpack.c.b16 %v840, %v839
  %v1098 = vpack.c.b16 %v842, %v841
  %v1099 = vpack.c.b16 %v844, %v843
  %v1100 = vpack.c.b16 %v846, %v845
  %v1101 = vpack.c.b16 %v848, %v847
  %v1102 = vpack.c.b16 %v850, %v849
  %v1103 = vpack.c.b16 %v852, %v851
  %v1104 = vpack.c.b16 %v854, %v853
  %v1105 = vpack.c.b16 %v856, %v855
  %v1106 = vpack.c.b16 %v858, %v857
  %v1107 = vpack.c.b16 %v860, %v859
  %v1108 = vpack.c.b16 %v862, %v861
  %v1109 = vpack.c.b16 %v864, %v863
  %v1110 = vpack.c.b16 %v866, %v865
  %v1111 = vpack.c.b16 %v868, %v867
  %v1112 = vpack.c.b16 %v870, %v869
  %v1113 = vpack.c.b16 %v872, %v871
  %v1114 = vpack.c.b16 %v874, %v873
  %v1115 = vpack.c.b16 %v876, %v875
  %v1116 = vpack.c.b16 %v878, %v877
  %v1117 = vpack.c.b16 %v880, %v879
  %v1118 = vpack.c.b16 %v882, %v881
  %v1119 = vpack.c.b16 %v884, %v883
  %v1120 = vpack.c.b16 %v886, %v885
  %v1121 = vpack.c.b16 %v888, %v887
  %v1122 = vpack.c.b16 %v890, %v889
  %v1123 = vpack.c.b16 %v892, %v891
  %v1124 = vpack.c.b16 %v894, %v893
  %v1125 = vpack.c.b16 %v896, %v895
  %v1126 = vpack.c.b16 %v898, %v897
  %v1127 = vpack.c.b16 %v900, %v899
  %v1128 = vpack.c.b16 %v902, %v901
  %v1129 = vpack.c.b16 %v904, %v903
  %v1130 = vpack.c.b16 %v906, %v905
  %v1131 = vpack.c.b16 %v908, %v907
  %v1132 = vpack.c.b16 %v910, %v909
  %v1133 = vpack.c.b16 %v912, %v911
  %v1134 = vpack.c.b16 %v914, %v913
  %v1135 = vpack.c.b16 %v916, %v915
  %v1136 = vpack.c.b16 %v918, %v917
  %v1137 = vpack.c.b16 %v920, %v919
  %v1138 = vpack.c.b16 %v922, %v921
  %v1139 = vpack.c.b16 %v924, %v923
  %v1140 = vpack.c.b16 %v926, %v925
  %v1141 = vpack.c.b16 %v928, %v927
  %v1142 = vpack.c.b16 %v930, %v929
  %v1143 = vpack.c.b16 %v932, %v931
  %v1144 = vpack.c.b16 %v934, %v933
  %v1145 = vpack.c.b16 %v936, %v935
  %v1146 = vpack.c.b16 %v938, %v937
  %v1147 = vpack.c.b16 %v940, %v939
  %v1148 = vpack.c.b16 %v942, %v941
  %v1149 = vpack.c.b16 %v944, %v943
  %v1150 = vpack.c.b16 %v946, %v945
  %v1151 = vpack.c.b16 %v948, %v947
  %v1152 = vpack.c.b16 %v950, %v949
  %v1153 = vpack.c.b16 %v952, %v951
  %v1154 = vpack.c.b16 %v954, %v953
  %v1155 = vpack.c.b16 %v956, %v955
  %v1156 = vpack.c.b16 %v958, %v957
  %v1157 = vpack.c.b16 %v960, %v959
  %v1158 = vpack.c.b16 %v962, %v961
  %v1159 = vpack.c.b16 %v964, %v963
  %v1160 = vpack.c.b16 %v966, %v965
  %v1161 = vpack.c.b16 %v968, %v967
  %v1162 = vpack.c.b16 %v970, %v969
  %v1163 = vpack.c.b16 %v972, %v971
  %v1164 = vpack.c.b16 %v974, %v973
  %v1165 = vpack.c.b16 %v976, %v975
  %v1166 = vpack.c.b16 %v978, %v977
  %v1167 = vpack.c.b16 %v980, %v979
  %v1168 = vpack.c.b16 %v982, %v981
  %v1169 = vpack.c.b16 %v984, %v983
  %v1170 = vpack.c.b16 %v986, %v985
  %v1171 = vpack.c.b16 %v988, %v987
  %v1172 = vpack.c.b16 %v990, %v989
  %v1173 = vpack.c.b16 %v992, %v991
  %v1174 = vpack.c.b16 %v994, %v993
  %v1175 = vpack.c.b16 %v996, %v995
  %v1176 = vpack.c.b16 %v998, %v997
  %v1177 = vpack.c.b16 %v1000, %v999
  %v1178 = vpack.c.b16 %v1002, %v1001
  %v1179 = vpack.c.b16 %v1004, %v1003
  %v1180 = vpack.c.b16 %v1006, %v1005
  %v1181 = vpack.c.b16 %v1008, %v1007
  %v1182 = vpack.c.b16 %v1010, %v1009
  %v1183 = vpack.c.b16 %v1012, %v1011
  %v1184 = vpack.c.b16 %v1014, %v1013
  %v1185 = vpack.c.b16 %v1016, %v1015
  %v1186 = vpack.c.b16 %v1018, %v1017
  %v1187 = vpack.c.b16 %v1020, %v1019
  %v1188 = vpack.c.b16 %v1022, %v1021
  %v1189 = vpack.c.b16 %v1024, %v1023
  %v1190 = vpack.c.b16 %v1026, %v1025
  %v1191 = vpack.c.b16 %v1028, %v1027
  %v1192 = vpack.c.b16 %v1030, %v1029
  %v1193 = vpack.c.b16 %v1032, %v1031
  %v1194 = vpack.c.b16 %v1034, %v1033
  %v1195 = vpack.c.b16 %v1036, %v1035
  %v1196 = vpack.c.b16 %v1038, %v1037
  %v1197 = vpack.c.b16 %v1040, %v1039
  %v1198 = vpack.c.b16 %v1042, %v1041
  %v1199 = vpack.c.b16 %v1044, %v1043
  %v1200 = vpack.c.b16 %v1046, %v1045
  %v1201 = vpack.c.b16 %v1048, %v1047
  %v1202 = vpack.c.b16 %v1050, %v1049
  %1355 = vmatprep.subr.bf16.mxu0 0
  %1356 = vmatpush1.bf16.msra.mxu0 %v1051
  %1357 = vmatprep.subr.bf16.mxu0 0
  %1358 = vmatpush1.bf16.msra.mxu0 %v1052
  %1359 = vmatprep.subr.bf16.mxu0 0
  %1360 = vmatpush1.bf16.msra.mxu0 %v1053
  %1361 = vmatprep.subr.bf16.mxu0 0
  %1362 = vmatpush1.bf16.msra.mxu0 %v1054
  %1363 = vmatprep.subr.bf16.mxu0 0
  %1364 = vmatpush1.bf16.msra.mxu0 %v1055
  %1365 = vmatprep.subr.bf16.mxu0 0
  %1366 = vmatpush1.bf16.msra.mxu0 %v1056
  %1367 = vmatprep.subr.bf16.mxu0 0
  %1368 = vmatpush1.bf16.msra.mxu0 %v1057
  %1369 = vmatprep.subr.bf16.mxu0 0
  %1370 = vmatpush1.bf16.msra.mxu0 %v1058
  %1371 = vmatprep.subr.bf16.mxu0 0
  %1372 = vmatpush1.bf16.msra.mxu0 %v1059
  %1373 = vmatprep.subr.bf16.mxu0 0
  %1374 = vmatpush1.bf16.msra.mxu0 %v1060
  %1375 = vmatprep.subr.bf16.mxu0 0
  %1376 = vmatpush1.bf16.msra.mxu0 %v1061
  %1377 = vmatprep.subr.bf16.mxu0 0
  %1378 = vmatpush1.bf16.msra.mxu0 %v1062
  %1379 = vmatprep.subr.bf16.mxu0 0
  %1380 = vmatpush1.bf16.msra.mxu0 %v1063
  %1381 = vmatprep.subr.bf16.mxu0 0
  %1382 = vmatpush1.bf16.msra.mxu0 %v1064
  %1383 = vmatprep.subr.bf16.mxu0 0
  %1384 = vmatpush1.bf16.msra.mxu0 %v1065
  %1385 = vmatprep.subr.bf16.mxu0 0
  %1386 = vmatpush1.bf16.msra.mxu0 %v1066
  %1387 = vmatprep.mubr.bf16.mxu0 %v406
  %1388 = vmatmul.mubr.bf16.gmra.mrb[0].mxu0 %v405
  %v1389 = vpop.f32.mrb[0].mxu0
  %v1390 = vadd.f32 0.0, %v1389
  %v1391 = vpop.f32.mrb[0].mxu0
  %v1392 = vpop.f32.mrb[0].mxu0
  %v1393 = vadd.f32 0.0, %v1392
  %v1394 = vpop.f32.mrb[0].mxu0
  %1395 = vdwg.mxu0
  %1396 = vmatprep.subr.bf16.mxu0 0
  %1397 = vmatpush1.bf16.msra.mxu0 %v1067
  %1398 = vmatprep.subr.bf16.mxu0 0
  %1399 = vmatpush1.bf16.msra.mxu0 %v1068
  %1400 = vmatprep.subr.bf16.mxu0 0
  %1401 = vmatpush1.bf16.msra.mxu0 %v1069
  %1402 = vmatprep.subr.bf16.mxu0 0
  %1403 = vmatpush1.bf16.msra.mxu0 %v1070
  %1404 = vmatprep.subr.bf16.mxu0 0
  %1405 = vmatpush1.bf16.msra.mxu0 %v1071
  %1406 = vmatprep.subr.bf16.mxu0 0
  %1407 = vmatpush1.bf16.msra.mxu0 %v1072
  %1408 = vmatprep.subr.bf16.mxu0 0
  %1409 = vmatpush1.bf16.msra.mxu0 %v1073
  %1410 = vmatprep.subr.bf16.mxu0 0
  %1411 = vmatpush1.bf16.msra.mxu0 %v1074
  %1412 = vmatprep.subr.bf16.mxu0 0
  %1413 = vmatpush1.bf16.msra.mxu0 %v1075
  %1414 = vmatprep.subr.bf16.mxu0 0
  %1415 = vmatpush1.bf16.msra.mxu0 %v1076
  %1416 = vmatprep.subr.bf16.mxu0 0
  %1417 = vmatpush1.bf16.msra.mxu0 %v1077
  %1418 = vmatprep.subr.bf16.mxu0 0
  %1419 = vmatpush1.bf16.msra.mxu0 %v1078
  %1420 = vmatprep.subr.bf16.mxu0 0
  %1421 = vmatpush1.bf16.msra.mxu0 %v1079
  %1422 = vmatprep.subr.bf16.mxu0 0
  %1423 = vmatpush1.bf16.msra.mxu0 %v1080
  %1424 = vmatprep.subr.bf16.mxu0 0
  %1425 = vmatpush1.bf16.msra.mxu0 %v1081
  %1426 = vmatprep.subr.bf16.mxu0 0
  %1427 = vmatpush1.bf16.msra.mxu0 %v1082
  %1428 = vmatprep.mubr.bf16.mxu0 %v408
  %1429 = vmatmul.mubr.bf16.gmra.mrb[0].mxu0 %v407
  %v1430 = vpop.f32.mrb[0].mxu0
  %v1431 = vadd.f32 %v1390, %v1430
  %v1432 = vpop.f32.mrb[0].mxu0
  %v1433 = vpop.f32.mrb[0].mxu0
  %v1434 = vadd.f32 %v1393, %v1433
  %v1435 = vpop.f32.mrb[0].mxu0
  %1436 = vdwg.mxu0
  %1437 = vmatprep.subr.bf16.mxu0 0
  %1438 = vmatpush1.bf16.msra.mxu0 %v1083
  %1439 = vmatprep.subr.bf16.mxu0 0
  %1440 = vmatpush1.bf16.msra.mxu0 %v1084
  %1441 = vmatprep.subr.bf16.mxu0 0
  %1442 = vmatpush1.bf16.msra.mxu0 %v1085
  %1443 = vmatprep.subr.bf16.mxu0 0
  %1444 = vmatpush1.bf16.msra.mxu0 %v1086
  %1445 = vmatprep.subr.bf16.mxu0 0
  %1446 = vmatpush1.bf16.msra.mxu0 %v1087
  %1447 = vmatprep.subr.bf16.mxu0 0
  %1448 = vmatpush1.bf16.msra.mxu0 %v1088
  %1449 = vmatprep.subr.bf16.mxu0 0
  %1450 = vmatpush1.bf16.msra.mxu0 %v1089
  %1451 = vmatprep.subr.bf16.mxu0 0
  %1452 = vmatpush1.bf16.msra.mxu0 %v1090
  %1453 = vmatprep.subr.bf16.mxu0 0
  %1454 = vmatpush1.bf16.msra.mxu0 %v1091
  %1455 = vmatprep.subr.bf16.mxu0 0
  %1456 = vmatpush1.bf16.msra.mxu0 %v1092
  %1457 = vmatprep.subr.bf16.mxu0 0
  %1458 = vmatpush1.bf16.msra.mxu0 %v1093
  %1459 = vmatprep.subr.bf16.mxu0 0
  %1460 = vmatpush1.bf16.msra.mxu0 %v1094
  %1461 = vmatprep.subr.bf16.mxu0 0
  %1462 = vmatpush1.bf16.msra.mxu0 %v1095
  %1463 = vmatprep.subr.bf16.mxu0 0
  %1464 = vmatpush1.bf16.msra.mxu0 %v1096
  %1465 = vmatprep.subr.bf16.mxu0 0
  %1466 = vmatpush1.bf16.msra.mxu0 %v1097
  %1467 = vmatprep.subr.bf16.mxu0 0
  %1468 = vmatpush1.bf16.msra.mxu0 %v1098
  %1469 = vmatprep.mubr.bf16.mxu0 %v410
  %1470 = vmatmul.mubr.bf16.gmra.mrb[0].mxu0 %v409
  %v1471 = vpop.f32.mrb[0].mxu0
  %v1472 = vadd.f32 %v1431, %v1471
  %v1473 = vpop.f32.mrb[0].mxu0
  %v1474 = vpop.f32.mrb[0].mxu0
  %v1475 = vadd.f32 %v1434, %v1474
  %v1476 = vpop.f32.mrb[0].mxu0
  %1477 = vdwg.mxu0
  %1478 = vmatprep.subr.bf16.mxu0 0
  %1479 = vmatpush1.bf16.msra.mxu0 %v1099
  %1480 = vmatprep.subr.bf16.mxu0 0
  %1481 = vmatpush1.bf16.msra.mxu0 %v1100
  %1482 = vmatprep.subr.bf16.mxu0 0
  %1483 = vmatpush1.bf16.msra.mxu0 %v1101
  %1484 = vmatprep.subr.bf16.mxu0 0
  %1485 = vmatpush1.bf16.msra.mxu0 %v1102
  %1486 = vmatprep.subr.bf16.mxu0 0
  %1487 = vmatpush1.bf16.msra.mxu0 %v1103
  %1488 = vmatprep.subr.bf16.mxu0 0
  %1489 = vmatpush1.bf16.msra.mxu0 %v1104
  %1490 = vmatprep.subr.bf16.mxu0 0
  %1491 = vmatpush1.bf16.msra.mxu0 %v1105
  %1492 = vmatprep.subr.bf16.mxu0 0
  %1493 = vmatpush1.bf16.msra.mxu0 %v1106
  %1494 = vmatprep.subr.bf16.mxu0 0
  %1495 = vmatpush1.bf16.msra.mxu0 %v1107
  %1496 = vmatprep.subr.bf16.mxu0 0
  %1497 = vmatpush1.bf16.msra.mxu0 %v1108
  %1498 = vmatprep.subr.bf16.mxu0 0
  %1499 = vmatpush1.bf16.msra.mxu0 %v1109
  %1500 = vmatprep.subr.bf16.mxu0 0
  %1501 = vmatpush1.bf16.msra.mxu0 %v1110
  %1502 = vmatprep.subr.bf16.mxu0 0
  %1503 = vmatpush1.bf16.msra.mxu0 %v1111
  %1504 = vmatprep.subr.bf16.mxu0 0
  %1505 = vmatpush1.bf16.msra.mxu0 %v1112
  %1506 = vmatprep.subr.bf16.mxu0 0
  %1507 = vmatpush1.bf16.msra.mxu0 %v1113
  %1508 = vmatprep.subr.bf16.mxu0 0
  %1509 = vmatpush1.bf16.msra.mxu0 %v1114
  %1510 = vmatprep.mubr.bf16.mxu0 %v412
  %1511 = vmatmul.mubr.bf16.gmra.mrb[0].mxu0 %v411
  %v1512 = vpop.f32.mrb[0].mxu0
  %v1513 = vadd.f32 %v1472, %v1512
  %v1514 = vpop.f32.mrb[0].mxu0
  %v1515 = vpop.f32.mrb[0].mxu0
  %v1516 = vadd.f32 %v1475, %v1515
  %v1517 = vpop.f32.mrb[0].mxu0
  %1518 = vdwg.mxu0
  %1519 = vmatprep.subr.bf16.mxu0 0
  %1520 = vmatpush1.bf16.msra.mxu0 %v1115
  %1521 = vmatprep.subr.bf16.mxu0 0
  %1522 = vmatpush1.bf16.msra.mxu0 %v1116
  %1523 = vmatprep.subr.bf16.mxu0 0
  %1524 = vmatpush1.bf16.msra.mxu0 %v1117
  %1525 = vmatprep.subr.bf16.mxu0 0
  %1526 = vmatpush1.bf16.msra.mxu0 %v1118
  %1527 = vmatprep.subr.bf16.mxu0 0
  %1528 = vmatpush1.bf16.msra.mxu0 %v1119
  %1529 = vmatprep.subr.bf16.mxu0 0
  %1530 = vmatpush1.bf16.msra.mxu0 %v1120
  %1531 = vmatprep.subr.bf16.mxu0 0
  %1532 = vmatpush1.bf16.msra.mxu0 %v1121
  %1533 = vmatprep.subr.bf16.mxu0 0
  %1534 = vmatpush1.bf16.msra.mxu0 %v1122
  %1535 = vmatprep.subr.bf16.mxu0 0
  %1536 = vmatpush1.bf16.msra.mxu0 %v1123
  %1537 = vmatprep.subr.bf16.mxu0 0
  %1538 = vmatpush1.bf16.msra.mxu0 %v1124
  %1539 = vmatprep.subr.bf16.mxu0 0
  %1540 = vmatpush1.bf16.msra.mxu0 %v1125
  %1541 = vmatprep.subr.bf16.mxu0 0
  %1542 = vmatpush1.bf16.msra.mxu0 %v1126
  %1543 = vmatprep.subr.bf16.mxu0 0
  %1544 = vmatpush1.bf16.msra.mxu0 %v1127
  %1545 = vmatprep.subr.bf16.mxu0 0
  %1546 = vmatpush1.bf16.msra.mxu0 %v1128
  %1547 = vmatprep.subr.bf16.mxu0 0
  %1548 = vmatpush1.bf16.msra.mxu0 %v1129
  %1549 = vmatprep.subr.bf16.mxu0 0
  %1550 = vmatpush1.bf16.msra.mxu0 %v1130
  %1551 = vmatprep.mubr.bf16.mxu0 %v414
  %1552 = vmatmul.mubr.bf16.gmra.mrb[0].mxu0 %v413
  %v1553 = vpop.f32.mrb[0].mxu0
  %v1554 = vadd.f32 %v1513, %v1553
  %v1555 = vpop.f32.mrb[0].mxu0
  %v1556 = vpop.f32.mrb[0].mxu0
  %v1557 = vadd.f32 %v1516, %v1556
  %v1558 = vpop.f32.mrb[0].mxu0
  %1559 = vdwg.mxu0
  %1560 = vmatprep.subr.bf16.mxu0 0
  %1561 = vmatpush1.bf16.msra.mxu0 %v1131
  %1562 = vmatprep.subr.bf16.mxu0 0
  %1563 = vmatpush1.bf16.msra.mxu0 %v1132
  %1564 = vmatprep.subr.bf16.mxu0 0
  %1565 = vmatpush1.bf16.msra.mxu0 %v1133
  %1566 = vmatprep.subr.bf16.mxu0 0
  %1567 = vmatpush1.bf16.msra.mxu0 %v1134
  %1568 = vmatprep.subr.bf16.mxu0 0
  %1569 = vmatpush1.bf16.msra.mxu0 %v1135
  %1570 = vmatprep.subr.bf16.mxu0 0
  %1571 = vmatpush1.bf16.msra.mxu0 %v1136
  %1572 = vmatprep.subr.bf16.mxu0 0
  %1573 = vmatpush1.bf16.msra.mxu0 %v1137
  %1574 = vmatprep.subr.bf16.mxu0 0
  %1575 = vmatpush1.bf16.msra.mxu0 %v1138
  %1576 = vmatprep.subr.bf16.mxu0 0
  %1577 = vmatpush1.bf16.msra.mxu0 %v1139
  %1578 = vmatprep.subr.bf16.mxu0 0
  %1579 = vmatpush1.bf16.msra.mxu0 %v1140
  %1580 = vmatprep.subr.bf16.mxu0 0
  %1581 = vmatpush1.bf16.msra.mxu0 %v1141
  %1582 = vmatprep.subr.bf16.mxu0 0
  %1583 = vmatpush1.bf16.msra.mxu0 %v1142
  %1584 = vmatprep.subr.bf16.mxu0 0
  %1585 = vmatpush1.bf16.msra.mxu0 %v1143
  %1586 = vmatprep.subr.bf16.mxu0 0
  %1587 = vmatpush1.bf16.msra.mxu0 %v1144
  %1588 = vmatprep.subr.bf16.mxu0 0
  %1589 = vmatpush1.bf16.msra.mxu0 %v1145
  %1590 = vmatprep.subr.bf16.mxu0 0
  %1591 = vmatpush1.bf16.msra.mxu0 %v1146
  %1592 = vmatprep.mubr.bf16.mxu0 %v416
  %1593 = vmatmul.mubr.bf16.gmra.mrb[0].mxu0 %v415
  %v1594 = vpop.f32.mrb[0].mxu0
  %v1595 = vadd.f32 %v1554, %v1594
  %v1596 = vpop.f32.mrb[0].mxu0
  %v1597 = vpop.f32.mrb[0].mxu0
  %v1598 = vadd.f32 %v1557, %v1597
  %v1599 = vpop.f32.mrb[0].mxu0
  %1600 = vdwg.mxu0
  %1601 = vmatprep.subr.bf16.mxu0 0
  %1602 = vmatpush1.bf16.msra.mxu0 %v1147
  %1603 = vmatprep.subr.bf16.mxu0 0
  %1604 = vmatpush1.bf16.msra.mxu0 %v1148
  %1605 = vmatprep.subr.bf16.mxu0 0
  %1606 = vmatpush1.bf16.msra.mxu0 %v1149
  %1607 = vmatprep.subr.bf16.mxu0 0
  %1608 = vmatpush1.bf16.msra.mxu0 %v1150
  %1609 = vmatprep.subr.bf16.mxu0 0
  %1610 = vmatpush1.bf16.msra.mxu0 %v1151
  %1611 = vmatprep.subr.bf16.mxu0 0
  %1612 = vmatpush1.bf16.msra.mxu0 %v1152
  %1613 = vmatprep.subr.bf16.mxu0 0
  %1614 = vmatpush1.bf16.msra.mxu0 %v1153
  %1615 = vmatprep.subr.bf16.mxu0 0
  %1616 = vmatpush1.bf16.msra.mxu0 %v1154
  %1617 = vmatprep.subr.bf16.mxu0 0
  %1618 = vmatpush1.bf16.msra.mxu0 %v1155
  %1619 = vmatprep.subr.bf16.mxu0 0
  %1620 = vmatpush1.bf16.msra.mxu0 %v1156
  %1621 = vmatprep.subr.bf16.mxu0 0
  %1622 = vmatpush1.bf16.msra.mxu0 %v1157
  %1623 = vmatprep.subr.bf16.mxu0 0
  %1624 = vmatpush1.bf16.msra.mxu0 %v1158
  %1625 = vmatprep.subr.bf16.mxu0 0
  %1626 = vmatpush1.bf16.msra.mxu0 %v1159
  %1627 = vmatprep.subr.bf16.mxu0 0
  %1628 = vmatpush1.bf16.msra.mxu0 %v1160
  %1629 = vmatprep.subr.bf16.mxu0 0
  %1630 = vmatpush1.bf16.msra.mxu0 %v1161
  %1631 = vmatprep.subr.bf16.mxu0 0
  %1632 = vmatpush1.bf16.msra.mxu0 %v1162
  %1633 = vmatprep.mubr.bf16.mxu0 %v418
  %1634 = vmatmul.mubr.bf16.gmra.mrb[0].mxu0 %v417
  %v1635 = vpop.f32.mrb[0].mxu0
  %v1636 = vadd.f32 %v1595, %v1635
  %v1637 = vpop.f32.mrb[0].mxu0
  %v1638 = vpop.f32.mrb[0].mxu0
  %v1639 = vadd.f32 %v1598, %v1638
  %v1640 = vpop.f32.mrb[0].mxu0
  %1641 = vdwg.mxu0
  %1642 = vmatprep.subr.bf16.mxu0 0
  %1643 = vmatpush1.bf16.msra.mxu0 %v1163
  %1644 = vmatprep.subr.bf16.mxu0 0
  %1645 = vmatpush1.bf16.msra.mxu0 %v1164
  %1646 = vmatprep.subr.bf16.mxu0 0
  %1647 = vmatpush1.bf16.msra.mxu0 %v1165
  %1648 = vmatprep.subr.bf16.mxu0 0
  %1649 = vmatpush1.bf16.msra.mxu0 %v1166
  %1650 = vmatprep.subr.bf16.mxu0 0
  %1651 = vmatpush1.bf16.msra.mxu0 %v1167
  %1652 = vmatprep.subr.bf16.mxu0 0
  %1653 = vmatpush1.bf16.msra.mxu0 %v1168
  %1654 = vmatprep.subr.bf16.mxu0 0
  %1655 = vmatpush1.bf16.msra.mxu0 %v1169
  %1656 = vmatprep.subr.bf16.mxu0 0
  %1657 = vmatpush1.bf16.msra.mxu0 %v1170
  %1658 = vmatprep.subr.bf16.mxu0 0
  %1659 = vmatpush1.bf16.msra.mxu0 %v1171
  %1660 = vmatprep.subr.bf16.mxu0 0
  %1661 = vmatpush1.bf16.msra.mxu0 %v1172
  %1662 = vmatprep.subr.bf16.mxu0 0
  %1663 = vmatpush1.bf16.msra.mxu0 %v1173
  %1664 = vmatprep.subr.bf16.mxu0 0
  %1665 = vmatpush1.bf16.msra.mxu0 %v1174
  %1666 = vmatprep.subr.bf16.mxu0 0
  %1667 = vmatpush1.bf16.msra.mxu0 %v1175
  %1668 = vmatprep.subr.bf16.mxu0 0
  %1669 = vmatpush1.bf16.msra.mxu0 %v1176
  %1670 = vmatprep.subr.bf16.mxu0 0
  %1671 = vmatpush1.bf16.msra.mxu0 %v1177
  %1672 = vmatprep.subr.bf16.mxu0 0
  %1673 = vmatpush1.bf16.msra.mxu0 %v1178
  %1674 = vmatprep.mubr.bf16.mxu0 %v420
  %1675 = vmatmul.mubr.bf16.gmra.mrb[0].mxu0 %v419
  %v1676 = vpop.f32.mrb[0].mxu0
  %v1677 = vadd.f32 %v1636, %v1676
  %v1678 = vpop.f32.mrb[0].mxu0
  %v1679 = vpop.f32.mrb[0].mxu0
  %v1680 = vadd.f32 %v1639, %v1679
  %v1681 = vpop.f32.mrb[0].mxu0
  %1682 = vdwg.mxu0
  %1683 = vmatprep.subr.bf16.mxu0 0
  %1684 = vmatpush1.bf16.msra.mxu0 %v1179
  %1685 = vmatprep.subr.bf16.mxu0 0
  %1686 = vmatpush1.bf16.msra.mxu0 %v1180
  %1687 = vmatprep.subr.bf16.mxu0 0
  %1688 = vmatpush1.bf16.msra.mxu0 %v1181
  %1689 = vmatprep.subr.bf16.mxu0 0
  %1690 = vmatpush1.bf16.msra.mxu0 %v1182
  %1691 = vmatprep.subr.bf16.mxu0 0
  %1692 = vmatpush1.bf16.msra.mxu0 %v1183
  %1693 = vmatprep.subr.bf16.mxu0 0
  %1694 = vmatpush1.bf16.msra.mxu0 %v1184
  %1695 = vmatprep.subr.bf16.mxu0 0
  %1696 = vmatpush1.bf16.msra.mxu0 %v1185
  %1697 = vmatprep.subr.bf16.mxu0 0
  %1698 = vmatpush1.bf16.msra.mxu0 %v1186
  %1699 = vmatprep.subr.bf16.mxu0 0
  %1700 = vmatpush1.bf16.msra.mxu0 %v1187
  %1701 = vmatprep.subr.bf16.mxu0 0
  %1702 = vmatpush1.bf16.msra.mxu0 %v1188
  %1703 = vmatprep.subr.bf16.mxu0 0
  %1704 = vmatpush1.bf16.msra.mxu0 %v1189
  %1705 = vmatprep.subr.bf16.mxu0 0
  %1706 = vmatpush1.bf16.msra.mxu0 %v1190
  %1707 = vmatprep.subr.bf16.mxu0 0
  %1708 = vmatpush1.bf16.msra.mxu0 %v1191
  %1709 = vmatprep.subr.bf16.mxu0 0
  %1710 = vmatpush1.bf16.msra.mxu0 %v1192
  %1711 = vmatprep.subr.bf16.mxu0 0
  %1712 = vmatpush1.bf16.msra.mxu0 %v1193
  %1713 = vmatprep.subr.bf16.mxu0 0
  %1714 = vmatpush1.bf16.msra.mxu0 %v1194
  %1715 = vmatprep.mubr.bf16.mxu0 %v422
  %1716 = vmatmul.mubr.bf16.gmra.mrb[0].mxu0 %v421
  %v1717 = vpop.f32.mrb[0].mxu0
  %v1718 = vadd.f32 %v1677, %v1717
  %v1719 = vpop.f32.mrb[0].mxu0
  %v1720 = vpop.f32.mrb[0].mxu0
  %v1721 = vadd.f32 %v1680, %v1720
  %v1722 = vpop.f32.mrb[0].mxu0
  %1723 = vdwg.mxu0
  %1724 = vmatprep.subr.bf16.mxu0 0
  %1725 = vmatpush1.bf16.msra.mxu0 %v1195
  %1726 = vmatprep.subr.bf16.mxu0 0
  %1727 = vmatpush1.bf16.msra.mxu0 %v1196
  %1728 = vmatprep.subr.bf16.mxu0 0
  %1729 = vmatpush1.bf16.msra.mxu0 %v1197
  %1730 = vmatprep.subr.bf16.mxu0 0
  %1731 = vmatpush1.bf16.msra.mxu0 %v1198
  %1732 = vmatprep.subr.bf16.mxu0 0
  %1733 = vmatpush1.bf16.msra.mxu0 %v1199
  %1734 = vmatprep.subr.bf16.mxu0 0
  %1735 = vmatpush1.bf16.msra.mxu0 %v1200
  %1736 = vmatprep.subr.bf16.mxu0 0
  %1737 = vmatpush1.bf16.msra.mxu0 %v1201
  %1738 = vmatprep.subr.bf16.mxu0 0
  %1739 = vmatpush1.bf16.msra.mxu0 %v1202
  %1740 = vmatprep.subr.bf16.mxu0 0
  %1741 = vmatpush1.bf16.msra.mxu0 0
  %1742 = vmatprep.subr.bf16.mxu0 0
  %1743 = vmatpush1.bf16.msra.mxu0 0
  %1744 = vmatprep.subr.bf16.mxu0 0
  %1745 = vmatpush1.bf16.msra.mxu0 0
  %1746 = vmatprep.subr.bf16.mxu0 0
  %1747 = vmatpush1.bf16.msra.mxu0 0
  %1748 = vmatprep.subr.bf16.mxu0 0
  %1749 = vmatpush1.bf16.msra.mxu0 0
  %1750 = vmatprep.subr.bf16.mxu0 0
  %1751 = vmatpush1.bf16.msra.mxu0 0
  %1752 = vmatprep.subr.bf16.mxu0 0
  %1753 = vmatpush1.bf16.msra.mxu0 0
  %1754 = vmatprep.subr.bf16.mxu0 0
  %1755 = vmatpush1.bf16.msra.mxu0 0
  %1756 = vmatprep.mubr.bf16.mxu0 0
  %1757 = vmatmul.mubr.bf16.gmra.mrb[0].mxu0 %v423
  %v1758 = vpop.f32.mrb[0].mxu0
  %v1759 = vadd.f32 %v1718, %v1758
  %v1760 = vpop.f32.mrb[0].mxu0
  %v1761 = vpop.f32.mrb[0].mxu0
  %v1762 = vadd.f32 %v1721, %v1761
  %v1763 = vpop.f32.mrb[0].mxu0
  %1764 = vdwg.mxu0
  %v1765 = vadd.f32 %v21, %v1759
  %v1766 = vadd.f32 %v22, %v1762
  %1767 = vst [vmem:[#allocation2] sm:$0xff] %v1765
  %1768 = vst [vmem:[#allocation2 + $0x8] sm:$0xff] %v1766
  // Predicated region
  $region18: #{discriminator_forward.9} parent=0 // pred_check
    %p1769 = pneg %p15
  $region19: #{discriminator_forward.9} parent=0 // pred_check_branch
    %1771 = sbr.rel (%p1769) target = $region21
  $region20: #{discriminator_forward.9} parent=0 // pred_region
    %v1772 = vld [vmem:[#allocation2] sm:$0xff]
    %v1773 = vld [vmem:[#allocation2 + $0x8] sm:$0xff]
    %v1774 = vld [vmem:[%s2] sm:$0x1]
    %v1776 = vlaneseq
    %v1777 = vshrl.u32 %v1776, 7
    %v1778 = vsub.s32 0, %v1777
    %v1779 = vrot.slane %v1774, %v1778
    %v1781 = vadd.f32 %v1772, %v1779
    %v1782 = vadd.f32 %v1773, %v1779
    %1783 = vst [vmem:[%s3] sm:$0xff] %v1781
    %1784 = vst [vmem:[%s3 + $0x8] sm:$0xff] %v1782
  $region21: #{discriminator_forward.9} parent=0 // pred_fallthru
    _
  // Predicated region
  $region22: #{discriminator_forward.9} parent=0 // pred_check
    _
  $region23: #{discriminator_forward.9} parent=0 // pred_check_branch
    %1786 = sbr.rel (0) target = $region25
  $region24: #{discriminator_forward.9} parent=0 // pred_region
    _
  $region25: #{discriminator_forward.9} parent=0 // pred_fallthru
    _
  // Predicated region
  $region26: #{discriminator_forward.9} parent=0 // pred_check
    _
  $region27: #{discriminator_forward.9} parent=0 // pred_check_branch
    %1788 = sbr.rel (0) target = $region29
  $region28: #{discriminator_forward.9} parent=0 // pred_region
    _
  $region29: #{discriminator_forward.9} parent=0 // pred_fallthru
    _

</llo_original>
